<compile_context>
chip_gen: v5e
topology: v5e:2x2
jax: 0.10.0
libtpu: 0.0.40
codegen_flags: <defaults>
</compile_context>

<pallas_src>
import math
from functools import partial

import jax
import jax.numpy as jnp
from jax import lax
from jax.experimental import pallas as pl
from jax.experimental.pallas import tpu as pltpu


# --------------------------------------------------------------------------
# Parameter setup (plain JAX glue)
# --------------------------------------------------------------------------
def build_positional_encoding(d_model: int, max_len: int = 5000) -> jnp.ndarray:
    """Deterministic sinusoidal PE table, shape (max_len, d_model)."""
    position = jnp.arange(max_len, dtype=jnp.float32)[:, None]          # (L, 1)
    div_term = jnp.exp(
        jnp.arange(0, d_model, 2, dtype=jnp.float32)
        * (-math.log(10000.0) / d_model)
    )                                                                    # (D/2,)
    pe = jnp.zeros((max_len, d_model), dtype=jnp.float32)
    pe = pe.at[:, 0::2].set(jnp.sin(position * div_term))
    pe = pe.at[:, 1::2].set(jnp.cos(position * div_term))
    return pe


def init_params(key, num_layers, d_model, num_heads, d_ff, vocab_size, max_len):
    del num_heads  # head count only matters at apply time
    k_emb, k_layers = jax.random.split(key)
    params = {
        "embedding": 0.1 * jax.random.normal(k_emb, (vocab_size, d_model), jnp.float32),
        "pe": build_positional_encoding(d_model, max_len),
        "layers": [],
    }

    def dense(k, fan_in, fan_out):
        return jax.random.normal(k, (fan_in, fan_out), jnp.float32) / math.sqrt(fan_in)

    def bias(k, n):
        return 0.05 * jax.random.normal(k, (n,), jnp.float32)

    for lk in jax.random.split(k_layers, num_layers):
        ks = jax.random.split(lk, 12)
        params["layers"].append({
            "wq": dense(ks[0], d_model, d_model), "bq": bias(ks[1], d_model),
            "wk": dense(ks[2], d_model, d_model), "bk": bias(ks[3], d_model),
            "wv": dense(ks[4], d_model, d_model), "bv": bias(ks[5], d_model),
            "wo": dense(ks[6], d_model, d_model), "bo": bias(ks[7], d_model),
            "w1": dense(ks[8], d_model, d_ff),    "b1": bias(ks[9], d_ff),
            "w2": dense(ks[10], d_ff, d_model),   "b2": bias(ks[11], d_model),
            # nn.LayerNorm default init (weight=1, bias=0)
            "gamma1": jnp.ones((d_model,), jnp.float32),
            "beta1": jnp.zeros((d_model,), jnp.float32),
            "gamma2": jnp.ones((d_model,), jnp.float32),
            "beta2": jnp.zeros((d_model,), jnp.float32),
        })
    return params


# --------------------------------------------------------------------------
# Kernel 1: fused embedding lookup + positional-encoding add
# --------------------------------------------------------------------------
def _embed_pe_kernel(ids_ref, emb_ref, pe_ref, o_ref):
    # ids_ref: (S, 1) int32   | emb_ref: (V, D) | pe_ref: (S, D) | o_ref: (S, D)
    S = ids_ref.shape[0]
    V = emb_ref.shape[0]
    # Embedding gather as a one-hot matmul (MXU); fine for small vocabularies.
    onehot = (lax.broadcasted_iota(jnp.int32, (S, V), 1)
              == ids_ref[...]).astype(emb_ref.dtype)                      # (S, V)
    x = jnp.dot(onehot, emb_ref[...], preferred_element_type=jnp.float32)  # (S, D)
    o_ref[...] = (x + pe_ref[...]).astype(o_ref.dtype)


def embed_positional_encoding(src, emb_table, pe_table):
    """src: (B, S) int32 token ids. Returns embedding(src) + pe[:S]  -> (B, S, D)."""
    B, S = src.shape
    V, D = emb_table.shape
    max_len = pe_table.shape[0]
    if S > max_len:
        raise ValueError(f"sequence length {S} exceeds positional-encoding max_len {max_len}")

    # Cast PE to the activation dtype in the wrapper (keeps the in-kernel add
    # on the native VALU path, halves PE traffic for bf16 models).
    pe_slice = pe_table[:S, :].astype(emb_table.dtype)
    ids = src.astype(jnp.int32).reshape(B, S, 1)

    return pl.pallas_call(
        _embed_pe_kernel,
        out_shape=jax.ShapeDtypeStruct((B, S, D), emb_table.dtype),
        grid_spec=pltpu.PrefetchScalarGridSpec(
            num_scalar_prefetch=0,
            grid=(B,),
            in_specs=[
                pl.BlockSpec((pl.Squeezed(), S, 1), lambda b: (b, 0, 0)),  # token ids
                pl.BlockSpec((V, D), lambda b: (0, 0)),  # embedding table, resident
                pl.BlockSpec((S, D), lambda b: (0, 0)),  # PE slice, resident
            ],
            out_specs=pl.BlockSpec((pl.Squeezed(), S, D), lambda b: (b, 0, 0)),
        ),
        compiler_params=pltpu.CompilerParams(dimension_semantics=("parallel",)),
    )(ids, emb_table, pe_slice)


# --------------------------------------------------------------------------
# Kernel 2: one fused transformer encoder layer (per batch element)
# --------------------------------------------------------------------------
def _encoder_layer_kernel(x_ref, mask_ref,
                          wq_ref, bq_ref, wk_ref, bk_ref, wv_ref, bv_ref,
                          wo_ref, bo_ref,
                          w1_ref, b1_ref, w2_ref, b2_ref,
                          g1_ref, be1_ref, g2_ref, be2_ref,
                          o_ref, *, num_heads, scale, eps):
    x = x_ref[...].astype(jnp.float32)          # (S, D)
    mask = mask_ref[...]                        # (S, S); nonzero == keep
    S, D = x.shape

    # ---- multi-head self-attention (static per-head loop; weights are
    #      pre-split per head in the wrapper so no in-kernel reshapes) ----
    acc = jnp.zeros((S, D), dtype=jnp.float32)
    for h in range(num_heads):
        q_h = jnp.dot(x, wq_ref[h], preferred_element_type=jnp.float32) + bq_ref[h]
        k_h = jnp.dot(x, wk_ref[h], preferred_element_type=jnp.float32) + bk_ref[h]
        v_h = jnp.dot(x, wv_ref[h], preferred_element_type=jnp.float32) + bv_ref[h]
        # scores = q_h @ k_h^T / sqrt(d_k)
        s = lax.dot_general(q_h, k_h, (((1,), (1,)), ((), ())),
                            preferred_element_type=jnp.float32) * scale   # (S, S)
        s = jnp.where(mask != 0, s, -1e9)
        s = s - jnp.max(s, axis=-1, keepdims=True)
        p = jnp.exp(s)
        p = p / jnp.sum(p, axis=-1, keepdims=True)
        ctx_h = jnp.dot(p, v_h, preferred_element_type=jnp.float32)       # (S, d_k)
        # fold the head-concat into the output projection: accumulate ctx_h @ Wo_h
        acc = acc + jnp.dot(ctx_h, wo_ref[h], preferred_element_type=jnp.float32)
    attn_out = acc + bo_ref[...]

    # ---- residual + LayerNorm 1 ----
    h1 = x + attn_out
    mu1 = jnp.mean(h1, axis=-1, keepdims=True)
    var1 = jnp.mean(jnp.square(h1 - mu1), axis=-1, keepdims=True)
    y1 = (h1 - mu1) / jnp.sqrt(var1 + eps) * g1_ref[...] + be1_ref[...]

    # ---- position-wise feed-forward ----
    f = jnp.dot(y1, w1_ref[...], preferred_element_type=jnp.float32) + b1_ref[...]
    f = jnp.maximum(f, 0.0)
    f = jnp.dot(f, w2_ref[...], preferred_element_type=jnp.float32) + b2_ref[...]

    # ---- residual + LayerNorm 2 ----
    h2 = y1 + f
    mu2 = jnp.mean(h2, axis=-1, keepdims=True)
    var2 = jnp.mean(jnp.square(h2 - mu2), axis=-1, keepdims=True)
    y2 = (h2 - mu2) / jnp.sqrt(var2 + eps) * g2_ref[...] + be2_ref[...]

    o_ref[...] = y2.astype(o_ref.dtype)


def encoder_layer_forward(x, mask, lp, num_heads):
    """x: (B, S, D), mask: (B, S, S) (nonzero == keep). Returns (B, S, D)."""
    B, S, D = x.shape
    H = num_heads
    d_k = D // H
    d_ff = lp["w1"].shape[1]

    # Pre-split weights per attention head in the wrapper (free glue, no
    # in-kernel reshape/transpose).  Columns of W_q/k/v grouped per head,
    # rows of W_o grouped per head — matches PyTorch's .view(..., H, d_k).
    wq = lp["wq"].reshape(D, H, d_k).transpose(1, 0, 2)   # (H, D, d_k)
    wk = lp["wk"].reshape(D, H, d_k).transpose(1, 0, 2)
    wv = lp["wv"].reshape(D, H, d_k).transpose(1, 0, 2)
    wo = lp["wo"].reshape(H, d_k, D)                       # (H, d_k, D)
    bq = lp["bq"].reshape(H, 1, d_k)
    bk = lp["bk"].reshape(H, 1, d_k)
    bv = lp["bv"].reshape(H, 1, d_k)
    bo = lp["bo"].reshape(1, D)
    w1 = lp["w1"]
    b1 = lp["b1"].reshape(1, d_ff)
    w2 = lp["w2"]
    b2 = lp["b2"].reshape(1, D)
    g1 = lp["gamma1"].reshape(1, D)
    be1 = lp["beta1"].reshape(1, D)
    g2 = lp["gamma2"].reshape(1, D)
    be2 = lp["beta2"].reshape(1, D)

    def const(shape):  # full-extent, VMEM-resident across grid steps
        return pl.BlockSpec(shape, lambda b: (0,) * len(shape))

    kernel = partial(_encoder_layer_kernel, num_heads=H,
                     scale=1.0 / math.sqrt(d_k), eps=1e-5)

    return pl.pallas_call(
        kernel,
        out_shape=jax.ShapeDtypeStruct((B, S, D), x.dtype),
        grid_spec=pltpu.PrefetchScalarGridSpec(
            num_scalar_prefetch=0,
            grid=(B,),
            in_specs=[
                pl.BlockSpec((pl.Squeezed(), S, D), lambda b: (b, 0, 0)),  # x
                pl.BlockSpec((pl.Squeezed(), S, S), lambda b: (b, 0, 0)),  # mask
                const((H, D, d_k)), const((H, 1, d_k)),                    # wq, bq
                const((H, D, d_k)), const((H, 1, d_k)),                    # wk, bk
                const((H, D, d_k)), const((H, 1, d_k)),                    # wv, bv
                const((H, d_k, D)), const((1, D)),                         # wo, bo
                const((D, d_ff)), const((1, d_ff)),                        # w1, b1
                const((d_ff, D)), const((1, D)),                           # w2, b2
                const((1, D)), const((1, D)),                              # gamma1, beta1
                const((1, D)), const((1, D)),                              # gamma2, beta2
            ],
            out_specs=pl.BlockSpec((pl.Squeezed(), S, D), lambda b: (b, 0, 0)),
        ),
        compiler_params=pltpu.CompilerParams(dimension_semantics=("parallel",)),
        # Write the new activations over x's HBM buffer (x is dead afterwards).
        input_output_aliases={0: 0},
    )(x, mask, wq, bq, wk, bk, wv, bv, wo, bo, w1, b1, w2, b2, g1, be1, g2, be2)


# --------------------------------------------------------------------------
# Full Encoder forward
# --------------------------------------------------------------------------
def encoder_forward(params, src, src_mask, num_heads):
    x = embed_positional_encoding(src, params["embedding"], params["pe"])
    for lp in params["layers"]:
        x = encoder_layer_forward(x, src_mask, lp, num_heads)
    return x


# --------------------------------------------------------------------------
# Pure-JAX reference (mirrors the PyTorch module's math exactly)
# --------------------------------------------------------------------------
def _layer_norm_ref(x, g, b, eps=1e-5):
    mu = jnp.mean(x, axis=-1, keepdims=True)
    var = jnp.mean(jnp.square(x - mu), axis=-1, keepdims=True)
    return (x - mu) / jnp.sqrt(var + eps) * g + b


def reference_encoder(params, src, src_mask, num_heads):
    B, S = src.shape
    x = params["embedding"][src]                      # (B, S, D)
    x = x + params["pe"][None, :S, :]
    for lp in params["layers"]:
        _, _, D = x.shape
        H, d_k = num_heads, D // num_heads
        q = x @ lp["wq"] + lp["bq"]
        k = x @ lp["wk"] + lp["bk"]
        v = x @ lp["wv"] + lp["bv"]
        q = q.reshape(B, S, H, d_k).transpose(0, 2, 1, 3)
        k = k.reshape(B, S, H, d_k).transpose(0, 2, 1, 3)
        v = v.reshape(B, S, H, d_k).transpose(0, 2, 1, 3)
        scores = jnp.einsum("bhqe,bhke->bhqk", q, k) / math.sqrt(d_k)
        scores = jnp.where(src_mask[:, None, :, :] != 0, scores, -1e9)
        attn = jax.nn.softmax(scores, axis=-1)
        ctx = jnp.einsum("bhqk,bhke->bhqe", attn, v)
        ctx = ctx.transpose(0, 2, 1, 3).reshape(B, S, D)
        attn_out = ctx @ lp["wo"] + lp["bo"]
        x = _layer_norm_ref(x + attn_out, lp["gamma1"], lp["beta1"])
        ff = jnp.maximum(x @ lp["w1"] + lp["b1"], 0.0) @ lp["w2"] + lp["b2"]
        x = _layer_norm_ref(x + ff, lp["gamma2"], lp["beta2"])
    return x


# --------------------------------------------------------------------------
if __name__ == "__main__":
    # Small shapes consistent with the module.
    num_layers = 2
    d_model = 32
    num_heads = 4
    d_ff = 64
    vocab_size = 64
    max_len = 64
    B, S = 2, 8

    key = jax.random.PRNGKey(0)
    pkey, skey = jax.random.split(key)
    params = init_params(pkey, num_layers, d_model, num_heads, d_ff, vocab_size, max_len)

    src = jax.random.randint(skey, (B, S), 0, vocab_size, dtype=jnp.int32)
    # Padding-style mask: batch 0 attends to all 8 keys, batch 1 to the first 6.
    lengths = jnp.array([S, S - 2], dtype=jnp.int32)
    key_valid = jnp.arange(S)[None, :] < lengths[:, None]                 # (B, S)
    src_mask = jnp.broadcast_to(key_valid[:, None, :], (B, S, S)).astype(jnp.float32)

    fwd = jax.jit(partial(encoder_forward, num_heads=num_heads))
    out = jax.block_until_ready(fwd(params, src, src_mask))

    with jax.default_matmul_precision("highest"):
        ref = jax.block_until_ready(reference_encoder(params, src, src_mask, num_heads))

    assert out.shape == (B, S, d_model) and out.dtype == jnp.float32
    assert jnp.allclose(out, ref, atol=2e-3, rtol=2e-3), (
        f"max abs diff = {float(jnp.max(jnp.abs(out - ref)))}"
    )
    print("KERNEL_OK")
</pallas_src>

<mosaic_0001>
module attributes {stable_mosaic.version = 11 : i64} {
  func.func @_embed_pe_kernel(%arg0: i32, %arg1: memref<1x8x1xi32, #tpu.memory_space<vmem>>, %arg2: memref<64x32xf32, #tpu.memory_space<vmem>>, %arg3: memref<8x32xf32, #tpu.memory_space<vmem>>, %arg4: memref<1x8x32xf32, #tpu.memory_space<vmem>>) attributes {dimension_semantics = [#tpu.dimension_semantics<parallel>], iteration_bounds = array<i64: 2>, scalar_prefetch = 0 : i64, scratch_operands = 0 : i64, tpu.core_type = #tpu.core_type<tc>, window_params = [{transform_indices = @transform_0, window_bounds = array<i64: 1, 8, 1>}, {pipeline_mode = #tpu.pipeline_mode<synchronous>, transform_indices = @transform_1, window_bounds = array<i64: 64, 32>}, {pipeline_mode = #tpu.pipeline_mode<synchronous>, transform_indices = @transform_2, window_bounds = array<i64: 8, 32>}, {transform_indices = @transform_3, window_bounds = array<i64: 1, 8, 32>}]} {
    %0 = tpu.iota {dimensions = array<i32: 1>} : vector<8x64xi32>
    %c0 = arith.constant 0 : index
    %c0_0 = arith.constant 0 : index
    %c0_1 = arith.constant 0 : index
    %1 = vector.load %arg1[%c0, %c0_0, %c0_1] : memref<1x8x1xi32, #tpu.memory_space<vmem>>, vector<1x8x1xi32>
    %2 = vector.shape_cast %1 : vector<1x8x1xi32> to vector<8x1xi32>
    %3 = vector.broadcast %2 : vector<8x1xi32> to vector<8x64xi32>
    %4 = arith.cmpi eq, %0, %3 : vector<8x64xi32>
    %5 = arith.extui %4 : vector<8x64xi1> to vector<8x64xi32>
    %6 = arith.sitofp %5 : vector<8x64xi32> to vector<8x64xf32>
    %c0_2 = arith.constant 0 : index
    %c0_3 = arith.constant 0 : index
    %7 = vector.load %arg2[%c0_2, %c0_3] : memref<64x32xf32, #tpu.memory_space<vmem>>, vector<64x32xf32>
    %cst = arith.constant dense<0.000000e+00> : vector<8x32xf32>
    %8 = tpu.matmul %6, %7, %cst {dimension_numbers = #tpu.dot_dimension_numbers<[1], [0], [0], [1], [0, 0, 1, 1], [], []>} : vector<8x64xf32>, vector<64x32xf32>, vector<8x32xf32> -> vector<8x32xf32>
    %c0_4 = arith.constant 0 : index
    %c0_5 = arith.constant 0 : index
    %9 = vector.load %arg3[%c0_4, %c0_5] : memref<8x32xf32, #tpu.memory_space<vmem>>, vector<8x32xf32>
    %10 = arith.addf %8, %9 : vector<8x32xf32>
    %c0_6 = arith.constant 0 : index
    %c0_7 = arith.constant 0 : index
    %c0_8 = arith.constant 0 : index
    %11 = vector.load %arg4[%c0_6, %c0_7, %c0_8] : memref<1x8x32xf32, #tpu.memory_space<vmem>>, vector<1x8x32xf32>
    %12 = vector.shape_cast %11 : vector<1x8x32xf32> to vector<8x32xf32>
    %13 = vector.shape_cast %10 : vector<8x32xf32> to vector<1x8x32xf32>
    tpu.vector_store %arg4[%c0_6, %c0_7, %c0_8], %13 {strides = array<i32>} : memref<1x8x32xf32, #tpu.memory_space<vmem>>, vector<1x8x32xf32>,
    return
  }
  func.func @transform_0(%arg0: i32) -> (i32, i32, i32) {
    %c0_i32 = arith.constant 0 : i32
    %c0_i32_0 = arith.constant 0 : i32
    %c0_i32_1 = arith.constant 0 : i32
    return %arg0, %c0_i32, %c0_i32_0 : i32, i32, i32
  }
  func.func @transform_1(%arg0: i32) -> (i32, i32) {
    %c0_i32 = arith.constant 0 : i32
    %c0_i32_0 = arith.constant 0 : i32
    %c0_i32_1 = arith.constant 0 : i32
    return %c0_i32, %c0_i32_0 : i32, i32
  }
  func.func @transform_2(%arg0: i32) -> (i32, i32) {
    %c0_i32 = arith.constant 0 : i32
    %c0_i32_0 = arith.constant 0 : i32
    %c0_i32_1 = arith.constant 0 : i32
    return %c0_i32, %c0_i32_0 : i32, i32
  }
  func.func @transform_3(%arg0: i32) -> (i32, i32, i32) {
    %c0_i32 = arith.constant 0 : i32
    %c0_i32_0 = arith.constant 0 : i32
    %c0_i32_1 = arith.constant 0 : i32
    return %arg0, %c0_i32, %c0_i32_0 : i32, i32, i32
  }
}

module attributes {stable_mosaic.version = 11 : i64} {
  func.func @_encoder_layer_kernel(%arg0: i32, %arg1: memref<1x8x32xf32, #tpu.memory_space<vmem>>, %arg2: memref<1x8x8xf32, #tpu.memory_space<vmem>>, %arg3: memref<4x32x8xf32, #tpu.memory_space<vmem>>, %arg4: memref<4x1x8xf32, #tpu.memory_space<vmem>>, %arg5: memref<4x32x8xf32, #tpu.memory_space<vmem>>, %arg6: memref<4x1x8xf32, #tpu.memory_space<vmem>>, %arg7: memref<4x32x8xf32, #tpu.memory_space<vmem>>, %arg8: memref<4x1x8xf32, #tpu.memory_space<vmem>>, %arg9: memref<4x8x32xf32, #tpu.memory_space<vmem>>, %arg10: memref<1x32xf32, #tpu.memory_space<vmem>>, %arg11: memref<32x64xf32, #tpu.memory_space<vmem>>, %arg12: memref<1x64xf32, #tpu.memory_space<vmem>>, %arg13: memref<64x32xf32, #tpu.memory_space<vmem>>, %arg14: memref<1x32xf32, #tpu.memory_space<vmem>>, %arg15: memref<1x32xf32, #tpu.memory_space<vmem>>, %arg16: memref<1x32xf32, #tpu.memory_space<vmem>>, %arg17: memref<1x32xf32, #tpu.memory_space<vmem>>, %arg18: memref<1x32xf32, #tpu.memory_space<vmem>>, %arg19: memref<1x8x32xf32, #tpu.memory_space<vmem>>) attributes {dimension_semantics = [#tpu.dimension_semantics<parallel>], iteration_bounds = array<i64: 2>, scalar_prefetch = 0 : i64, scratch_operands = 0 : i64, tpu.core_type = #tpu.core_type<tc>, window_params = [{transform_indices = @transform_0, window_bounds = array<i64: 1, 8, 32>}, {transform_indices = @transform_1, window_bounds = array<i64: 1, 8, 8>}, {pipeline_mode = #tpu.pipeline_mode<synchronous>, transform_indices = @transform_2, window_bounds = array<i64: 4, 32, 8>}, {pipeline_mode = #tpu.pipeline_mode<synchronous>, transform_indices = @transform_3, window_bounds = array<i64: 4, 1, 8>}, {pipeline_mode = #tpu.pipeline_mode<synchronous>, transform_indices = @transform_4, window_bounds = array<i64: 4, 32, 8>}, {pipeline_mode = #tpu.pipeline_mode<synchronous>, transform_indices = @transform_5, window_bounds = array<i64: 4, 1, 8>}, {pipeline_mode = #tpu.pipeline_mode<synchronous>, transform_indices = @transform_6, window_bounds = array<i64: 4, 32, 8>}, {pipeline_mode = #tpu.pipeline_mode<synchronous>, transform_indices = @transform_7, window_bounds = array<i64: 4, 1, 8>}, {pipeline_mode = #tpu.pipeline_mode<synchronous>, transform_indices = @transform_8, window_bounds = array<i64: 4, 8, 32>}, {pipeline_mode = #tpu.pipeline_mode<synchronous>, transform_indices = @transform_9, window_bounds = array<i64: 1, 32>}, {pipeline_mode = #tpu.pipeline_mode<synchronous>, transform_indices = @transform_10, window_bounds = array<i64: 32, 64>}, {pipeline_mode = #tpu.pipeline_mode<synchronous>, transform_indices = @transform_11, window_bounds = array<i64: 1, 64>}, {pipeline_mode = #tpu.pipeline_mode<synchronous>, transform_indices = @transform_12, window_bounds = array<i64: 64, 32>}, {pipeline_mode = #tpu.pipeline_mode<synchronous>, transform_indices = @transform_13, window_bounds = array<i64: 1, 32>}, {pipeline_mode = #tpu.pipeline_mode<synchronous>, transform_indices = @transform_14, window_bounds = array<i64: 1, 32>}, {pipeline_mode = #tpu.pipeline_mode<synchronous>, transform_indices = @transform_15, window_bounds = array<i64: 1, 32>}, {pipeline_mode = #tpu.pipeline_mode<synchronous>, transform_indices = @transform_16, window_bounds = array<i64: 1, 32>}, {pipeline_mode = #tpu.pipeline_mode<synchronous>, transform_indices = @transform_17, window_bounds = array<i64: 1, 32>}, {transform_indices = @transform_18, window_bounds = array<i64: 1, 8, 32>}]} {
    %c0 = arith.constant 0 : index
    %c0_0 = arith.constant 0 : index
    %c0_1 = arith.constant 0 : index
    %0 = vector.load %arg1[%c0, %c0_0, %c0_1] : memref<1x8x32xf32, #tpu.memory_space<vmem>>, vector<1x8x32xf32>
    %1 = vector.shape_cast %0 : vector<1x8x32xf32> to vector<8x32xf32>
    %c0_2 = arith.constant 0 : index
    %c0_3 = arith.constant 0 : index
    %c0_4 = arith.constant 0 : index
    %2 = vector.load %arg2[%c0_2, %c0_3, %c0_4] : memref<1x8x8xf32, #tpu.memory_space<vmem>>, vector<1x8x8xf32>
    %3 = vector.shape_cast %2 : vector<1x8x8xf32> to vector<8x8xf32>
    %cst = arith.constant 0.000000e+00 : f32
    %4 = vector.broadcast %cst : f32 to vector<8x32xf32>
    %c0_5 = arith.constant 0 : index
    %c0_6 = arith.constant 0 : index
    %c0_7 = arith.constant 0 : index
    %5 = vector.load %arg3[%c0_5, %c0_6, %c0_7] : memref<4x32x8xf32, #tpu.memory_space<vmem>>, vector<1x32x8xf32>
    %6 = vector.shape_cast %5 : vector<1x32x8xf32> to vector<32x8xf32>
    %cst_8 = arith.constant dense<0.000000e+00> : vector<8x8xf32>
    %7 = tpu.matmul %1, %6, %cst_8 {dimension_numbers = #tpu.dot_dimension_numbers<[1], [0], [0], [1], [0, 0, 1, 1], [], []>} : vector<8x32xf32>, vector<32x8xf32>, vector<8x8xf32> -> vector<8x8xf32>
    %c0_9 = arith.constant 0 : index
    %c0_10 = arith.constant 0 : index
    %c0_11 = arith.constant 0 : index
    %8 = vector.load %arg4[%c0_9, %c0_10, %c0_11] : memref<4x1x8xf32, #tpu.memory_space<vmem>>, vector<1x1x8xf32>
    %9 = vector.shape_cast %8 : vector<1x1x8xf32> to vector<1x8xf32>
    %10 = vector.broadcast %9 : vector<1x8xf32> to vector<8x8xf32>
    %11 = arith.addf %7, %10 : vector<8x8xf32>
    %c0_12 = arith.constant 0 : index
    %c0_13 = arith.constant 0 : index
    %c0_14 = arith.constant 0 : index
    %12 = vector.load %arg5[%c0_12, %c0_13, %c0_14] : memref<4x32x8xf32, #tpu.memory_space<vmem>>, vector<1x32x8xf32>
    %13 = vector.shape_cast %12 : vector<1x32x8xf32> to vector<32x8xf32>
    %cst_15 = arith.constant dense<0.000000e+00> : vector<8x8xf32>
    %14 = tpu.matmul %1, %13, %cst_15 {dimension_numbers = #tpu.dot_dimension_numbers<[1], [0], [0], [1], [0, 0, 1, 1], [], []>} : vector<8x32xf32>, vector<32x8xf32>, vector<8x8xf32> -> vector<8x8xf32>
    %c0_16 = arith.constant 0 : index
    %c0_17 = arith.constant 0 : index
    %c0_18 = arith.constant 0 : index
    %15 = vector.load %arg6[%c0_16, %c0_17, %c0_18] : memref<4x1x8xf32, #tpu.memory_space<vmem>>, vector<1x1x8xf32>
    %16 = vector.shape_cast %15 : vector<1x1x8xf32> to vector<1x8xf32>
    %17 = vector.broadcast %16 : vector<1x8xf32> to vector<8x8xf32>
    %18 = arith.addf %14, %17 : vector<8x8xf32>
    %c0_19 = arith.constant 0 : index
    %c0_20 = arith.constant 0 : index
    %c0_21 = arith.constant 0 : index
    %19 = vector.load %arg7[%c0_19, %c0_20, %c0_21] : memref<4x32x8xf32, #tpu.memory_space<vmem>>, vector<1x32x8xf32>
    %20 = vector.shape_cast %19 : vector<1x32x8xf32> to vector<32x8xf32>
    %cst_22 = arith.constant dense<0.000000e+00> : vector<8x8xf32>
    %21 = tpu.matmul %1, %20, %cst_22 {dimension_numbers = #tpu.dot_dimension_numbers<[1], [0], [0], [1], [0, 0, 1, 1], [], []>} : vector<8x32xf32>, vector<32x8xf32>, vector<8x8xf32> -> vector<8x8xf32>
    %c0_23 = arith.constant 0 : index
    %c0_24 = arith.constant 0 : index
    %c0_25 = arith.constant 0 : index
    %22 = vector.load %arg8[%c0_23, %c0_24, %c0_25] : memref<4x1x8xf32, #tpu.memory_space<vmem>>, vector<1x1x8xf32>
    %23 = vector.shape_cast %22 : vector<1x1x8xf32> to vector<1x8xf32>
    %24 = vector.broadcast %23 : vector<1x8xf32> to vector<8x8xf32>
    %25 = arith.addf %21, %24 : vector<8x8xf32>
    %cst_26 = arith.constant dense<0.000000e+00> : vector<8x8xf32>
    %26 = tpu.matmul %11, %18, %cst_26 {dimension_numbers = #tpu.dot_dimension_numbers<[1], [1], [0], [0], [0, 0, 1, 0], [], []>} : vector<8x8xf32>, vector<8x8xf32>, vector<8x8xf32> -> vector<8x8xf32>
    %cst_27 = arith.constant 0.353553385 : f32
    %27 = vector.broadcast %cst_27 : f32 to vector<8x8xf32>
    %28 = arith.mulf %26, %27 : vector<8x8xf32>
    %cst_28 = arith.constant 0.000000e+00 : f32
    %29 = vector.broadcast %cst_28 : f32 to vector<8x8xf32>
    %30 = arith.cmpf one, %3, %29 : vector<8x8xf32>
    %cst_29 = arith.constant -1.000000e+09 : f32
    %31 = vector.broadcast %cst_29 : f32 to vector<8x8xf32>
    %32 = arith.select %30, %28, %31 : vector<8x8xi1>, vector<8x8xf32>
    %cst_30 = arith.constant dense<0xFF800000> : vector<8xf32>
    %33 = vector.multi_reduction <maximumf>, %32, %cst_30 [1] : vector<8x8xf32> to vector<8xf32>
    %34 = vector.shape_cast %33 : vector<8xf32> to vector<8x1xf32>
    %35 = vector.broadcast %34 : vector<8x1xf32> to vector<8x8xf32>
    %36 = arith.subf %32, %35 : vector<8x8xf32>
    %37 = math.exp %36 : vector<8x8xf32>
    %cst_31 = arith.constant dense<0.000000e+00> : vector<8xf32>
    %38 = vector.multi_reduction <add>, %37, %cst_31 [1] : vector<8x8xf32> to vector<8xf32>
    %39 = vector.shape_cast %38 : vector<8xf32> to vector<8x1xf32>
    %40 = vector.broadcast %39 : vector<8x1xf32> to vector<8x8xf32>
    %41 = arith.divf %37, %40 : vector<8x8xf32>
    %cst_32 = arith.constant dense<0.000000e+00> : vector<8x8xf32>
    %42 = tpu.matmul %41, %25, %cst_32 {dimension_numbers = #tpu.dot_dimension_numbers<[1], [0], [0], [1], [0, 0, 1, 1], [], []>} : vector<8x8xf32>, vector<8x8xf32>, vector<8x8xf32> -> vector<8x8xf32>
    %c0_33 = arith.constant 0 : index
    %c0_34 = arith.constant 0 : index
    %c0_35 = arith.constant 0 : index
    %43 = vector.load %arg9[%c0_33, %c0_34, %c0_35] : memref<4x8x32xf32, #tpu.memory_space<vmem>>, vector<1x8x32xf32>
    %44 = vector.shape_cast %43 : vector<1x8x32xf32> to vector<8x32xf32>
    %cst_36 = arith.constant dense<0.000000e+00> : vector<8x32xf32>
    %45 = tpu.matmul %42, %44, %cst_36 {dimension_numbers = #tpu.dot_dimension_numbers<[1], [0], [0], [1], [0, 0, 1, 1], [], []>} : vector<8x8xf32>, vector<8x32xf32>, vector<8x32xf32> -> vector<8x32xf32>
    %46 = arith.addf %4, %45 : vector<8x32xf32>
    %c1 = arith.constant 1 : index
    %c0_37 = arith.constant 0 : index
    %c0_38 = arith.constant 0 : index
    %47 = vector.load %arg3[%c1, %c0_37, %c0_38] : memref<4x32x8xf32, #tpu.memory_space<vmem>>, vector<1x32x8xf32>
    %48 = vector.shape_cast %47 : vector<1x32x8xf32> to vector<32x8xf32>
    %cst_39 = arith.constant dense<0.000000e+00> : vector<8x8xf32>
    %49 = tpu.matmul %1, %48, %cst_39 {dimension_numbers = #tpu.dot_dimension_numbers<[1], [0], [0], [1], [0, 0, 1, 1], [], []>} : vector<8x32xf32>, vector<32x8xf32>, vector<8x8xf32> -> vector<8x8xf32>
    %c1_40 = arith.constant 1 : index
    %c0_41 = arith.constant 0 : index
    %c0_42 = arith.constant 0 : index
    %50 = vector.load %arg4[%c1_40, %c0_41, %c0_42] : memref<4x1x8xf32, #tpu.memory_space<vmem>>, vector<1x1x8xf32>
    %51 = vector.shape_cast %50 : vector<1x1x8xf32> to vector<1x8xf32>
    %52 = vector.broadcast %51 : vector<1x8xf32> to vector<8x8xf32>
    %53 = arith.addf %49, %52 : vector<8x8xf32>
    %c1_43 = arith.constant 1 : index
    %c0_44 = arith.constant 0 : index
    %c0_45 = arith.constant 0 : index
    %54 = vector.load %arg5[%c1_43, %c0_44, %c0_45] : memref<4x32x8xf32, #tpu.memory_space<vmem>>, vector<1x32x8xf32>
    %55 = vector.shape_cast %54 : vector<1x32x8xf32> to vector<32x8xf32>
    %cst_46 = arith.constant dense<0.000000e+00> : vector<8x8xf32>
    %56 = tpu.matmul %1, %55, %cst_46 {dimension_numbers = #tpu.dot_dimension_numbers<[1], [0], [0], [1], [0, 0, 1, 1], [], []>} : vector<8x32xf32>, vector<32x8xf32>, vector<8x8xf32> -> vector<8x8xf32>
    %c1_47 = arith.constant 1 : index
    %c0_48 = arith.constant 0 : index
    %c0_49 = arith.constant 0 : index
    %57 = vector.load %arg6[%c1_47, %c0_48, %c0_49] : memref<4x1x8xf32, #tpu.memory_space<vmem>>, vector<1x1x8xf32>
    %58 = vector.shape_cast %57 : vector<1x1x8xf32> to vector<1x8xf32>
    %59 = vector.broadcast %58 : vector<1x8xf32> to vector<8x8xf32>
    %60 = arith.addf %56, %59 : vector<8x8xf32>
    %c1_50 = arith.constant 1 : index
    %c0_51 = arith.constant 0 : index
    %c0_52 = arith.constant 0 : index
    %61 = vector.load %arg7[%c1_50, %c0_51, %c0_52] : memref<4x32x8xf32, #tpu.memory_space<vmem>>, vector<1x32x8xf32>
    %62 = vector.shape_cast %61 : vector<1x32x8xf32> to vector<32x8xf32>
    %cst_53 = arith.constant dense<0.000000e+00> : vector<8x8xf32>
    %63 = tpu.matmul %1, %62, %cst_53 {dimension_numbers = #tpu.dot_dimension_numbers<[1], [0], [0], [1], [0, 0, 1, 1], [], []>} : vector<8x32xf32>, vector<32x8xf32>, vector<8x8xf32> -> vector<8x8xf32>
    %c1_54 = arith.constant 1 : index
    %c0_55 = arith.constant 0 : index
    %c0_56 = arith.constant 0 : index
    %64 = vector.load %arg8[%c1_54, %c0_55, %c0_56] : memref<4x1x8xf32, #tpu.memory_space<vmem>>, vector<1x1x8xf32>
    %65 = vector.shape_cast %64 : vector<1x1x8xf32> to vector<1x8xf32>
    %66 = vector.broadcast %65 : vector<1x8xf32> to vector<8x8xf32>
    %67 = arith.addf %63, %66 : vector<8x8xf32>
    %cst_57 = arith.constant dense<0.000000e+00> : vector<8x8xf32>
    %68 = tpu.matmul %53, %60, %cst_57 {dimension_numbers = #tpu.dot_dimension_numbers<[1], [1], [0], [0], [0, 0, 1, 0], [], []>} : vector<8x8xf32>, vector<8x8xf32>, vector<8x8xf32> -> vector<8x8xf32>
    %cst_58 = arith.constant 0.353553385 : f32
    %69 = vector.broadcast %cst_58 : f32 to vector<8x8xf32>
    %70 = arith.mulf %68, %69 : vector<8x8xf32>
    %cst_59 = arith.constant 0.000000e+00 : f32
    %71 = vector.broadcast %cst_59 : f32 to vector<8x8xf32>
    %72 = arith.cmpf one, %3, %71 : vector<8x8xf32>
    %cst_60 = arith.constant -1.000000e+09 : f32
    %73 = vector.broadcast %cst_60 : f32 to vector<8x8xf32>
    %74 = arith.select %72, %70, %73 : vector<8x8xi1>, vector<8x8xf32>
    %cst_61 = arith.constant dense<0xFF800000> : vector<8xf32>
    %75 = vector.multi_reduction <maximumf>, %74, %cst_61 [1] : vector<8x8xf32> to vector<8xf32>
    %76 = vector.shape_cast %75 : vector<8xf32> to vector<8x1xf32>
    %77 = vector.broadcast %76 : vector<8x1xf32> to vector<8x8xf32>
    %78 = arith.subf %74, %77 : vector<8x8xf32>
    %79 = math.exp %78 : vector<8x8xf32>
    %cst_62 = arith.constant dense<0.000000e+00> : vector<8xf32>
    %80 = vector.multi_reduction <add>, %79, %cst_62 [1] : vector<8x8xf32> to vector<8xf32>
    %81 = vector.shape_cast %80 : vector<8xf32> to vector<8x1xf32>
    %82 = vector.broadcast %81 : vector<8x1xf32> to vector<8x8xf32>
    %83 = arith.divf %79, %82 : vector<8x8xf32>
    %cst_63 = arith.constant dense<0.000000e+00> : vector<8x8xf32>
    %84 = tpu.matmul %83, %67, %cst_63 {dimension_numbers = #tpu.dot_dimension_numbers<[1], [0], [0], [1], [0, 0, 1, 1], [], []>} : vector<8x8xf32>, vector<8x8xf32>, vector<8x8xf32> -> vector<8x8xf32>
    %c1_64 = arith.constant 1 : index
    %c0_65 = arith.constant 0 : index
    %c0_66 = arith.constant 0 : index
    %85 = vector.load %arg9[%c1_64, %c0_65, %c0_66] : memref<4x8x32xf32, #tpu.memory_space<vmem>>, vector<1x8x32xf32>
    %86 = vector.shape_cast %85 : vector<1x8x32xf32> to vector<8x32xf32>
    %cst_67 = arith.constant dense<0.000000e+00> : vector<8x32xf32>
    %87 = tpu.matmul %84, %86, %cst_67 {dimension_numbers = #tpu.dot_dimension_numbers<[1], [0], [0], [1], [0, 0, 1, 1], [], []>} : vector<8x8xf32>, vector<8x32xf32>, vector<8x32xf32> -> vector<8x32xf32>
    %88 = arith.addf %46, %87 : vector<8x32xf32>
    %c2 = arith.constant 2 : index
    %c0_68 = arith.constant 0 : index
    %c0_69 = arith.constant 0 : index
    %89 = vector.load %arg3[%c2, %c0_68, %c0_69] : memref<4x32x8xf32, #tpu.memory_space<vmem>>, vector<1x32x8xf32>
    %90 = vector.shape_cast %89 : vector<1x32x8xf32> to vector<32x8xf32>
    %cst_70 = arith.constant dense<0.000000e+00> : vector<8x8xf32>
    %91 = tpu.matmul %1, %90, %cst_70 {dimension_numbers = #tpu.dot_dimension_numbers<[1], [0], [0], [1], [0, 0, 1, 1], [], []>} : vector<8x32xf32>, vector<32x8xf32>, vector<8x8xf32> -> vector<8x8xf32>
    %c2_71 = arith.constant 2 : index
    %c0_72 = arith.constant 0 : index
    %c0_73 = arith.constant 0 : index
    %92 = vector.load %arg4[%c2_71, %c0_72, %c0_73] : memref<4x1x8xf32, #tpu.memory_space<vmem>>, vector<1x1x8xf32>
    %93 = vector.shape_cast %92 : vector<1x1x8xf32> to vector<1x8xf32>
    %94 = vector.broadcast %93 : vector<1x8xf32> to vector<8x8xf32>
    %95 = arith.addf %91, %94 : vector<8x8xf32>
    %c2_74 = arith.constant 2 : index
    %c0_75 = arith.constant 0 : index
    %c0_76 = arith.constant 0 : index
    %96 = vector.load %arg5[%c2_74, %c0_75, %c0_76] : memref<4x32x8xf32, #tpu.memory_space<vmem>>, vector<1x32x8xf32>
    %97 = vector.shape_cast %96 : vector<1x32x8xf32> to vector<32x8xf32>
    %cst_77 = arith.constant dense<0.000000e+00> : vector<8x8xf32>
    %98 = tpu.matmul %1, %97, %cst_77 {dimension_numbers = #tpu.dot_dimension_numbers<[1], [0], [0], [1], [0, 0, 1, 1], [], []>} : vector<8x32xf32>, vector<32x8xf32>, vector<8x8xf32> -> vector<8x8xf32>
    %c2_78 = arith.constant 2 : index
    %c0_79 = arith.constant 0 : index
    %c0_80 = arith.constant 0 : index
    %99 = vector.load %arg6[%c2_78, %c0_79, %c0_80] : memref<4x1x8xf32, #tpu.memory_space<vmem>>, vector<1x1x8xf32>
    %100 = vector.shape_cast %99 : vector<1x1x8xf32> to vector<1x8xf32>
    %101 = vector.broadcast %100 : vector<1x8xf32> to vector<8x8xf32>
    %102 = arith.addf %98, %101 : vector<8x8xf32>
    %c2_81 = arith.constant 2 : index
    %c0_82 = arith.constant 0 : index
    %c0_83 = arith.constant 0 : index
    %103 = vector.load %arg7[%c2_81, %c0_82, %c0_83] : memref<4x32x8xf32, #tpu.memory_space<vmem>>, vector<1x32x8xf32>
    %104 = vector.shape_cast %103 : vector<1x32x8xf32> to vector<32x8xf32>
    %cst_84 = arith.constant dense<0.000000e+00> : vector<8x8xf32>
    %105 = tpu.matmul %1, %104, %cst_84 {dimension_numbers = #tpu.dot_dimension_numbers<[1], [0], [0], [1], [0, 0, 1, 1], [], []>} : vector<8x32xf32>, vector<32x8xf32>, vector<8x8xf32> -> vector<8x8xf32>
    %c2_85 = arith.constant 2 : index
    %c0_86 = arith.constant 0 : index
    %c0_87 = arith.constant 0 : index
    %106 = vector.load %arg8[%c2_85, %c0_86, %c0_87] : memref<4x1x8xf32, #tpu.memory_space<vmem>>, vector<1x1x8xf32>
    %107 = vector.shape_cast %106 : vector<1x1x8xf32> to vector<1x8xf32>
    %108 = vector.broadcast %107 : vector<1x8xf32> to vector<8x8xf32>
    %109 = arith.addf %105, %108 : vector<8x8xf32>
    %cst_88 = arith.constant dense<0.000000e+00> : vector<8x8xf32>
    %110 = tpu.matmul %95, %102, %cst_88 {dimension_numbers = #tpu.dot_dimension_numbers<[1], [1], [0], [0], [0, 0, 1, 0], [], []>} : vector<8x8xf32>, vector<8x8xf32>, vector<8x8xf32> -> vector<8x8xf32>
    %cst_89 = arith.constant 0.353553385 : f32
    %111 = vector.broadcast %cst_89 : f32 to vector<8x8xf32>
    %112 = arith.mulf %110, %111 : vector<8x8xf32>
    %cst_90 = arith.constant 0.000000e+00 : f32
    %113 = vector.broadcast %cst_90 : f32 to vector<8x8xf32>
    %114 = arith.cmpf one, %3, %113 : vector<8x8xf32>
    %cst_91 = arith.constant -1.000000e+09 : f32
    %115 = vector.broadcast %cst_91 : f32 to vector<8x8xf32>
    %116 = arith.select %114, %112, %115 : vector<8x8xi1>, vector<8x8xf32>
    %cst_92 = arith.constant dense<0xFF800000> : vector<8xf32>
    %117 = vector.multi_reduction <maximumf>, %116, %cst_92 [1] : vector<8x8xf32> to vector<8xf32>
    %118 = vector.shape_cast %117 : vector<8xf32> to vector<8x1xf32>
    %119 = vector.broadcast %118 : vector<8x1xf32> to vector<8x8xf32>
    %120 = arith.subf %116, %119 : vector<8x8xf32>
    %121 = math.exp %120 : vector<8x8xf32>
    %cst_93 = arith.constant dense<0.000000e+00> : vector<8xf32>
    %122 = vector.multi_reduction <add>, %121, %cst_93 [1] : vector<8x8xf32> to vector<8xf32>
    %123 = vector.shape_cast %122 : vector<8xf32> to vector<8x1xf32>
    %124 = vector.broadcast %123 : vector<8x1xf32> to vector<8x8xf32>
    %125 = arith.divf %121, %124 : vector<8x8xf32>
    %cst_94 = arith.constant dense<0.000000e+00> : vector<8x8xf32>
    %126 = tpu.matmul %125, %109, %cst_94 {dimension_numbers = #tpu.dot_dimension_numbers<[1], [0], [0], [1], [0, 0, 1, 1], [], []>} : vector<8x8xf32>, vector<8x8xf32>, vector<8x8xf32> -> vector<8x8xf32>
    %c2_95 = arith.constant 2 : index
    %c0_96 = arith.constant 0 : index
    %c0_97 = arith.constant 0 : index
    %127 = vector.load %arg9[%c2_95, %c0_96, %c0_97] : memref<4x8x32xf32, #tpu.memory_space<vmem>>, vector<1x8x32xf32>
    %128 = vector.shape_cast %127 : vector<1x8x32xf32> to vector<8x32xf32>
    %cst_98 = arith.constant dense<0.000000e+00> : vector<8x32xf32>
    %129 = tpu.matmul %126, %128, %cst_98 {dimension_numbers = #tpu.dot_dimension_numbers<[1], [0], [0], [1], [0, 0, 1, 1], [], []>} : vector<8x8xf32>, vector<8x32xf32>, vector<8x32xf32> -> vector<8x32xf32>
    %130 = arith.addf %88, %129 : vector<8x32xf32>
    %c3 = arith.constant 3 : index
    %c0_99 = arith.constant 0 : index
    %c0_100 = arith.constant 0 : index
    %131 = vector.load %arg3[%c3, %c0_99, %c0_100] : memref<4x32x8xf32, #tpu.memory_space<vmem>>, vector<1x32x8xf32>
    %132 = vector.shape_cast %131 : vector<1x32x8xf32> to vector<32x8xf32>
    %cst_101 = arith.constant dense<0.000000e+00> : vector<8x8xf32>
    %133 = tpu.matmul %1, %132, %cst_101 {dimension_numbers = #tpu.dot_dimension_numbers<[1], [0], [0], [1], [0, 0, 1, 1], [], []>} : vector<8x32xf32>, vector<32x8xf32>, vector<8x8xf32> -> vector<8x8xf32>
    %c3_102 = arith.constant 3 : index
    %c0_103 = arith.constant 0 : index
    %c0_104 = arith.constant 0 : index
    %134 = vector.load %arg4[%c3_102, %c0_103, %c0_104] : memref<4x1x8xf32, #tpu.memory_space<vmem>>, vector<1x1x8xf32>
    %135 = vector.shape_cast %134 : vector<1x1x8xf32> to vector<1x8xf32>
    %136 = vector.broadcast %135 : vector<1x8xf32> to vector<8x8xf32>
    %137 = arith.addf %133, %136 : vector<8x8xf32>
    %c3_105 = arith.constant 3 : index
    %c0_106 = arith.constant 0 : index
    %c0_107 = arith.constant 0 : index
    %138 = vector.load %arg5[%c3_105, %c0_106, %c0_107] : memref<4x32x8xf32, #tpu.memory_space<vmem>>, vector<1x32x8xf32>
    %139 = vector.shape_cast %138 : vector<1x32x8xf32> to vector<32x8xf32>
    %cst_108 = arith.constant dense<0.000000e+00> : vector<8x8xf32>
    %140 = tpu.matmul %1, %139, %cst_108 {dimension_numbers = #tpu.dot_dimension_numbers<[1], [0], [0], [1], [0, 0, 1, 1], [], []>} : vector<8x32xf32>, vector<32x8xf32>, vector<8x8xf32> -> vector<8x8xf32>
    %c3_109 = arith.constant 3 : index
    %c0_110 = arith.constant 0 : index
    %c0_111 = arith.constant 0 : index
    %141 = vector.load %arg6[%c3_109, %c0_110, %c0_111] : memref<4x1x8xf32, #tpu.memory_space<vmem>>, vector<1x1x8xf32>
    %142 = vector.shape_cast %141 : vector<1x1x8xf32> to vector<1x8xf32>
    %143 = vector.broadcast %142 : vector<1x8xf32> to vector<8x8xf32>
    %144 = arith.addf %140, %143 : vector<8x8xf32>
    %c3_112 = arith.constant 3 : index
    %c0_113 = arith.constant 0 : index
    %c0_114 = arith.constant 0 : index
    %145 = vector.load %arg7[%c3_112, %c0_113, %c0_114] : memref<4x32x8xf32, #tpu.memory_space<vmem>>, vector<1x32x8xf32>
    %146 = vector.shape_cast %145 : vector<1x32x8xf32> to vector<32x8xf32>
    %cst_115 = arith.constant dense<0.000000e+00> : vector<8x8xf32>
    %147 = tpu.matmul %1, %146, %cst_115 {dimension_numbers = #tpu.dot_dimension_numbers<[1], [0], [0], [1], [0, 0, 1, 1], [], []>} : vector<8x32xf32>, vector<32x8xf32>, vector<8x8xf32> -> vector<8x8xf32>
    %c3_116 = arith.constant 3 : index
    %c0_117 = arith.constant 0 : index
    %c0_118 = arith.constant 0 : index
    %148 = vector.load %arg8[%c3_116, %c0_117, %c0_118] : memref<4x1x8xf32, #tpu.memory_space<vmem>>, vector<1x1x8xf32>
    %149 = vector.shape_cast %148 : vector<1x1x8xf32> to vector<1x8xf32>
    %150 = vector.broadcast %149 : vector<1x8xf32> to vector<8x8xf32>
    %151 = arith.addf %147, %150 : vector<8x8xf32>
    %cst_119 = arith.constant dense<0.000000e+00> : vector<8x8xf32>
    %152 = tpu.matmul %137, %144, %cst_119 {dimension_numbers = #tpu.dot_dimension_numbers<[1], [1], [0], [0], [0, 0, 1, 0], [], []>} : vector<8x8xf32>, vector<8x8xf32>, vector<8x8xf32> -> vector<8x8xf32>
    %cst_120 = arith.constant 0.353553385 : f32
    %153 = vector.broadcast %cst_120 : f32 to vector<8x8xf32>
    %154 = arith.mulf %152, %153 : vector<8x8xf32>
    %cst_121 = arith.constant 0.000000e+00 : f32
    %155 = vector.broadcast %cst_121 : f32 to vector<8x8xf32>
    %156 = arith.cmpf one, %3, %155 : vector<8x8xf32>
    %cst_122 = arith.constant -1.000000e+09 : f32
    %157 = vector.broadcast %cst_122 : f32 to vector<8x8xf32>
    %158 = arith.select %156, %154, %157 : vector<8x8xi1>, vector<8x8xf32>
    %cst_123 = arith.constant dense<0xFF800000> : vector<8xf32>
    %159 = vector.multi_reduction <maximumf>, %158, %cst_123 [1] : vector<8x8xf32> to vector<8xf32>
    %160 = vector.shape_cast %159 : vector<8xf32> to vector<8x1xf32>
    %161 = vector.broadcast %160 : vector<8x1xf32> to vector<8x8xf32>
    %162 = arith.subf %158, %161 : vector<8x8xf32>
    %163 = math.exp %162 : vector<8x8xf32>
    %cst_124 = arith.constant dense<0.000000e+00> : vector<8xf32>
    %164 = vector.multi_reduction <add>, %163, %cst_124 [1] : vector<8x8xf32> to vector<8xf32>
    %165 = vector.shape_cast %164 : vector<8xf32> to vector<8x1xf32>
    %166 = vector.broadcast %165 : vector<8x1xf32> to vector<8x8xf32>
    %167 = arith.divf %163, %166 : vector<8x8xf32>
    %cst_125 = arith.constant dense<0.000000e+00> : vector<8x8xf32>
    %168 = tpu.matmul %167, %151, %cst_125 {dimension_numbers = #tpu.dot_dimension_numbers<[1], [0], [0], [1], [0, 0, 1, 1], [], []>} : vector<8x8xf32>, vector<8x8xf32>, vector<8x8xf32> -> vector<8x8xf32>
    %c3_126 = arith.constant 3 : index
    %c0_127 = arith.constant 0 : index
    %c0_128 = arith.constant 0 : index
    %169 = vector.load %arg9[%c3_126, %c0_127, %c0_128] : memref<4x8x32xf32, #tpu.memory_space<vmem>>, vector<1x8x32xf32>
    %170 = vector.shape_cast %169 : vector<1x8x32xf32> to vector<8x32xf32>
    %cst_129 = arith.constant dense<0.000000e+00> : vector<8x32xf32>
    %171 = tpu.matmul %168, %170, %cst_129 {dimension_numbers = #tpu.dot_dimension_numbers<[1], [0], [0], [1], [0, 0, 1, 1], [], []>} : vector<8x8xf32>, vector<8x32xf32>, vector<8x32xf32> -> vector<8x32xf32>
    %172 = arith.addf %130, %171 : vector<8x32xf32>
    %c0_130 = arith.constant 0 : index
    %c0_131 = arith.constant 0 : index
    %173 = vector.load %arg10[%c0_130, %c0_131] : memref<1x32xf32, #tpu.memory_space<vmem>>, vector<1x32xf32>
    %174 = vector.broadcast %173 : vector<1x32xf32> to vector<8x32xf32>
    %175 = arith.addf %172, %174 : vector<8x32xf32>
    %176 = arith.addf %1, %175 : vector<8x32xf32>
    %cst_132 = arith.constant dense<0.000000e+00> : vector<8xf32>
    %177 = vector.multi_reduction <add>, %176, %cst_132 [1] : vector<8x32xf32> to vector<8xf32>
    %178 = vector.shape_cast %177 : vector<8xf32> to vector<8x1xf32>
    %cst_133 = arith.constant 3.200000e+01 : f32
    %179 = vector.broadcast %cst_133 : f32 to vector<8x1xf32>
    %180 = arith.divf %178, %179 : vector<8x1xf32>
    %181 = vector.broadcast %180 : vector<8x1xf32> to vector<8x32xf32>
    %182 = arith.subf %176, %181 : vector<8x32xf32>
    %183 = arith.mulf %182, %182 : vector<8x32xf32>
    %cst_134 = arith.constant dense<0.000000e+00> : vector<8xf32>
    %184 = vector.multi_reduction <add>, %183, %cst_134 [1] : vector<8x32xf32> to vector<8xf32>
    %185 = vector.shape_cast %184 : vector<8xf32> to vector<8x1xf32>
    %cst_135 = arith.constant 3.200000e+01 : f32
    %186 = vector.broadcast %cst_135 : f32 to vector<8x1xf32>
    %187 = arith.divf %185, %186 : vector<8x1xf32>
    %188 = vector.broadcast %180 : vector<8x1xf32> to vector<8x32xf32>
    %189 = arith.subf %176, %188 : vector<8x32xf32>
    %cst_136 = arith.constant 9.99999974E-6 : f32
    %190 = vector.broadcast %cst_136 : f32 to vector<8x1xf32>
    %191 = arith.addf %187, %190 : vector<8x1xf32>
    %192 = math.sqrt %191 : vector<8x1xf32>
    %193 = vector.broadcast %192 : vector<8x1xf32> to vector<8x32xf32>
    %194 = arith.divf %189, %193 : vector<8x32xf32>
    %c0_137 = arith.constant 0 : index
    %c0_138 = arith.constant 0 : index
    %195 = vector.load %arg15[%c0_137, %c0_138] : memref<1x32xf32, #tpu.memory_space<vmem>>, vector<1x32xf32>
    %196 = vector.broadcast %195 : vector<1x32xf32> to vector<8x32xf32>
    %197 = arith.mulf %194, %196 : vector<8x32xf32>
    %c0_139 = arith.constant 0 : index
    %c0_140 = arith.constant 0 : index
    %198 = vector.load %arg16[%c0_139, %c0_140] : memref<1x32xf32, #tpu.memory_space<vmem>>, vector<1x32xf32>
    %199 = vector.broadcast %198 : vector<1x32xf32> to vector<8x32xf32>
    %200 = arith.addf %197, %199 : vector<8x32xf32>
    %c0_141 = arith.constant 0 : index
    %c0_142 = arith.constant 0 : index
    %201 = vector.load %arg11[%c0_141, %c0_142] : memref<32x64xf32, #tpu.memory_space<vmem>>, vector<32x64xf32>
    %cst_143 = arith.constant dense<0.000000e+00> : vector<8x64xf32>
    %202 = tpu.matmul %200, %201, %cst_143 {dimension_numbers = #tpu.dot_dimension_numbers<[1], [0], [0], [1], [0, 0, 1, 1], [], []>} : vector<8x32xf32>, vector<32x64xf32>, vector<8x64xf32> -> vector<8x64xf32>
    %c0_144 = arith.constant 0 : index
    %c0_145 = arith.constant 0 : index
    %203 = vector.load %arg12[%c0_144, %c0_145] : memref<1x64xf32, #tpu.memory_space<vmem>>, vector<1x64xf32>
    %204 = vector.broadcast %203 : vector<1x64xf32> to vector<8x64xf32>
    %205 = arith.addf %202, %204 : vector<8x64xf32>
    %cst_146 = arith.constant 0.000000e+00 : f32
    %206 = vector.broadcast %cst_146 : f32 to vector<8x64xf32>
    %207 = arith.maximumf %205, %206 : vector<8x64xf32>
    %c0_147 = arith.constant 0 : index
    %c0_148 = arith.constant 0 : index
    %208 = vector.load %arg13[%c0_147, %c0_148] : memref<64x32xf32, #tpu.memory_space<vmem>>, vector<64x32xf32>
    %cst_149 = arith.constant dense<0.000000e+00> : vector<8x32xf32>
    %209 = tpu.matmul %207, %208, %cst_149 {dimension_numbers = #tpu.dot_dimension_numbers<[1], [0], [0], [1], [0, 0, 1, 1], [], []>} : vector<8x64xf32>, vector<64x32xf32>, vector<8x32xf32> -> vector<8x32xf32>
    %c0_150 = arith.constant 0 : index
    %c0_151 = arith.constant 0 : index
    %210 = vector.load %arg14[%c0_150, %c0_151] : memref<1x32xf32, #tpu.memory_space<vmem>>, vector<1x32xf32>
    %211 = vector.broadcast %210 : vector<1x32xf32> to vector<8x32xf32>
    %212 = arith.addf %209, %211 : vector<8x32xf32>
    %213 = arith.addf %200, %212 : vector<8x32xf32>
    %cst_152 = arith.constant dense<0.000000e+00> : vector<8xf32>
    %214 = vector.multi_reduction <add>, %213, %cst_152 [1] : vector<8x32xf32> to vector<8xf32>
    %215 = vector.shape_cast %214 : vector<8xf32> to vector<8x1xf32>
    %cst_153 = arith.constant 3.200000e+01 : f32
    %216 = vector.broadcast %cst_153 : f32 to vector<8x1xf32>
    %217 = arith.divf %215, %216 : vector<8x1xf32>
    %218 = vector.broadcast %217 : vector<8x1xf32> to vector<8x32xf32>
    %219 = arith.subf %213, %218 : vector<8x32xf32>
    %220 = arith.mulf %219, %219 : vector<8x32xf32>
    %cst_154 = arith.constant dense<0.000000e+00> : vector<8xf32>
    %221 = vector.multi_reduction <add>, %220, %cst_154 [1] : vector<8x32xf32> to vector<8xf32>
    %222 = vector.shape_cast %221 : vector<8xf32> to vector<8x1xf32>
    %cst_155 = arith.constant 3.200000e+01 : f32
    %223 = vector.broadcast %cst_155 : f32 to vector<8x1xf32>
    %224 = arith.divf %222, %223 : vector<8x1xf32>
    %225 = vector.broadcast %217 : vector<8x1xf32> to vector<8x32xf32>
    %226 = arith.subf %213, %225 : vector<8x32xf32>
    %cst_156 = arith.constant 9.99999974E-6 : f32
    %227 = vector.broadcast %cst_156 : f32 to vector<8x1xf32>
    %228 = arith.addf %224, %227 : vector<8x1xf32>
    %229 = math.sqrt %228 : vector<8x1xf32>
    %230 = vector.broadcast %229 : vector<8x1xf32> to vector<8x32xf32>
    %231 = arith.divf %226, %230 : vector<8x32xf32>
    %c0_157 = arith.constant 0 : index
    %c0_158 = arith.constant 0 : index
    %232 = vector.load %arg17[%c0_157, %c0_158] : memref<1x32xf32, #tpu.memory_space<vmem>>, vector<1x32xf32>
    %233 = vector.broadcast %232 : vector<1x32xf32> to vector<8x32xf32>
    %234 = arith.mulf %231, %233 : vector<8x32xf32>
    %c0_159 = arith.constant 0 : index
    %c0_160 = arith.constant 0 : index
    %235 = vector.load %arg18[%c0_159, %c0_160] : memref<1x32xf32, #tpu.memory_space<vmem>>, vector<1x32xf32>
    %236 = vector.broadcast %235 : vector<1x32xf32> to vector<8x32xf32>
    %237 = arith.addf %234, %236 : vector<8x32xf32>
    %c0_161 = arith.constant 0 : index
    %c0_162 = arith.constant 0 : index
    %c0_163 = arith.constant 0 : index
    %238 = vector.load %arg19[%c0_161, %c0_162, %c0_163] : memref<1x8x32xf32, #tpu.memory_space<vmem>>, vector<1x8x32xf32>
    %239 = vector.shape_cast %238 : vector<1x8x32xf32> to vector<8x32xf32>
    %240 = vector.shape_cast %237 : vector<8x32xf32> to vector<1x8x32xf32>
    tpu.vector_store %arg19[%c0_161, %c0_162, %c0_163], %240 {strides = array<i32>} : memref<1x8x32xf32, #tpu.memory_space<vmem>>, vector<1x8x32xf32>,
    return
  }
  func.func @transform_0(%arg0: i32) -> (i32, i32, i32) {
    %c0_i32 = arith.constant 0 : i32
    %c0_i32_0 = arith.constant 0 : i32
    %c0_i32_1 = arith.constant 0 : i32
    return %arg0, %c0_i32, %c0_i32_0 : i32, i32, i32
  }
  func.func @transform_1(%arg0: i32) -> (i32, i32, i32) {
    %c0_i32 = arith.constant 0 : i32
    %c0_i32_0 = arith.constant 0 : i32
    %c0_i32_1 = arith.constant 0 : i32
    return %arg0, %c0_i32, %c0_i32_0 : i32, i32, i32
  }
  func.func @transform_2(%arg0: i32) -> (i32, i32, i32) {
    %c0_i32 = arith.constant 0 : i32
    %c0_i32_0 = arith.constant 0 : i32
    %c0_i32_1 = arith.constant 0 : i32
    %c0_i32_2 = arith.constant 0 : i32
    return %c0_i32, %c0_i32_0, %c0_i32_1 : i32, i32, i32
  }
  func.func @transform_3(%arg0: i32) -> (i32, i32, i32) {
    %c0_i32 = arith.constant 0 : i32
    %c0_i32_0 = arith.constant 0 : i32
    %c0_i32_1 = arith.constant 0 : i32
    %c0_i32_2 = arith.constant 0 : i32
    return %c0_i32, %c0_i32_0, %c0_i32_1 : i32, i32, i32
  }
  func.func @transform_4(%arg0: i32) -> (i32, i32, i32) {
    %c0_i32 = arith.constant 0 : i32
    %c0_i32_0 = arith.constant 0 : i32
    %c0_i32_1 = arith.constant 0 : i32
    %c0_i32_2 = arith.constant 0 : i32
    return %c0_i32, %c0_i32_0, %c0_i32_1 : i32, i32, i32
  }
  func.func @transform_5(%arg0: i32) -> (i32, i32, i32) {
    %c0_i32 = arith.constant 0 : i32
    %c0_i32_0 = arith.constant 0 : i32
    %c0_i32_1 = arith.constant 0 : i32
    %c0_i32_2 = arith.constant 0 : i32
    return %c0_i32, %c0_i32_0, %c0_i32_1 : i32, i32, i32
  }
  func.func @transform_6(%arg0: i32) -> (i32, i32, i32) {
    %c0_i32 = arith.constant 0 : i32
    %c0_i32_0 = arith.constant 0 : i32
    %c0_i32_1 = arith.constant 0 : i32
    %c0_i32_2 = arith.constant 0 : i32
    return %c0_i32, %c0_i32_0, %c0_i32_1 : i32, i32, i32
  }
  func.func @transform_7(%arg0: i32) -> (i32, i32, i32) {
    %c0_i32 = arith.constant 0 : i32
    %c0_i32_0 = arith.constant 0 : i32
    %c0_i32_1 = arith.constant 0 : i32
    %c0_i32_2 = arith.constant 0 : i32
    return %c0_i32, %c0_i32_0, %c0_i32_1 : i32, i32, i32
  }
  func.func @transform_8(%arg0: i32) -> (i32, i32, i32) {
    %c0_i32 = arith.constant 0 : i32
    %c0_i32_0 = arith.constant 0 : i32
    %c0_i32_1 = arith.constant 0 : i32
    %c0_i32_2 = arith.constant 0 : i32
    return %c0_i32, %c0_i32_0, %c0_i32_1 : i32, i32, i32
  }
  func.func @transform_9(%arg0: i32) -> (i32, i32) {
    %c0_i32 = arith.constant 0 : i32
    %c0_i32_0 = arith.constant 0 : i32
    %c0_i32_1 = arith.constant 0 : i32
    return %c0_i32, %c0_i32_0 : i32, i32
  }
  func.func @transform_10(%arg0: i32) -> (i32, i32) {
    %c0_i32 = arith.constant 0 : i32
    %c0_i32_0 = arith.constant 0 : i32
    %c0_i32_1 = arith.constant 0 : i32
    return %c0_i32, %c0_i32_0 : i32, i32
  }
  func.func @transform_11(%arg0: i32) -> (i32, i32) {
    %c0_i32 = arith.constant 0 : i32
    %c0_i32_0 = arith.constant 0 : i32
    %c0_i32_1 = arith.constant 0 : i32
    return %c0_i32, %c0_i32_0 : i32, i32
  }
  func.func @transform_12(%arg0: i32) -> (i32, i32) {
    %c0_i32 = arith.constant 0 : i32
    %c0_i32_0 = arith.constant 0 : i32
    %c0_i32_1 = arith.constant 0 : i32
    return %c0_i32, %c0_i32_0 : i32, i32
  }
  func.func @transform_13(%arg0: i32) -> (i32, i32) {
    %c0_i32 = arith.constant 0 : i32
    %c0_i32_0 = arith.constant 0 : i32
    %c0_i32_1 = arith.constant 0 : i32
    return %c0_i32, %c0_i32_0 : i32, i32
  }
  func.func @transform_14(%arg0: i32) -> (i32, i32) {
    %c0_i32 = arith.constant 0 : i32
    %c0_i32_0 = arith.constant 0 : i32
    %c0_i32_1 = arith.constant 0 : i32
    return %c0_i32, %c0_i32_0 : i32, i32
  }
  func.func @transform_15(%arg0: i32) -> (i32, i32) {
    %c0_i32 = arith.constant 0 : i32
    %c0_i32_0 = arith.constant 0 : i32
    %c0_i32_1 = arith.constant 0 : i32
    return %c0_i32, %c0_i32_0 : i32, i32
  }
  func.func @transform_16(%arg0: i32) -> (i32, i32) {
    %c0_i32 = arith.constant 0 : i32
    %c0_i32_0 = arith.constant 0 : i32
    %c0_i32_1 = arith.constant 0 : i32
    return %c0_i32, %c0_i32_0 : i32, i32
  }
  func.func @transform_17(%arg0: i32) -> (i32, i32) {
    %c0_i32 = arith.constant 0 : i32
    %c0_i32_0 = arith.constant 0 : i32
    %c0_i32_1 = arith.constant 0 : i32
    return %c0_i32, %c0_i32_0 : i32, i32
  }
  func.func @transform_18(%arg0: i32) -> (i32, i32, i32) {
    %c0_i32 = arith.constant 0 : i32
    %c0_i32_0 = arith.constant 0 : i32
    %c0_i32_1 = arith.constant 0 : i32
    return %arg0, %c0_i32, %c0_i32_0 : i32, i32, i32
  }
}

module attributes {stable_mosaic.version = 11 : i64} {
  func.func @_encoder_layer_kernel(%arg0: i32, %arg1: memref<1x8x32xf32, #tpu.memory_space<vmem>>, %arg2: memref<1x8x8xf32, #tpu.memory_space<vmem>>, %arg3: memref<4x32x8xf32, #tpu.memory_space<vmem>>, %arg4: memref<4x1x8xf32, #tpu.memory_space<vmem>>, %arg5: memref<4x32x8xf32, #tpu.memory_space<vmem>>, %arg6: memref<4x1x8xf32, #tpu.memory_space<vmem>>, %arg7: memref<4x32x8xf32, #tpu.memory_space<vmem>>, %arg8: memref<4x1x8xf32, #tpu.memory_space<vmem>>, %arg9: memref<4x8x32xf32, #tpu.memory_space<vmem>>, %arg10: memref<1x32xf32, #tpu.memory_space<vmem>>, %arg11: memref<32x64xf32, #tpu.memory_space<vmem>>, %arg12: memref<1x64xf32, #tpu.memory_space<vmem>>, %arg13: memref<64x32xf32, #tpu.memory_space<vmem>>, %arg14: memref<1x32xf32, #tpu.memory_space<vmem>>, %arg15: memref<1x32xf32, #tpu.memory_space<vmem>>, %arg16: memref<1x32xf32, #tpu.memory_space<vmem>>, %arg17: memref<1x32xf32, #tpu.memory_space<vmem>>, %arg18: memref<1x32xf32, #tpu.memory_space<vmem>>, %arg19: memref<1x8x32xf32, #tpu.memory_space<vmem>>) attributes {dimension_semantics = [#tpu.dimension_semantics<parallel>], iteration_bounds = array<i64: 2>, scalar_prefetch = 0 : i64, scratch_operands = 0 : i64, tpu.core_type = #tpu.core_type<tc>, window_params = [{transform_indices = @transform_0, window_bounds = array<i64: 1, 8, 32>}, {transform_indices = @transform_1, window_bounds = array<i64: 1, 8, 8>}, {pipeline_mode = #tpu.pipeline_mode<synchronous>, transform_indices = @transform_2, window_bounds = array<i64: 4, 32, 8>}, {pipeline_mode = #tpu.pipeline_mode<synchronous>, transform_indices = @transform_3, window_bounds = array<i64: 4, 1, 8>}, {pipeline_mode = #tpu.pipeline_mode<synchronous>, transform_indices = @transform_4, window_bounds = array<i64: 4, 32, 8>}, {pipeline_mode = #tpu.pipeline_mode<synchronous>, transform_indices = @transform_5, window_bounds = array<i64: 4, 1, 8>}, {pipeline_mode = #tpu.pipeline_mode<synchronous>, transform_indices = @transform_6, window_bounds = array<i64: 4, 32, 8>}, {pipeline_mode = #tpu.pipeline_mode<synchronous>, transform_indices = @transform_7, window_bounds = array<i64: 4, 1, 8>}, {pipeline_mode = #tpu.pipeline_mode<synchronous>, transform_indices = @transform_8, window_bounds = array<i64: 4, 8, 32>}, {pipeline_mode = #tpu.pipeline_mode<synchronous>, transform_indices = @transform_9, window_bounds = array<i64: 1, 32>}, {pipeline_mode = #tpu.pipeline_mode<synchronous>, transform_indices = @transform_10, window_bounds = array<i64: 32, 64>}, {pipeline_mode = #tpu.pipeline_mode<synchronous>, transform_indices = @transform_11, window_bounds = array<i64: 1, 64>}, {pipeline_mode = #tpu.pipeline_mode<synchronous>, transform_indices = @transform_12, window_bounds = array<i64: 64, 32>}, {pipeline_mode = #tpu.pipeline_mode<synchronous>, transform_indices = @transform_13, window_bounds = array<i64: 1, 32>}, {pipeline_mode = #tpu.pipeline_mode<synchronous>, transform_indices = @transform_14, window_bounds = array<i64: 1, 32>}, {pipeline_mode = #tpu.pipeline_mode<synchronous>, transform_indices = @transform_15, window_bounds = array<i64: 1, 32>}, {pipeline_mode = #tpu.pipeline_mode<synchronous>, transform_indices = @transform_16, window_bounds = array<i64: 1, 32>}, {pipeline_mode = #tpu.pipeline_mode<synchronous>, transform_indices = @transform_17, window_bounds = array<i64: 1, 32>}, {transform_indices = @transform_18, window_bounds = array<i64: 1, 8, 32>}]} {
    %c0 = arith.constant 0 : index
    %c0_0 = arith.constant 0 : index
    %c0_1 = arith.constant 0 : index
    %0 = vector.load %arg1[%c0, %c0_0, %c0_1] : memref<1x8x32xf32, #tpu.memory_space<vmem>>, vector<1x8x32xf32>
    %1 = vector.shape_cast %0 : vector<1x8x32xf32> to vector<8x32xf32>
    %c0_2 = arith.constant 0 : index
    %c0_3 = arith.constant 0 : index
    %c0_4 = arith.constant 0 : index
    %2 = vector.load %arg2[%c0_2, %c0_3, %c0_4] : memref<1x8x8xf32, #tpu.memory_space<vmem>>, vector<1x8x8xf32>
    %3 = vector.shape_cast %2 : vector<1x8x8xf32> to vector<8x8xf32>
    %cst = arith.constant 0.000000e+00 : f32
    %4 = vector.broadcast %cst : f32 to vector<8x32xf32>
    %c0_5 = arith.constant 0 : index
    %c0_6 = arith.constant 0 : index
    %c0_7 = arith.constant 0 : index
    %5 = vector.load %arg3[%c0_5, %c0_6, %c0_7] : memref<4x32x8xf32, #tpu.memory_space<vmem>>, vector<1x32x8xf32>
    %6 = vector.shape_cast %5 : vector<1x32x8xf32> to vector<32x8xf32>
    %cst_8 = arith.constant dense<0.000000e+00> : vector<8x8xf32>
    %7 = tpu.matmul %1, %6, %cst_8 {dimension_numbers = #tpu.dot_dimension_numbers<[1], [0], [0], [1], [0, 0, 1, 1], [], []>} : vector<8x32xf32>, vector<32x8xf32>, vector<8x8xf32> -> vector<8x8xf32>
    %c0_9 = arith.constant 0 : index
    %c0_10 = arith.constant 0 : index
    %c0_11 = arith.constant 0 : index
    %8 = vector.load %arg4[%c0_9, %c0_10, %c0_11] : memref<4x1x8xf32, #tpu.memory_space<vmem>>, vector<1x1x8xf32>
    %9 = vector.shape_cast %8 : vector<1x1x8xf32> to vector<1x8xf32>
    %10 = vector.broadcast %9 : vector<1x8xf32> to vector<8x8xf32>
    %11 = arith.addf %7, %10 : vector<8x8xf32>
    %c0_12 = arith.constant 0 : index
    %c0_13 = arith.constant 0 : index
    %c0_14 = arith.constant 0 : index
    %12 = vector.load %arg5[%c0_12, %c0_13, %c0_14] : memref<4x32x8xf32, #tpu.memory_space<vmem>>, vector<1x32x8xf32>
    %13 = vector.shape_cast %12 : vector<1x32x8xf32> to vector<32x8xf32>
    %cst_15 = arith.constant dense<0.000000e+00> : vector<8x8xf32>
    %14 = tpu.matmul %1, %13, %cst_15 {dimension_numbers = #tpu.dot_dimension_numbers<[1], [0], [0], [1], [0, 0, 1, 1], [], []>} : vector<8x32xf32>, vector<32x8xf32>, vector<8x8xf32> -> vector<8x8xf32>
    %c0_16 = arith.constant 0 : index
    %c0_17 = arith.constant 0 : index
    %c0_18 = arith.constant 0 : index
    %15 = vector.load %arg6[%c0_16, %c0_17, %c0_18] : memref<4x1x8xf32, #tpu.memory_space<vmem>>, vector<1x1x8xf32>
    %16 = vector.shape_cast %15 : vector<1x1x8xf32> to vector<1x8xf32>
    %17 = vector.broadcast %16 : vector<1x8xf32> to vector<8x8xf32>
    %18 = arith.addf %14, %17 : vector<8x8xf32>
    %c0_19 = arith.constant 0 : index
    %c0_20 = arith.constant 0 : index
    %c0_21 = arith.constant 0 : index
    %19 = vector.load %arg7[%c0_19, %c0_20, %c0_21] : memref<4x32x8xf32, #tpu.memory_space<vmem>>, vector<1x32x8xf32>
    %20 = vector.shape_cast %19 : vector<1x32x8xf32> to vector<32x8xf32>
    %cst_22 = arith.constant dense<0.000000e+00> : vector<8x8xf32>
    %21 = tpu.matmul %1, %20, %cst_22 {dimension_numbers = #tpu.dot_dimension_numbers<[1], [0], [0], [1], [0, 0, 1, 1], [], []>} : vector<8x32xf32>, vector<32x8xf32>, vector<8x8xf32> -> vector<8x8xf32>
    %c0_23 = arith.constant 0 : index
    %c0_24 = arith.constant 0 : index
    %c0_25 = arith.constant 0 : index
    %22 = vector.load %arg8[%c0_23, %c0_24, %c0_25] : memref<4x1x8xf32, #tpu.memory_space<vmem>>, vector<1x1x8xf32>
    %23 = vector.shape_cast %22 : vector<1x1x8xf32> to vector<1x8xf32>
    %24 = vector.broadcast %23 : vector<1x8xf32> to vector<8x8xf32>
    %25 = arith.addf %21, %24 : vector<8x8xf32>
    %cst_26 = arith.constant dense<0.000000e+00> : vector<8x8xf32>
    %26 = tpu.matmul %11, %18, %cst_26 {dimension_numbers = #tpu.dot_dimension_numbers<[1], [1], [0], [0], [0, 0, 1, 0], [], []>} : vector<8x8xf32>, vector<8x8xf32>, vector<8x8xf32> -> vector<8x8xf32>
    %cst_27 = arith.constant 0.353553385 : f32
    %27 = vector.broadcast %cst_27 : f32 to vector<8x8xf32>
    %28 = arith.mulf %26, %27 : vector<8x8xf32>
    %cst_28 = arith.constant 0.000000e+00 : f32
    %29 = vector.broadcast %cst_28 : f32 to vector<8x8xf32>
    %30 = arith.cmpf one, %3, %29 : vector<8x8xf32>
    %cst_29 = arith.constant -1.000000e+09 : f32
    %31 = vector.broadcast %cst_29 : f32 to vector<8x8xf32>
    %32 = arith.select %30, %28, %31 : vector<8x8xi1>, vector<8x8xf32>
    %cst_30 = arith.constant dense<0xFF800000> : vector<8xf32>
    %33 = vector.multi_reduction <maximumf>, %32, %cst_30 [1] : vector<8x8xf32> to vector<8xf32>
    %34 = vector.shape_cast %33 : vector<8xf32> to vector<8x1xf32>
    %35 = vector.broadcast %34 : vector<8x1xf32> to vector<8x8xf32>
    %36 = arith.subf %32, %35 : vector<8x8xf32>
    %37 = math.exp %36 : vector<8x8xf32>
    %cst_31 = arith.constant dense<0.000000e+00> : vector<8xf32>
    %38 = vector.multi_reduction <add>, %37, %cst_31 [1] : vector<8x8xf32> to vector<8xf32>
    %39 = vector.shape_cast %38 : vector<8xf32> to vector<8x1xf32>
    %40 = vector.broadcast %39 : vector<8x1xf32> to vector<8x8xf32>
    %41 = arith.divf %37, %40 : vector<8x8xf32>
    %cst_32 = arith.constant dense<0.000000e+00> : vector<8x8xf32>
    %42 = tpu.matmul %41, %25, %cst_32 {dimension_numbers = #tpu.dot_dimension_numbers<[1], [0], [0], [1], [0, 0, 1, 1], [], []>} : vector<8x8xf32>, vector<8x8xf32>, vector<8x8xf32> -> vector<8x8xf32>
    %c0_33 = arith.constant 0 : index
    %c0_34 = arith.constant 0 : index
    %c0_35 = arith.constant 0 : index
    %43 = vector.load %arg9[%c0_33, %c0_34, %c0_35] : memref<4x8x32xf32, #tpu.memory_space<vmem>>, vector<1x8x32xf32>
    %44 = vector.shape_cast %43 : vector<1x8x32xf32> to vector<8x32xf32>
    %cst_36 = arith.constant dense<0.000000e+00> : vector<8x32xf32>
    %45 = tpu.matmul %42, %44, %cst_36 {dimension_numbers = #tpu.dot_dimension_numbers<[1], [0], [0], [1], [0, 0, 1, 1], [], []>} : vector<8x8xf32>, vector<8x32xf32>, vector<8x32xf32> -> vector<8x32xf32>
    %46 = arith.addf %4, %45 : vector<8x32xf32>
    %c1 = arith.constant 1 : index
    %c0_37 = arith.constant 0 : index
    %c0_38 = arith.constant 0 : index
    %47 = vector.load %arg3[%c1, %c0_37, %c0_38] : memref<4x32x8xf32, #tpu.memory_space<vmem>>, vector<1x32x8xf32>
    %48 = vector.shape_cast %47 : vector<1x32x8xf32> to vector<32x8xf32>
    %cst_39 = arith.constant dense<0.000000e+00> : vector<8x8xf32>
    %49 = tpu.matmul %1, %48, %cst_39 {dimension_numbers = #tpu.dot_dimension_numbers<[1], [0], [0], [1], [0, 0, 1, 1], [], []>} : vector<8x32xf32>, vector<32x8xf32>, vector<8x8xf32> -> vector<8x8xf32>
    %c1_40 = arith.constant 1 : index
    %c0_41 = arith.constant 0 : index
    %c0_42 = arith.constant 0 : index
    %50 = vector.load %arg4[%c1_40, %c0_41, %c0_42] : memref<4x1x8xf32, #tpu.memory_space<vmem>>, vector<1x1x8xf32>
    %51 = vector.shape_cast %50 : vector<1x1x8xf32> to vector<1x8xf32>
    %52 = vector.broadcast %51 : vector<1x8xf32> to vector<8x8xf32>
    %53 = arith.addf %49, %52 : vector<8x8xf32>
    %c1_43 = arith.constant 1 : index
    %c0_44 = arith.constant 0 : index
    %c0_45 = arith.constant 0 : index
    %54 = vector.load %arg5[%c1_43, %c0_44, %c0_45] : memref<4x32x8xf32, #tpu.memory_space<vmem>>, vector<1x32x8xf32>
    %55 = vector.shape_cast %54 : vector<1x32x8xf32> to vector<32x8xf32>
    %cst_46 = arith.constant dense<0.000000e+00> : vector<8x8xf32>
    %56 = tpu.matmul %1, %55, %cst_46 {dimension_numbers = #tpu.dot_dimension_numbers<[1], [0], [0], [1], [0, 0, 1, 1], [], []>} : vector<8x32xf32>, vector<32x8xf32>, vector<8x8xf32> -> vector<8x8xf32>
    %c1_47 = arith.constant 1 : index
    %c0_48 = arith.constant 0 : index
    %c0_49 = arith.constant 0 : index
    %57 = vector.load %arg6[%c1_47, %c0_48, %c0_49] : memref<4x1x8xf32, #tpu.memory_space<vmem>>, vector<1x1x8xf32>
    %58 = vector.shape_cast %57 : vector<1x1x8xf32> to vector<1x8xf32>
    %59 = vector.broadcast %58 : vector<1x8xf32> to vector<8x8xf32>
    %60 = arith.addf %56, %59 : vector<8x8xf32>
    %c1_50 = arith.constant 1 : index
    %c0_51 = arith.constant 0 : index
    %c0_52 = arith.constant 0 : index
    %61 = vector.load %arg7[%c1_50, %c0_51, %c0_52] : memref<4x32x8xf32, #tpu.memory_space<vmem>>, vector<1x32x8xf32>
    %62 = vector.shape_cast %61 : vector<1x32x8xf32> to vector<32x8xf32>
    %cst_53 = arith.constant dense<0.000000e+00> : vector<8x8xf32>
    %63 = tpu.matmul %1, %62, %cst_53 {dimension_numbers = #tpu.dot_dimension_numbers<[1], [0], [0], [1], [0, 0, 1, 1], [], []>} : vector<8x32xf32>, vector<32x8xf32>, vector<8x8xf32> -> vector<8x8xf32>
    %c1_54 = arith.constant 1 : index
    %c0_55 = arith.constant 0 : index
    %c0_56 = arith.constant 0 : index
    %64 = vector.load %arg8[%c1_54, %c0_55, %c0_56] : memref<4x1x8xf32, #tpu.memory_space<vmem>>, vector<1x1x8xf32>
    %65 = vector.shape_cast %64 : vector<1x1x8xf32> to vector<1x8xf32>
    %66 = vector.broadcast %65 : vector<1x8xf32> to vector<8x8xf32>
    %67 = arith.addf %63, %66 : vector<8x8xf32>
    %cst_57 = arith.constant dense<0.000000e+00> : vector<8x8xf32>
    %68 = tpu.matmul %53, %60, %cst_57 {dimension_numbers = #tpu.dot_dimension_numbers<[1], [1], [0], [0], [0, 0, 1, 0], [], []>} : vector<8x8xf32>, vector<8x8xf32>, vector<8x8xf32> -> vector<8x8xf32>
    %cst_58 = arith.constant 0.353553385 : f32
    %69 = vector.broadcast %cst_58 : f32 to vector<8x8xf32>
    %70 = arith.mulf %68, %69 : vector<8x8xf32>
    %cst_59 = arith.constant 0.000000e+00 : f32
    %71 = vector.broadcast %cst_59 : f32 to vector<8x8xf32>
    %72 = arith.cmpf one, %3, %71 : vector<8x8xf32>
    %cst_60 = arith.constant -1.000000e+09 : f32
    %73 = vector.broadcast %cst_60 : f32 to vector<8x8xf32>
    %74 = arith.select %72, %70, %73 : vector<8x8xi1>, vector<8x8xf32>
    %cst_61 = arith.constant dense<0xFF800000> : vector<8xf32>
    %75 = vector.multi_reduction <maximumf>, %74, %cst_61 [1] : vector<8x8xf32> to vector<8xf32>
    %76 = vector.shape_cast %75 : vector<8xf32> to vector<8x1xf32>
    %77 = vector.broadcast %76 : vector<8x1xf32> to vector<8x8xf32>
    %78 = arith.subf %74, %77 : vector<8x8xf32>
    %79 = math.exp %78 : vector<8x8xf32>
    %cst_62 = arith.constant dense<0.000000e+00> : vector<8xf32>
    %80 = vector.multi_reduction <add>, %79, %cst_62 [1] : vector<8x8xf32> to vector<8xf32>
    %81 = vector.shape_cast %80 : vector<8xf32> to vector<8x1xf32>
    %82 = vector.broadcast %81 : vector<8x1xf32> to vector<8x8xf32>
    %83 = arith.divf %79, %82 : vector<8x8xf32>
    %cst_63 = arith.constant dense<0.000000e+00> : vector<8x8xf32>
    %84 = tpu.matmul %83, %67, %cst_63 {dimension_numbers = #tpu.dot_dimension_numbers<[1], [0], [0], [1], [0, 0, 1, 1], [], []>} : vector<8x8xf32>, vector<8x8xf32>, vector<8x8xf32> -> vector<8x8xf32>
    %c1_64 = arith.constant 1 : index
    %c0_65 = arith.constant 0 : index
    %c0_66 = arith.constant 0 : index
    %85 = vector.load %arg9[%c1_64, %c0_65, %c0_66] : memref<4x8x32xf32, #tpu.memory_space<vmem>>, vector<1x8x32xf32>
    %86 = vector.shape_cast %85 : vector<1x8x32xf32> to vector<8x32xf32>
    %cst_67 = arith.constant dense<0.000000e+00> : vector<8x32xf32>
    %87 = tpu.matmul %84, %86, %cst_67 {dimension_numbers = #tpu.dot_dimension_numbers<[1], [0], [0], [1], [0, 0, 1, 1], [], []>} : vector<8x8xf32>, vector<8x32xf32>, vector<8x32xf32> -> vector<8x32xf32>
    %88 = arith.addf %46, %87 : vector<8x32xf32>
    %c2 = arith.constant 2 : index
    %c0_68 = arith.constant 0 : index
    %c0_69 = arith.constant 0 : index
    %89 = vector.load %arg3[%c2, %c0_68, %c0_69] : memref<4x32x8xf32, #tpu.memory_space<vmem>>, vector<1x32x8xf32>
    %90 = vector.shape_cast %89 : vector<1x32x8xf32> to vector<32x8xf32>
    %cst_70 = arith.constant dense<0.000000e+00> : vector<8x8xf32>
    %91 = tpu.matmul %1, %90, %cst_70 {dimension_numbers = #tpu.dot_dimension_numbers<[1], [0], [0], [1], [0, 0, 1, 1], [], []>} : vector<8x32xf32>, vector<32x8xf32>, vector<8x8xf32> -> vector<8x8xf32>
    %c2_71 = arith.constant 2 : index
    %c0_72 = arith.constant 0 : index
    %c0_73 = arith.constant 0 : index
    %92 = vector.load %arg4[%c2_71, %c0_72, %c0_73] : memref<4x1x8xf32, #tpu.memory_space<vmem>>, vector<1x1x8xf32>
    %93 = vector.shape_cast %92 : vector<1x1x8xf32> to vector<1x8xf32>
    %94 = vector.broadcast %93 : vector<1x8xf32> to vector<8x8xf32>
    %95 = arith.addf %91, %94 : vector<8x8xf32>
    %c2_74 = arith.constant 2 : index
    %c0_75 = arith.constant 0 : index
    %c0_76 = arith.constant 0 : index
    %96 = vector.load %arg5[%c2_74, %c0_75, %c0_76] : memref<4x32x8xf32, #tpu.memory_space<vmem>>, vector<1x32x8xf32>
    %97 = vector.shape_cast %96 : vector<1x32x8xf32> to vector<32x8xf32>
    %cst_77 = arith.constant dense<0.000000e+00> : vector<8x8xf32>
    %98 = tpu.matmul %1, %97, %cst_77 {dimension_numbers = #tpu.dot_dimension_numbers<[1], [0], [0], [1], [0, 0, 1, 1], [], []>} : vector<8x32xf32>, vector<32x8xf32>, vector<8x8xf32> -> vector<8x8xf32>
    %c2_78 = arith.constant 2 : index
    %c0_79 = arith.constant 0 : index
    %c0_80 = arith.constant 0 : index
    %99 = vector.load %arg6[%c2_78, %c0_79, %c0_80] : memref<4x1x8xf32, #tpu.memory_space<vmem>>, vector<1x1x8xf32>
    %100 = vector.shape_cast %99 : vector<1x1x8xf32> to vector<1x8xf32>
    %101 = vector.broadcast %100 : vector<1x8xf32> to vector<8x8xf32>
    %102 = arith.addf %98, %101 : vector<8x8xf32>
    %c2_81 = arith.constant 2 : index
    %c0_82 = arith.constant 0 : index
    %c0_83 = arith.constant 0 : index
    %103 = vector.load %arg7[%c2_81, %c0_82, %c0_83] : memref<4x32x8xf32, #tpu.memory_space<vmem>>, vector<1x32x8xf32>
    %104 = vector.shape_cast %103 : vector<1x32x8xf32> to vector<32x8xf32>
    %cst_84 = arith.constant dense<0.000000e+00> : vector<8x8xf32>
    %105 = tpu.matmul %1, %104, %cst_84 {dimension_numbers = #tpu.dot_dimension_numbers<[1], [0], [0], [1], [0, 0, 1, 1], [], []>} : vector<8x32xf32>, vector<32x8xf32>, vector<8x8xf32> -> vector<8x8xf32>
    %c2_85 = arith.constant 2 : index
    %c0_86 = arith.constant 0 : index
    %c0_87 = arith.constant 0 : index
    %106 = vector.load %arg8[%c2_85, %c0_86, %c0_87] : memref<4x1x8xf32, #tpu.memory_space<vmem>>, vector<1x1x8xf32>
    %107 = vector.shape_cast %106 : vector<1x1x8xf32> to vector<1x8xf32>
    %108 = vector.broadcast %107 : vector<1x8xf32> to vector<8x8xf32>
    %109 = arith.addf %105, %108 : vector<8x8xf32>
    %cst_88 = arith.constant dense<0.000000e+00> : vector<8x8xf32>
    %110 = tpu.matmul %95, %102, %cst_88 {dimension_numbers = #tpu.dot_dimension_numbers<[1], [1], [0], [0], [0, 0, 1, 0], [], []>} : vector<8x8xf32>, vector<8x8xf32>, vector<8x8xf32> -> vector<8x8xf32>
    %cst_89 = arith.constant 0.353553385 : f32
    %111 = vector.broadcast %cst_89 : f32 to vector<8x8xf32>
    %112 = arith.mulf %110, %111 : vector<8x8xf32>
    %cst_90 = arith.constant 0.000000e+00 : f32
    %113 = vector.broadcast %cst_90 : f32 to vector<8x8xf32>
    %114 = arith.cmpf one, %3, %113 : vector<8x8xf32>
    %cst_91 = arith.constant -1.000000e+09 : f32
    %115 = vector.broadcast %cst_91 : f32 to vector<8x8xf32>
    %116 = arith.select %114, %112, %115 : vector<8x8xi1>, vector<8x8xf32>
    %cst_92 = arith.constant dense<0xFF800000> : vector<8xf32>
    %117 = vector.multi_reduction <maximumf>, %116, %cst_92 [1] : vector<8x8xf32> to vector<8xf32>
    %118 = vector.shape_cast %117 : vector<8xf32> to vector<8x1xf32>
    %119 = vector.broadcast %118 : vector<8x1xf32> to vector<8x8xf32>
    %120 = arith.subf %116, %119 : vector<8x8xf32>
    %121 = math.exp %120 : vector<8x8xf32>
    %cst_93 = arith.constant dense<0.000000e+00> : vector<8xf32>
    %122 = vector.multi_reduction <add>, %121, %cst_93 [1] : vector<8x8xf32> to vector<8xf32>
    %123 = vector.shape_cast %122 : vector<8xf32> to vector<8x1xf32>
    %124 = vector.broadcast %123 : vector<8x1xf32> to vector<8x8xf32>
    %125 = arith.divf %121, %124 : vector<8x8xf32>
    %cst_94 = arith.constant dense<0.000000e+00> : vector<8x8xf32>
    %126 = tpu.matmul %125, %109, %cst_94 {dimension_numbers = #tpu.dot_dimension_numbers<[1], [0], [0], [1], [0, 0, 1, 1], [], []>} : vector<8x8xf32>, vector<8x8xf32>, vector<8x8xf32> -> vector<8x8xf32>
    %c2_95 = arith.constant 2 : index
    %c0_96 = arith.constant 0 : index
    %c0_97 = arith.constant 0 : index
    %127 = vector.load %arg9[%c2_95, %c0_96, %c0_97] : memref<4x8x32xf32, #tpu.memory_space<vmem>>, vector<1x8x32xf32>
    %128 = vector.shape_cast %127 : vector<1x8x32xf32> to vector<8x32xf32>
    %cst_98 = arith.constant dense<0.000000e+00> : vector<8x32xf32>
    %129 = tpu.matmul %126, %128, %cst_98 {dimension_numbers = #tpu.dot_dimension_numbers<[1], [0], [0], [1], [0, 0, 1, 1], [], []>} : vector<8x8xf32>, vector<8x32xf32>, vector<8x32xf32> -> vector<8x32xf32>
    %130 = arith.addf %88, %129 : vector<8x32xf32>
    %c3 = arith.constant 3 : index
    %c0_99 = arith.constant 0 : index
    %c0_100 = arith.constant 0 : index
    %131 = vector.load %arg3[%c3, %c0_99, %c0_100] : memref<4x32x8xf32, #tpu.memory_space<vmem>>, vector<1x32x8xf32>
    %132 = vector.shape_cast %131 : vector<1x32x8xf32> to vector<32x8xf32>
    %cst_101 = arith.constant dense<0.000000e+00> : vector<8x8xf32>
    %133 = tpu.matmul %1, %132, %cst_101 {dimension_numbers = #tpu.dot_dimension_numbers<[1], [0], [0], [1], [0, 0, 1, 1], [], []>} : vector<8x32xf32>, vector<32x8xf32>, vector<8x8xf32> -> vector<8x8xf32>
    %c3_102 = arith.constant 3 : index
    %c0_103 = arith.constant 0 : index
    %c0_104 = arith.constant 0 : index
    %134 = vector.load %arg4[%c3_102, %c0_103, %c0_104] : memref<4x1x8xf32, #tpu.memory_space<vmem>>, vector<1x1x8xf32>
    %135 = vector.shape_cast %134 : vector<1x1x8xf32> to vector<1x8xf32>
    %136 = vector.broadcast %135 : vector<1x8xf32> to vector<8x8xf32>
    %137 = arith.addf %133, %136 : vector<8x8xf32>
    %c3_105 = arith.constant 3 : index
    %c0_106 = arith.constant 0 : index
    %c0_107 = arith.constant 0 : index
    %138 = vector.load %arg5[%c3_105, %c0_106, %c0_107] : memref<4x32x8xf32, #tpu.memory_space<vmem>>, vector<1x32x8xf32>
    %139 = vector.shape_cast %138 : vector<1x32x8xf32> to vector<32x8xf32>
    %cst_108 = arith.constant dense<0.000000e+00> : vector<8x8xf32>
    %140 = tpu.matmul %1, %139, %cst_108 {dimension_numbers = #tpu.dot_dimension_numbers<[1], [0], [0], [1], [0, 0, 1, 1], [], []>} : vector<8x32xf32>, vector<32x8xf32>, vector<8x8xf32> -> vector<8x8xf32>
    %c3_109 = arith.constant 3 : index
    %c0_110 = arith.constant 0 : index
    %c0_111 = arith.constant 0 : index
    %141 = vector.load %arg6[%c3_109, %c0_110, %c0_111] : memref<4x1x8xf32, #tpu.memory_space<vmem>>, vector<1x1x8xf32>
    %142 = vector.shape_cast %141 : vector<1x1x8xf32> to vector<1x8xf32>
    %143 = vector.broadcast %142 : vector<1x8xf32> to vector<8x8xf32>
    %144 = arith.addf %140, %143 : vector<8x8xf32>
    %c3_112 = arith.constant 3 : index
    %c0_113 = arith.constant 0 : index
    %c0_114 = arith.constant 0 : index
    %145 = vector.load %arg7[%c3_112, %c0_113, %c0_114] : memref<4x32x8xf32, #tpu.memory_space<vmem>>, vector<1x32x8xf32>
    %146 = vector.shape_cast %145 : vector<1x32x8xf32> to vector<32x8xf32>
    %cst_115 = arith.constant dense<0.000000e+00> : vector<8x8xf32>
    %147 = tpu.matmul %1, %146, %cst_115 {dimension_numbers = #tpu.dot_dimension_numbers<[1], [0], [0], [1], [0, 0, 1, 1], [], []>} : vector<8x32xf32>, vector<32x8xf32>, vector<8x8xf32> -> vector<8x8xf32>
    %c3_116 = arith.constant 3 : index
    %c0_117 = arith.constant 0 : index
    %c0_118 = arith.constant 0 : index
    %148 = vector.load %arg8[%c3_116, %c0_117, %c0_118] : memref<4x1x8xf32, #tpu.memory_space<vmem>>, vector<1x1x8xf32>
    %149 = vector.shape_cast %148 : vector<1x1x8xf32> to vector<1x8xf32>
    %150 = vector.broadcast %149 : vector<1x8xf32> to vector<8x8xf32>
    %151 = arith.addf %147, %150 : vector<8x8xf32>
    %cst_119 = arith.constant dense<0.000000e+00> : vector<8x8xf32>
    %152 = tpu.matmul %137, %144, %cst_119 {dimension_numbers = #tpu.dot_dimension_numbers<[1], [1], [0], [0], [0, 0, 1, 0], [], []>} : vector<8x8xf32>, vector<8x8xf32>, vector<8x8xf32> -> vector<8x8xf32>
    %cst_120 = arith.constant 0.353553385 : f32
    %153 = vector.broadcast %cst_120 : f32 to vector<8x8xf32>
    %154 = arith.mulf %152, %153 : vector<8x8xf32>
    %cst_121 = arith.constant 0.000000e+00 : f32
    %155 = vector.broadcast %cst_121 : f32 to vector<8x8xf32>
    %156 = arith.cmpf one, %3, %155 : vector<8x8xf32>
    %cst_122 = arith.constant -1.000000e+09 : f32
    %157 = vector.broadcast %cst_122 : f32 to vector<8x8xf32>
    %158 = arith.select %156, %154, %157 : vector<8x8xi1>, vector<8x8xf32>
    %cst_123 = arith.constant dense<0xFF800000> : vector<8xf32>
    %159 = vector.multi_reduction <maximumf>, %158, %cst_123 [1] : vector<8x8xf32> to vector<8xf32>
    %160 = vector.shape_cast %159 : vector<8xf32> to vector<8x1xf32>
    %161 = vector.broadcast %160 : vector<8x1xf32> to vector<8x8xf32>
    %162 = arith.subf %158, %161 : vector<8x8xf32>
    %163 = math.exp %162 : vector<8x8xf32>
    %cst_124 = arith.constant dense<0.000000e+00> : vector<8xf32>
    %164 = vector.multi_reduction <add>, %163, %cst_124 [1] : vector<8x8xf32> to vector<8xf32>
    %165 = vector.shape_cast %164 : vector<8xf32> to vector<8x1xf32>
    %166 = vector.broadcast %165 : vector<8x1xf32> to vector<8x8xf32>
    %167 = arith.divf %163, %166 : vector<8x8xf32>
    %cst_125 = arith.constant dense<0.000000e+00> : vector<8x8xf32>
    %168 = tpu.matmul %167, %151, %cst_125 {dimension_numbers = #tpu.dot_dimension_numbers<[1], [0], [0], [1], [0, 0, 1, 1], [], []>} : vector<8x8xf32>, vector<8x8xf32>, vector<8x8xf32> -> vector<8x8xf32>
    %c3_126 = arith.constant 3 : index
    %c0_127 = arith.constant 0 : index
    %c0_128 = arith.constant 0 : index
    %169 = vector.load %arg9[%c3_126, %c0_127, %c0_128] : memref<4x8x32xf32, #tpu.memory_space<vmem>>, vector<1x8x32xf32>
    %170 = vector.shape_cast %169 : vector<1x8x32xf32> to vector<8x32xf32>
    %cst_129 = arith.constant dense<0.000000e+00> : vector<8x32xf32>
    %171 = tpu.matmul %168, %170, %cst_129 {dimension_numbers = #tpu.dot_dimension_numbers<[1], [0], [0], [1], [0, 0, 1, 1], [], []>} : vector<8x8xf32>, vector<8x32xf32>, vector<8x32xf32> -> vector<8x32xf32>
    %172 = arith.addf %130, %171 : vector<8x32xf32>
    %c0_130 = arith.constant 0 : index
    %c0_131 = arith.constant 0 : index
    %173 = vector.load %arg10[%c0_130, %c0_131] : memref<1x32xf32, #tpu.memory_space<vmem>>, vector<1x32xf32>
    %174 = vector.broadcast %173 : vector<1x32xf32> to vector<8x32xf32>
    %175 = arith.addf %172, %174 : vector<8x32xf32>
    %176 = arith.addf %1, %175 : vector<8x32xf32>
    %cst_132 = arith.constant dense<0.000000e+00> : vector<8xf32>
    %177 = vector.multi_reduction <add>, %176, %cst_132 [1] : vector<8x32xf32> to vector<8xf32>
    %178 = vector.shape_cast %177 : vector<8xf32> to vector<8x1xf32>
    %cst_133 = arith.constant 3.200000e+01 : f32
    %179 = vector.broadcast %cst_133 : f32 to vector<8x1xf32>
    %180 = arith.divf %178, %179 : vector<8x1xf32>
    %181 = vector.broadcast %180 : vector<8x1xf32> to vector<8x32xf32>
    %182 = arith.subf %176, %181 : vector<8x32xf32>
    %183 = arith.mulf %182, %182 : vector<8x32xf32>
    %cst_134 = arith.constant dense<0.000000e+00> : vector<8xf32>
    %184 = vector.multi_reduction <add>, %183, %cst_134 [1] : vector<8x32xf32> to vector<8xf32>
    %185 = vector.shape_cast %184 : vector<8xf32> to vector<8x1xf32>
    %cst_135 = arith.constant 3.200000e+01 : f32
    %186 = vector.broadcast %cst_135 : f32 to vector<8x1xf32>
    %187 = arith.divf %185, %186 : vector<8x1xf32>
    %188 = vector.broadcast %180 : vector<8x1xf32> to vector<8x32xf32>
    %189 = arith.subf %176, %188 : vector<8x32xf32>
    %cst_136 = arith.constant 9.99999974E-6 : f32
    %190 = vector.broadcast %cst_136 : f32 to vector<8x1xf32>
    %191 = arith.addf %187, %190 : vector<8x1xf32>
    %192 = math.sqrt %191 : vector<8x1xf32>
    %193 = vector.broadcast %192 : vector<8x1xf32> to vector<8x32xf32>
    %194 = arith.divf %189, %193 : vector<8x32xf32>
    %c0_137 = arith.constant 0 : index
    %c0_138 = arith.constant 0 : index
    %195 = vector.load %arg15[%c0_137, %c0_138] : memref<1x32xf32, #tpu.memory_space<vmem>>, vector<1x32xf32>
    %196 = vector.broadcast %195 : vector<1x32xf32> to vector<8x32xf32>
    %197 = arith.mulf %194, %196 : vector<8x32xf32>
    %c0_139 = arith.constant 0 : index
    %c0_140 = arith.constant 0 : index
    %198 = vector.load %arg16[%c0_139, %c0_140] : memref<1x32xf32, #tpu.memory_space<vmem>>, vector<1x32xf32>
    %199 = vector.broadcast %198 : vector<1x32xf32> to vector<8x32xf32>
    %200 = arith.addf %197, %199 : vector<8x32xf32>
    %c0_141 = arith.constant 0 : index
    %c0_142 = arith.constant 0 : index
    %201 = vector.load %arg11[%c0_141, %c0_142] : memref<32x64xf32, #tpu.memory_space<vmem>>, vector<32x64xf32>
    %cst_143 = arith.constant dense<0.000000e+00> : vector<8x64xf32>
    %202 = tpu.matmul %200, %201, %cst_143 {dimension_numbers = #tpu.dot_dimension_numbers<[1], [0], [0], [1], [0, 0, 1, 1], [], []>} : vector<8x32xf32>, vector<32x64xf32>, vector<8x64xf32> -> vector<8x64xf32>
    %c0_144 = arith.constant 0 : index
    %c0_145 = arith.constant 0 : index
    %203 = vector.load %arg12[%c0_144, %c0_145] : memref<1x64xf32, #tpu.memory_space<vmem>>, vector<1x64xf32>
    %204 = vector.broadcast %203 : vector<1x64xf32> to vector<8x64xf32>
    %205 = arith.addf %202, %204 : vector<8x64xf32>
    %cst_146 = arith.constant 0.000000e+00 : f32
    %206 = vector.broadcast %cst_146 : f32 to vector<8x64xf32>
    %207 = arith.maximumf %205, %206 : vector<8x64xf32>
    %c0_147 = arith.constant 0 : index
    %c0_148 = arith.constant 0 : index
    %208 = vector.load %arg13[%c0_147, %c0_148] : memref<64x32xf32, #tpu.memory_space<vmem>>, vector<64x32xf32>
    %cst_149 = arith.constant dense<0.000000e+00> : vector<8x32xf32>
    %209 = tpu.matmul %207, %208, %cst_149 {dimension_numbers = #tpu.dot_dimension_numbers<[1], [0], [0], [1], [0, 0, 1, 1], [], []>} : vector<8x64xf32>, vector<64x32xf32>, vector<8x32xf32> -> vector<8x32xf32>
    %c0_150 = arith.constant 0 : index
    %c0_151 = arith.constant 0 : index
    %210 = vector.load %arg14[%c0_150, %c0_151] : memref<1x32xf32, #tpu.memory_space<vmem>>, vector<1x32xf32>
    %211 = vector.broadcast %210 : vector<1x32xf32> to vector<8x32xf32>
    %212 = arith.addf %209, %211 : vector<8x32xf32>
    %213 = arith.addf %200, %212 : vector<8x32xf32>
    %cst_152 = arith.constant dense<0.000000e+00> : vector<8xf32>
    %214 = vector.multi_reduction <add>, %213, %cst_152 [1] : vector<8x32xf32> to vector<8xf32>
    %215 = vector.shape_cast %214 : vector<8xf32> to vector<8x1xf32>
    %cst_153 = arith.constant 3.200000e+01 : f32
    %216 = vector.broadcast %cst_153 : f32 to vector<8x1xf32>
    %217 = arith.divf %215, %216 : vector<8x1xf32>
    %218 = vector.broadcast %217 : vector<8x1xf32> to vector<8x32xf32>
    %219 = arith.subf %213, %218 : vector<8x32xf32>
    %220 = arith.mulf %219, %219 : vector<8x32xf32>
    %cst_154 = arith.constant dense<0.000000e+00> : vector<8xf32>
    %221 = vector.multi_reduction <add>, %220, %cst_154 [1] : vector<8x32xf32> to vector<8xf32>
    %222 = vector.shape_cast %221 : vector<8xf32> to vector<8x1xf32>
    %cst_155 = arith.constant 3.200000e+01 : f32
    %223 = vector.broadcast %cst_155 : f32 to vector<8x1xf32>
    %224 = arith.divf %222, %223 : vector<8x1xf32>
    %225 = vector.broadcast %217 : vector<8x1xf32> to vector<8x32xf32>
    %226 = arith.subf %213, %225 : vector<8x32xf32>
    %cst_156 = arith.constant 9.99999974E-6 : f32
    %227 = vector.broadcast %cst_156 : f32 to vector<8x1xf32>
    %228 = arith.addf %224, %227 : vector<8x1xf32>
    %229 = math.sqrt %228 : vector<8x1xf32>
    %230 = vector.broadcast %229 : vector<8x1xf32> to vector<8x32xf32>
    %231 = arith.divf %226, %230 : vector<8x32xf32>
    %c0_157 = arith.constant 0 : index
    %c0_158 = arith.constant 0 : index
    %232 = vector.load %arg17[%c0_157, %c0_158] : memref<1x32xf32, #tpu.memory_space<vmem>>, vector<1x32xf32>
    %233 = vector.broadcast %232 : vector<1x32xf32> to vector<8x32xf32>
    %234 = arith.mulf %231, %233 : vector<8x32xf32>
    %c0_159 = arith.constant 0 : index
    %c0_160 = arith.constant 0 : index
    %235 = vector.load %arg18[%c0_159, %c0_160] : memref<1x32xf32, #tpu.memory_space<vmem>>, vector<1x32xf32>
    %236 = vector.broadcast %235 : vector<1x32xf32> to vector<8x32xf32>
    %237 = arith.addf %234, %236 : vector<8x32xf32>
    %c0_161 = arith.constant 0 : index
    %c0_162 = arith.constant 0 : index
    %c0_163 = arith.constant 0 : index
    %238 = vector.load %arg19[%c0_161, %c0_162, %c0_163] : memref<1x8x32xf32, #tpu.memory_space<vmem>>, vector<1x8x32xf32>
    %239 = vector.shape_cast %238 : vector<1x8x32xf32> to vector<8x32xf32>
    %240 = vector.shape_cast %237 : vector<8x32xf32> to vector<1x8x32xf32>
    tpu.vector_store %arg19[%c0_161, %c0_162, %c0_163], %240 {strides = array<i32>} : memref<1x8x32xf32, #tpu.memory_space<vmem>>, vector<1x8x32xf32>,
    return
  }
  func.func @transform_0(%arg0: i32) -> (i32, i32, i32) {
    %c0_i32 = arith.constant 0 : i32
    %c0_i32_0 = arith.constant 0 : i32
    %c0_i32_1 = arith.constant 0 : i32
    return %arg0, %c0_i32, %c0_i32_0 : i32, i32, i32
  }
  func.func @transform_1(%arg0: i32) -> (i32, i32, i32) {
    %c0_i32 = arith.constant 0 : i32
    %c0_i32_0 = arith.constant 0 : i32
    %c0_i32_1 = arith.constant 0 : i32
    return %arg0, %c0_i32, %c0_i32_0 : i32, i32, i32
  }
  func.func @transform_2(%arg0: i32) -> (i32, i32, i32) {
    %c0_i32 = arith.constant 0 : i32
    %c0_i32_0 = arith.constant 0 : i32
    %c0_i32_1 = arith.constant 0 : i32
    %c0_i32_2 = arith.constant 0 : i32
    return %c0_i32, %c0_i32_0, %c0_i32_1 : i32, i32, i32
  }
  func.func @transform_3(%arg0: i32) -> (i32, i32, i32) {
    %c0_i32 = arith.constant 0 : i32
    %c0_i32_0 = arith.constant 0 : i32
    %c0_i32_1 = arith.constant 0 : i32
    %c0_i32_2 = arith.constant 0 : i32
    return %c0_i32, %c0_i32_0, %c0_i32_1 : i32, i32, i32
  }
  func.func @transform_4(%arg0: i32) -> (i32, i32, i32) {
    %c0_i32 = arith.constant 0 : i32
    %c0_i32_0 = arith.constant 0 : i32
    %c0_i32_1 = arith.constant 0 : i32
    %c0_i32_2 = arith.constant 0 : i32
    return %c0_i32, %c0_i32_0, %c0_i32_1 : i32, i32, i32
  }
  func.func @transform_5(%arg0: i32) -> (i32, i32, i32) {
    %c0_i32 = arith.constant 0 : i32
    %c0_i32_0 = arith.constant 0 : i32
    %c0_i32_1 = arith.constant 0 : i32
    %c0_i32_2 = arith.constant 0 : i32
    return %c0_i32, %c0_i32_0, %c0_i32_1 : i32, i32, i32
  }
  func.func @transform_6(%arg0: i32) -> (i32, i32, i32) {
    %c0_i32 = arith.constant 0 : i32
    %c0_i32_0 = arith.constant 0 : i32
    %c0_i32_1 = arith.constant 0 : i32
    %c0_i32_2 = arith.constant 0 : i32
    return %c0_i32, %c0_i32_0, %c0_i32_1 : i32, i32, i32
  }
  func.func @transform_7(%arg0: i32) -> (i32, i32, i32) {
    %c0_i32 = arith.constant 0 : i32
    %c0_i32_0 = arith.constant 0 : i32
    %c0_i32_1 = arith.constant 0 : i32
    %c0_i32_2 = arith.constant 0 : i32
    return %c0_i32, %c0_i32_0, %c0_i32_1 : i32, i32, i32
  }
  func.func @transform_8(%arg0: i32) -> (i32, i32, i32) {
    %c0_i32 = arith.constant 0 : i32
    %c0_i32_0 = arith.constant 0 : i32
    %c0_i32_1 = arith.constant 0 : i32
    %c0_i32_2 = arith.constant 0 : i32
    return %c0_i32, %c0_i32_0, %c0_i32_1 : i32, i32, i32
  }
  func.func @transform_9(%arg0: i32) -> (i32, i32) {
    %c0_i32 = arith.constant 0 : i32
    %c0_i32_0 = arith.constant 0 : i32
    %c0_i32_1 = arith.constant 0 : i32
    return %c0_i32, %c0_i32_0 : i32, i32
  }
  func.func @transform_10(%arg0: i32) -> (i32, i32) {
    %c0_i32 = arith.constant 0 : i32
    %c0_i32_0 = arith.constant 0 : i32
    %c0_i32_1 = arith.constant 0 : i32
    return %c0_i32, %c0_i32_0 : i32, i32
  }
  func.func @transform_11(%arg0: i32) -> (i32, i32) {
    %c0_i32 = arith.constant 0 : i32
    %c0_i32_0 = arith.constant 0 : i32
    %c0_i32_1 = arith.constant 0 : i32
    return %c0_i32, %c0_i32_0 : i32, i32
  }
  func.func @transform_12(%arg0: i32) -> (i32, i32) {
    %c0_i32 = arith.constant 0 : i32
    %c0_i32_0 = arith.constant 0 : i32
    %c0_i32_1 = arith.constant 0 : i32
    return %c0_i32, %c0_i32_0 : i32, i32
  }
  func.func @transform_13(%arg0: i32) -> (i32, i32) {
    %c0_i32 = arith.constant 0 : i32
    %c0_i32_0 = arith.constant 0 : i32
    %c0_i32_1 = arith.constant 0 : i32
    return %c0_i32, %c0_i32_0 : i32, i32
  }
  func.func @transform_14(%arg0: i32) -> (i32, i32) {
    %c0_i32 = arith.constant 0 : i32
    %c0_i32_0 = arith.constant 0 : i32
    %c0_i32_1 = arith.constant 0 : i32
    return %c0_i32, %c0_i32_0 : i32, i32
  }
  func.func @transform_15(%arg0: i32) -> (i32, i32) {
    %c0_i32 = arith.constant 0 : i32
    %c0_i32_0 = arith.constant 0 : i32
    %c0_i32_1 = arith.constant 0 : i32
    return %c0_i32, %c0_i32_0 : i32, i32
  }
  func.func @transform_16(%arg0: i32) -> (i32, i32) {
    %c0_i32 = arith.constant 0 : i32
    %c0_i32_0 = arith.constant 0 : i32
    %c0_i32_1 = arith.constant 0 : i32
    return %c0_i32, %c0_i32_0 : i32, i32
  }
  func.func @transform_17(%arg0: i32) -> (i32, i32) {
    %c0_i32 = arith.constant 0 : i32
    %c0_i32_0 = arith.constant 0 : i32
    %c0_i32_1 = arith.constant 0 : i32
    return %c0_i32, %c0_i32_0 : i32, i32
  }
  func.func @transform_18(%arg0: i32) -> (i32, i32, i32) {
    %c0_i32 = arith.constant 0 : i32
    %c0_i32_0 = arith.constant 0 : i32
    %c0_i32_1 = arith.constant 0 : i32
    return %arg0, %c0_i32, %c0_i32_0 : i32, i32, i32
  }
}

</mosaic_0001>

<llo_original>
// kernel: encoder_forward.3
$region0: #{encoder_forward.3}
  #allocation0 [shape = 'u32[]', space=smem, size = 0x4, offset = 0x4, fixed_abs, tag = 'smem constant byte address 0x4 - core index']
  #allocation1 [shape = 'u32[72,128]{1,0:T(1,128)}', space=vmem, size = 0x9000, scoped, tag = 'internal scratch']
  %s0 = inlined_call_operand.vmem [shape: s32[2,8,1], index: 0, kind: input, shape index: {}]
  %s1 = inlined_call_operand.vmem [shape: f32[64,32], index: 1, kind: input, shape index: {}]
  %s2 = inlined_call_operand.vmem [shape: f32[8,32], index: 2, kind: input, shape index: {}]
  %s3 = inlined_call_operand.vmem [shape: f32[2,8,32], index: 3, kind: output, shape index: {}]
  %s4 = sld [smem:[#allocation0]]
  $region45: #{encoder_forward.3} parent=0
    _
  %s6 = ssub.s32 1, %s4
  %s7 = scalar_select 0, %s6, %s4
  loop: start=0, step=1, limit=4
  $region2: #{encoder_forward.3} parent=0 // loop_pre_header
    _
  $region3: #{encoder_forward.3} parent=0 // loop_header
    %s9 = sphi 0, %s13
    %p10 = scmp.ge.s32.totalorder %s9, 4
    %s19 = sphi 0, %s21
    %s22 = sphi 0, %s19
    %s23 = sphi 0, %s22
    %s39 = sphi 0, %s23
    %s43 = sphi 0, %s43
    %s45 = sphi 0, %s43
    %s46 = sphi 0, %s45
    %s60 = sphi 0, %s46
    %s64 = sphi 0, %s64
    %s66 = sphi 0, %s64
    %s67 = sphi 0, %s66
    %s81 = sphi 0, %s67
    %s87 = sphi 0, %s89
    %s90 = sphi 0, %s87
    %s91 = sphi 0, %s90
    %s107 = sphi 0, %s91
  $region4: #{encoder_forward.3} parent=0 // loop_header_branch
    %12 = sbr.rel (%p10) target = $region8
  $region5: #{encoder_forward.3} parent=0 // loop_body
    %s14 = ssub.s32 %s9, 1
    %s15 = ssub.s32 %s9, 2
    %s16 = sadd.s32 %s9, 1
    %s17 = ssub.s32 %s9, %s16
    %p18 = scmp.eq.s32.totalorder %s17, 0
    %s20 = sadd.s32 %s19, 1
    %s21 = scalar_select %p18, %s19, %s20
    %p24 = pneg %p18
    %p25 = scmp.eq.s32.totalorder %s9, 1
    %p26 = por %p24, %p25
    %p27 = scmp.ne.s32.totalorder %s19, %s22
    %p28 = scmp.eq.s32.totalorder %s9, 0
    %p29 = por %p27, %p28
    %p30 = scmp.ne.s32.totalorder %s19, %s22
    %p31 = scmp.eq.s32.totalorder %s14, 1
    %p32 = por %p30, %p31
    %p33 = scmp.ne.s32.totalorder %s22, %s23
    %p34 = scmp.eq.s32.totalorder %s14, 0
    %p35 = por %p33, %p34
    %p36 = scmp.ne.s32.totalorder %s22, %s23
    %p37 = scmp.eq.s32.totalorder %s15, 1
    %p38 = por %p36, %p37
    %p40 = scmp.ne.s32.totalorder %s23, %s39
    %p41 = scmp.eq.s32.totalorder %s15, 0
    %p42 = por %p40, %p41
    %s44 = sadd.s32 %s43, 1
    %p47 = scmp.eq.s32.totalorder %s9, 1
    %p48 = scmp.ne.s32.totalorder %s43, %s45
    %p49 = scmp.eq.s32.totalorder %s9, 0
    %p50 = por %p48, %p49
    %p51 = scmp.ne.s32.totalorder %s43, %s45
    %p52 = scmp.eq.s32.totalorder %s14, 1
    %p53 = por %p51, %p52
    %p54 = scmp.ne.s32.totalorder %s45, %s46
    %p55 = scmp.eq.s32.totalorder %s14, 0
    %p56 = por %p54, %p55
    %p57 = scmp.ne.s32.totalorder %s45, %s46
    %p58 = scmp.eq.s32.totalorder %s15, 1
    %p59 = por %p57, %p58
    %p61 = scmp.ne.s32.totalorder %s46, %s60
    %p62 = scmp.eq.s32.totalorder %s15, 0
    %p63 = por %p61, %p62
    %s65 = sadd.s32 %s64, 1
    %p68 = scmp.eq.s32.totalorder %s9, 1
    %p69 = scmp.ne.s32.totalorder %s64, %s66
    %p70 = scmp.eq.s32.totalorder %s9, 0
    %p71 = por %p69, %p70
    %p72 = scmp.ne.s32.totalorder %s64, %s66
    %p73 = scmp.eq.s32.totalorder %s14, 1
    %p74 = por %p72, %p73
    %p75 = scmp.ne.s32.totalorder %s66, %s67
    %p76 = scmp.eq.s32.totalorder %s14, 0
    %p77 = por %p75, %p76
    %p78 = scmp.ne.s32.totalorder %s66, %s67
    %p79 = scmp.eq.s32.totalorder %s15, 1
    %p80 = por %p78, %p79
    %p82 = scmp.ne.s32.totalorder %s67, %s81
    %p83 = scmp.eq.s32.totalorder %s15, 0
    %p84 = por %p82, %p83
    %s85 = ssub.s32 %s9, %s16
    %p86 = scmp.eq.s32.totalorder %s85, 0
    %s88 = sadd.s32 %s87, 1
    %s89 = scalar_select %p86, %s87, %s88
    %p92 = pneg %p86
    %p93 = scmp.eq.s32.totalorder %s9, 1
    %p94 = por %p92, %p93
    %p95 = scmp.ne.s32.totalorder %s87, %s90
    %p96 = scmp.eq.s32.totalorder %s9, 0
    %p97 = por %p95, %p96
    %p98 = scmp.ne.s32.totalorder %s87, %s90
    %p99 = scmp.eq.s32.totalorder %s14, 1
    %p100 = por %p98, %p99
    %p101 = scmp.ne.s32.totalorder %s90, %s91
    %p102 = scmp.eq.s32.totalorder %s14, 0
    %p103 = por %p101, %p102
    %p104 = scmp.ne.s32.totalorder %s90, %s91
    %p105 = scmp.eq.s32.totalorder %s15, 1
    %p106 = por %p104, %p105
    %p108 = scmp.ne.s32.totalorder %s91, %s107
    %p109 = scmp.eq.s32.totalorder %s15, 0
    %p110 = por %p108, %p109
    %p111 = scmp.le.s32.totalorder 1, %s9
    %p112 = scmp.lt.s32.totalorder %s9, 3
    %p113 = pnand %p111, %p112
    %p114 = pneg %p113
    // Predicated region
    $region9: #{encoder_forward.3} parent=5 // pred_check
      _
    $region10: #{encoder_forward.3} parent=5 // pred_check_branch
      %116 = sbr.rel (%p113) target = $region12
    $region11: #{encoder_forward.3} parent=5 // pred_region
      %s117 = ssub.s32 %s9, 1
      // Predicated region
      $region13: #{encoder_forward.3} parent=11 // pred_check
        %p118 = pneg %p56
      $region14: #{encoder_forward.3} parent=11 // pred_check_branch
        %120 = sbr.rel (%p118) target = $region16
      $region15: #{encoder_forward.3} parent=11 // pred_region
        _
      $region16: #{encoder_forward.3} parent=11 // pred_fallthru
        _
      // Predicated region
      $region17: #{encoder_forward.3} parent=11 // pred_check
        %p121 = pneg %p77
      $region18: #{encoder_forward.3} parent=11 // pred_check_branch
        %123 = sbr.rel (%p121) target = $region20
      $region19: #{encoder_forward.3} parent=11 // pred_region
        _
      $region20: #{encoder_forward.3} parent=11 // pred_fallthru
        _
    $region12: #{encoder_forward.3} parent=5 // pred_fallthru
      _
    %p124 = scmp.lt.s32.totalorder %s9, 2
    // Predicated region
    $region21: #{encoder_forward.3} parent=5 // pred_check
      %p125 = pneg %p124
    $region22: #{encoder_forward.3} parent=5 // pred_check_branch
      %127 = sbr.rel (%p125) target = $region24
    $region23: #{encoder_forward.3} parent=5 // pred_region
      // Predicated region
      $region25: #{encoder_forward.3} parent=23 // pred_check
        %p128 = pneg %p29
      $region26: #{encoder_forward.3} parent=23 // pred_check_branch
        %130 = sbr.rel (%p128) target = $region28
      $region27: #{encoder_forward.3} parent=23 // pred_region
        %p131 = scmp.lt.s32.totalorder %s9, 1
        %s132 = scalar_select %p131, %s9, 1
        %s133 = smul.addr %s132, 8
        %s134 = scalar_lea.vmem %s0, %s133
      $region28: #{encoder_forward.3} parent=23 // pred_fallthru
        _
    $region24: #{encoder_forward.3} parent=5 // pred_fallthru
      _
    %p135 = scmp.le.s32.totalorder 1, %s9
    %p136 = scmp.lt.s32.totalorder %s9, 3
    %p137 = pnand %p135, %p136
    %p138 = pneg %p137
    // Predicated region
    $region29: #{encoder_forward.3} parent=5 // pred_check
      _
    $region30: #{encoder_forward.3} parent=5 // pred_check_branch
      %140 = sbr.rel (%p137) target = $region32
    $region31: #{encoder_forward.3} parent=5 // pred_region
      %s141 = ssub.s32 %s9, 1
      %p142 = scmp.lt.s32.totalorder %s14, 1
      %s143 = scalar_select %p142, %s14, 1
      %s144 = smul.addr %s143, 8
      %s145 = scalar_lea.vmem %s0, %s144
      %p146 = pneg %p35
      %p147 = pneg %p32
      %p148 = pneg %p56
      %p149 = pneg %p53
      %p150 = pneg %p77
      %p151 = pneg %p74
      %p152 = pneg %p103
      %p153 = pneg %p100
      %p154 = scmp.lt.s32.totalorder %s14, 1
      %s155 = scalar_select %p154, %s14, 1
      %s156 = smul.addr %s155, 8
      %s157 = scalar_lea.vmem %s3, %s156
      %p158 = scmp.lt.s32.totalorder %s14, 1
      %s159 = scalar_select %p158, %s14, 1
      %s160 = smul.addr %s159, 8
      %s161 = scalar_lea.vmem %s0, %s160
      %p162 = scmp.lt.s32.totalorder %s14, 1
      %s163 = scalar_select %p162, %s14, 1
      %s164 = smul.addr %s163, 8
      %s165 = scalar_lea.vmem %s3, %s164
      %v166 = vlaneseq
      %v167 = vand.u32 %v166, 127
      %v168 = vld [vmem:[%s161] sm:$0xff]
      %169 = vset.pattern.permute.xlu0 0
      %170 = vperm.xlu0 %169, %v168
      %v171 = vpop.permute.xlu0 %170
      %vm172 = vcmp.eq.s32.totalorder %v167, %v171
      %v173 = vsel %vm172, 1, 0
      %v174 = vcvt.s32.f32 %v173
      %v175 = vld [vmem:[%s1] sm:$0xff]
      %v176 = vld [vmem:[%s1 + $0x8] sm:$0xff]
      %v177 = vld [vmem:[%s1 + $0x10] sm:$0xff]
      %v178 = vld [vmem:[%s1 + $0x18] sm:$0xff]
      %v179 = vld [vmem:[%s1 + $0x20] sm:$0xff]
      %v180 = vld [vmem:[%s1 + $0x28] sm:$0xff]
      %v181 = vld [vmem:[%s1 + $0x30] sm:$0xff]
      %v182 = vld [vmem:[%s1 + $0x38] sm:$0xff]
      %v183 = vld [vmem:[%s2] sm:$0xff]
      %vm184 = vcmask 523264
      %v186 = vsel %vm184, %v174, 0
      %188 = vmatpush.msra.mxu0 0.0
      %189 = vmatpush.msra.mxu0 0.0
      %190 = vmatpush.msra.mxu0 0.0
      %191 = vmatpush.msra.mxu0 0.0
      %192 = vmatpush.msra.mxu0 0.0
      %193 = vmatpush.msra.mxu0 0.0
      %194 = vmatpush.msra.mxu0 0.0
      %195 = vmatpush.msra.mxu0 0.0
      %196 = vmatpush.msra.mxu0 %v182
      %197 = vmatpush.msra.mxu0 %v181
      %198 = vmatpush.msra.mxu0 %v180
      %199 = vmatpush.msra.mxu0 %v179
      %200 = vmatpush.msra.mxu0 %v178
      %201 = vmatpush.msra.mxu0 %v177
      %202 = vmatpush.msra.mxu0 %v176
      %203 = vmatpush.msra.mxu0 %v175
      %204 = vmatmul.f32.gmra.mxu0 %v186
      %v205 = vpop.f32.mrf.mxu0
      %v206 = vadd.f32 %v183, %v205
      %207 = vdwg.mxu0
      %vm208 = vcmask 261120
      %209 = vst.msk [vmem:[%s165] sm:$0xff] %vm208, %v206
      %p210 = scmp.lt.s32.totalorder %s14, 1
      %s211 = scalar_select %p210, %s14, 1
      %s212 = smul.addr %s211, 8
      %s213 = scalar_lea.vmem %s3, %s212
      // Predicated region
      $region33: #{encoder_forward.3} parent=31 // pred_check
        %p214 = pneg %p100
      $region34: #{encoder_forward.3} parent=31 // pred_check_branch
        %216 = sbr.rel (%p214) target = $region36
      $region35: #{encoder_forward.3} parent=31 // pred_region
        _
      $region36: #{encoder_forward.3} parent=31 // pred_fallthru
        _
    $region32: #{encoder_forward.3} parent=5 // pred_fallthru
      _
    %p217 = scmp.le.s32.totalorder 2, %s9
    // Predicated region
    $region37: #{encoder_forward.3} parent=5 // pred_check
      %p218 = pneg %p217
    $region38: #{encoder_forward.3} parent=5 // pred_check_branch
      %220 = sbr.rel (%p218) target = $region40
    $region39: #{encoder_forward.3} parent=5 // pred_region
      %s221 = ssub.s32 %s9, 2
      // Predicated region
      $region41: #{encoder_forward.3} parent=39 // pred_check
        %p222 = pneg %p106
      $region42: #{encoder_forward.3} parent=39 // pred_check_branch
        %224 = sbr.rel (%p222) target = $region44
      $region43: #{encoder_forward.3} parent=39 // pred_region
        %p225 = scmp.lt.s32.totalorder %s15, 1
        %s226 = scalar_select %p225, %s15, 1
        %s227 = smul.addr %s226, 8
        %s228 = scalar_lea.vmem %s3, %s227
      $region44: #{encoder_forward.3} parent=39 // pred_fallthru
        _
    $region40: #{encoder_forward.3} parent=5 // pred_fallthru
      _
  $region6: #{encoder_forward.3} parent=0 // loop_footer
    %s13 = sadd.s32 1, %s9
  $region7: #{encoder_forward.3} parent=0 // loop_footer_branch
    %8 = sbr.rel target = $region3
  $region8: #{encoder_forward.3} parent=0 // loop_exit
    _

// kernel: encoder_forward.4
$region0: #{encoder_forward.4}
  #allocation0 [shape = 'u32[]', space=smem, size = 0x4, offset = 0x4, fixed_abs, tag = 'smem constant byte address 0x4 - core index']
  #allocation1 [shape = 'u32[72,128]{1,0:T(1,128)}', space=vmem, size = 0x9000, scoped, tag = 'internal scratch']
  %s0 = inlined_call_operand.vmem [shape: f32[2,8,32], index: 0, kind: input, shape index: {}, may-alias: {0,18}]
  %s1 = inlined_call_operand.vmem [shape: f32[2,8,8], index: 1, kind: input, shape index: {}]
  %s2 = inlined_call_operand.vmem [shape: f32[4,32,8], index: 2, kind: input, shape index: {}]
  %s3 = inlined_call_operand.vmem [shape: f32[4,1,8], index: 3, kind: input, shape index: {}]
  %s4 = inlined_call_operand.vmem [shape: f32[4,32,8], index: 4, kind: input, shape index: {}]
  %s5 = inlined_call_operand.vmem [shape: f32[4,1,8], index: 5, kind: input, shape index: {}]
  %s6 = inlined_call_operand.vmem [shape: f32[4,32,8], index: 6, kind: input, shape index: {}]
  %s7 = inlined_call_operand.vmem [shape: f32[4,1,8], index: 7, kind: input, shape index: {}]
  %s8 = inlined_call_operand.vmem [shape: f32[4,8,32], index: 8, kind: input, shape index: {}]
  %s9 = inlined_call_operand.vmem [shape: f32[1,32], index: 9, kind: input, shape index: {}]
  %s10 = inlined_call_operand.vmem [shape: f32[32,64], index: 10, kind: input, shape index: {}]
  %s11 = inlined_call_operand.vmem [shape: f32[1,64], index: 11, kind: input, shape index: {}]
  %s12 = inlined_call_operand.vmem [shape: f32[64,32], index: 12, kind: input, shape index: {}]
  %s13 = inlined_call_operand.vmem [shape: f32[1,32], index: 13, kind: input, shape index: {}]
  %s14 = inlined_call_operand.vmem [shape: f32[1,32], index: 14, kind: input, shape index: {}]
  %s15 = inlined_call_operand.vmem [shape: f32[1,32], index: 15, kind: input, shape index: {}]
  %s16 = inlined_call_operand.vmem [shape: f32[1,32], index: 16, kind: input, shape index: {}]
  %s17 = inlined_call_operand.vmem [shape: f32[1,32], index: 17, kind: input, shape index: {}]
  %s18 = inlined_call_operand.vmem [shape: f32[2,8,32], index: 18, kind: output, shape index: {}, may-alias: {0,18}]
  %s19 = sld [smem:[#allocation0]]
  $region105: #{encoder_forward.4} parent=0
    _
  %s21 = ssub.s32 1, %s19
  %s22 = scalar_select 0, %s21, %s19
  loop: start=0, step=1, limit=4
  $region2: #{encoder_forward.4} parent=0 // loop_pre_header
    _
  $region3: #{encoder_forward.4} parent=0 // loop_header
    %s24 = sphi 0, %s28
    %p25 = scmp.ge.s32.totalorder %s24, 4
    %s34 = sphi 0, %s36
    %s37 = sphi 0, %s34
    %s38 = sphi 0, %s37
    %s54 = sphi 0, %s38
    %s60 = sphi 0, %s62
    %s63 = sphi 0, %s60
    %s64 = sphi 0, %s63
    %s80 = sphi 0, %s64
    %s84 = sphi 0, %s84
    %s86 = sphi 0, %s84
    %s87 = sphi 0, %s86
    %s101 = sphi 0, %s87
    %s105 = sphi 0, %s105
    %s107 = sphi 0, %s105
    %s108 = sphi 0, %s107
    %s122 = sphi 0, %s108
    %s126 = sphi 0, %s126
    %s128 = sphi 0, %s126
    %s129 = sphi 0, %s128
    %s143 = sphi 0, %s129
    %s147 = sphi 0, %s147
    %s149 = sphi 0, %s147
    %s150 = sphi 0, %s149
    %s164 = sphi 0, %s150
    %s168 = sphi 0, %s168
    %s170 = sphi 0, %s168
    %s171 = sphi 0, %s170
    %s185 = sphi 0, %s171
    %s189 = sphi 0, %s189
    %s191 = sphi 0, %s189
    %s192 = sphi 0, %s191
    %s206 = sphi 0, %s192
    %s210 = sphi 0, %s210
    %s212 = sphi 0, %s210
    %s213 = sphi 0, %s212
    %s227 = sphi 0, %s213
    %s231 = sphi 0, %s231
    %s233 = sphi 0, %s231
    %s234 = sphi 0, %s233
    %s248 = sphi 0, %s234
    %s252 = sphi 0, %s252
    %s254 = sphi 0, %s252
    %s255 = sphi 0, %s254
    %s269 = sphi 0, %s255
    %s273 = sphi 0, %s273
    %s275 = sphi 0, %s273
    %s276 = sphi 0, %s275
    %s290 = sphi 0, %s276
    %s294 = sphi 0, %s294
    %s296 = sphi 0, %s294
    %s297 = sphi 0, %s296
    %s311 = sphi 0, %s297
    %s315 = sphi 0, %s315
    %s317 = sphi 0, %s315
    %s318 = sphi 0, %s317
    %s332 = sphi 0, %s318
    %s336 = sphi 0, %s336
    %s338 = sphi 0, %s336
    %s339 = sphi 0, %s338
    %s353 = sphi 0, %s339
    %s357 = sphi 0, %s357
    %s359 = sphi 0, %s357
    %s360 = sphi 0, %s359
    %s374 = sphi 0, %s360
    %s378 = sphi 0, %s378
    %s380 = sphi 0, %s378
    %s381 = sphi 0, %s380
    %s395 = sphi 0, %s381
    %s399 = sphi 0, %s399
    %s401 = sphi 0, %s399
    %s402 = sphi 0, %s401
    %s416 = sphi 0, %s402
    %s422 = sphi 0, %s424
    %s425 = sphi 0, %s422
    %s426 = sphi 0, %s425
    %s442 = sphi 0, %s426
  $region4: #{encoder_forward.4} parent=0 // loop_header_branch
    %27 = sbr.rel (%p25) target = $region8
  $region5: #{encoder_forward.4} parent=0 // loop_body
    %s29 = ssub.s32 %s24, 1
    %s30 = ssub.s32 %s24, 2
    %s31 = sadd.s32 %s24, 1
    %s32 = ssub.s32 %s24, %s31
    %p33 = scmp.eq.s32.totalorder %s32, 0
    %s35 = sadd.s32 %s34, 1
    %s36 = scalar_select %p33, %s34, %s35
    %p39 = pneg %p33
    %p40 = scmp.eq.s32.totalorder %s24, 1
    %p41 = por %p39, %p40
    %p42 = scmp.ne.s32.totalorder %s34, %s37
    %p43 = scmp.eq.s32.totalorder %s24, 0
    %p44 = por %p42, %p43
    %p45 = scmp.ne.s32.totalorder %s34, %s37
    %p46 = scmp.eq.s32.totalorder %s29, 1
    %p47 = por %p45, %p46
    %p48 = scmp.ne.s32.totalorder %s37, %s38
    %p49 = scmp.eq.s32.totalorder %s29, 0
    %p50 = por %p48, %p49
    %p51 = scmp.ne.s32.totalorder %s37, %s38
    %p52 = scmp.eq.s32.totalorder %s30, 1
    %p53 = por %p51, %p52
    %p55 = scmp.ne.s32.totalorder %s38, %s54
    %p56 = scmp.eq.s32.totalorder %s30, 0
    %p57 = por %p55, %p56
    %s58 = ssub.s32 %s24, %s31
    %p59 = scmp.eq.s32.totalorder %s58, 0
    %s61 = sadd.s32 %s60, 1
    %s62 = scalar_select %p59, %s60, %s61
    %p65 = pneg %p59
    %p66 = scmp.eq.s32.totalorder %s24, 1
    %p67 = por %p65, %p66
    %p68 = scmp.ne.s32.totalorder %s60, %s63
    %p69 = scmp.eq.s32.totalorder %s24, 0
    %p70 = por %p68, %p69
    %p71 = scmp.ne.s32.totalorder %s60, %s63
    %p72 = scmp.eq.s32.totalorder %s29, 1
    %p73 = por %p71, %p72
    %p74 = scmp.ne.s32.totalorder %s63, %s64
    %p75 = scmp.eq.s32.totalorder %s29, 0
    %p76 = por %p74, %p75
    %p77 = scmp.ne.s32.totalorder %s63, %s64
    %p78 = scmp.eq.s32.totalorder %s30, 1
    %p79 = por %p77, %p78
    %p81 = scmp.ne.s32.totalorder %s64, %s80
    %p82 = scmp.eq.s32.totalorder %s30, 0
    %p83 = por %p81, %p82
    %s85 = sadd.s32 %s84, 1
    %p88 = scmp.eq.s32.totalorder %s24, 1
    %p89 = scmp.ne.s32.totalorder %s84, %s86
    %p90 = scmp.eq.s32.totalorder %s24, 0
    %p91 = por %p89, %p90
    %p92 = scmp.ne.s32.totalorder %s84, %s86
    %p93 = scmp.eq.s32.totalorder %s29, 1
    %p94 = por %p92, %p93
    %p95 = scmp.ne.s32.totalorder %s86, %s87
    %p96 = scmp.eq.s32.totalorder %s29, 0
    %p97 = por %p95, %p96
    %p98 = scmp.ne.s32.totalorder %s86, %s87
    %p99 = scmp.eq.s32.totalorder %s30, 1
    %p100 = por %p98, %p99
    %p102 = scmp.ne.s32.totalorder %s87, %s101
    %p103 = scmp.eq.s32.totalorder %s30, 0
    %p104 = por %p102, %p103
    %s106 = sadd.s32 %s105, 1
    %p109 = scmp.eq.s32.totalorder %s24, 1
    %p110 = scmp.ne.s32.totalorder %s105, %s107
    %p111 = scmp.eq.s32.totalorder %s24, 0
    %p112 = por %p110, %p111
    %p113 = scmp.ne.s32.totalorder %s105, %s107
    %p114 = scmp.eq.s32.totalorder %s29, 1
    %p115 = por %p113, %p114
    %p116 = scmp.ne.s32.totalorder %s107, %s108
    %p117 = scmp.eq.s32.totalorder %s29, 0
    %p118 = por %p116, %p117
    %p119 = scmp.ne.s32.totalorder %s107, %s108
    %p120 = scmp.eq.s32.totalorder %s30, 1
    %p121 = por %p119, %p120
    %p123 = scmp.ne.s32.totalorder %s108, %s122
    %p124 = scmp.eq.s32.totalorder %s30, 0
    %p125 = por %p123, %p124
    %s127 = sadd.s32 %s126, 1
    %p130 = scmp.eq.s32.totalorder %s24, 1
    %p131 = scmp.ne.s32.totalorder %s126, %s128
    %p132 = scmp.eq.s32.totalorder %s24, 0
    %p133 = por %p131, %p132
    %p134 = scmp.ne.s32.totalorder %s126, %s128
    %p135 = scmp.eq.s32.totalorder %s29, 1
    %p136 = por %p134, %p135
    %p137 = scmp.ne.s32.totalorder %s128, %s129
    %p138 = scmp.eq.s32.totalorder %s29, 0
    %p139 = por %p137, %p138
    %p140 = scmp.ne.s32.totalorder %s128, %s129
    %p141 = scmp.eq.s32.totalorder %s30, 1
    %p142 = por %p140, %p141
    %p144 = scmp.ne.s32.totalorder %s129, %s143
    %p145 = scmp.eq.s32.totalorder %s30, 0
    %p146 = por %p144, %p145
    %s148 = sadd.s32 %s147, 1
    %p151 = scmp.eq.s32.totalorder %s24, 1
    %p152 = scmp.ne.s32.totalorder %s147, %s149
    %p153 = scmp.eq.s32.totalorder %s24, 0
    %p154 = por %p152, %p153
    %p155 = scmp.ne.s32.totalorder %s147, %s149
    %p156 = scmp.eq.s32.totalorder %s29, 1
    %p157 = por %p155, %p156
    %p158 = scmp.ne.s32.totalorder %s149, %s150
    %p159 = scmp.eq.s32.totalorder %s29, 0
    %p160 = por %p158, %p159
    %p161 = scmp.ne.s32.totalorder %s149, %s150
    %p162 = scmp.eq.s32.totalorder %s30, 1
    %p163 = por %p161, %p162
    %p165 = scmp.ne.s32.totalorder %s150, %s164
    %p166 = scmp.eq.s32.totalorder %s30, 0
    %p167 = por %p165, %p166
    %s169 = sadd.s32 %s168, 1
    %p172 = scmp.eq.s32.totalorder %s24, 1
    %p173 = scmp.ne.s32.totalorder %s168, %s170
    %p174 = scmp.eq.s32.totalorder %s24, 0
    %p175 = por %p173, %p174
    %p176 = scmp.ne.s32.totalorder %s168, %s170
    %p177 = scmp.eq.s32.totalorder %s29, 1
    %p178 = por %p176, %p177
    %p179 = scmp.ne.s32.totalorder %s170, %s171
    %p180 = scmp.eq.s32.totalorder %s29, 0
    %p181 = por %p179, %p180
    %p182 = scmp.ne.s32.totalorder %s170, %s171
    %p183 = scmp.eq.s32.totalorder %s30, 1
    %p184 = por %p182, %p183
    %p186 = scmp.ne.s32.totalorder %s171, %s185
    %p187 = scmp.eq.s32.totalorder %s30, 0
    %p188 = por %p186, %p187
    %s190 = sadd.s32 %s189, 1
    %p193 = scmp.eq.s32.totalorder %s24, 1
    %p194 = scmp.ne.s32.totalorder %s189, %s191
    %p195 = scmp.eq.s32.totalorder %s24, 0
    %p196 = por %p194, %p195
    %p197 = scmp.ne.s32.totalorder %s189, %s191
    %p198 = scmp.eq.s32.totalorder %s29, 1
    %p199 = por %p197, %p198
    %p200 = scmp.ne.s32.totalorder %s191, %s192
    %p201 = scmp.eq.s32.totalorder %s29, 0
    %p202 = por %p200, %p201
    %p203 = scmp.ne.s32.totalorder %s191, %s192
    %p204 = scmp.eq.s32.totalorder %s30, 1
    %p205 = por %p203, %p204
    %p207 = scmp.ne.s32.totalorder %s192, %s206
    %p208 = scmp.eq.s32.totalorder %s30, 0
    %p209 = por %p207, %p208
    %s211 = sadd.s32 %s210, 1
    %p214 = scmp.eq.s32.totalorder %s24, 1
    %p215 = scmp.ne.s32.totalorder %s210, %s212
    %p216 = scmp.eq.s32.totalorder %s24, 0
    %p217 = por %p215, %p216
    %p218 = scmp.ne.s32.totalorder %s210, %s212
    %p219 = scmp.eq.s32.totalorder %s29, 1
    %p220 = por %p218, %p219
    %p221 = scmp.ne.s32.totalorder %s212, %s213
    %p222 = scmp.eq.s32.totalorder %s29, 0
    %p223 = por %p221, %p222
    %p224 = scmp.ne.s32.totalorder %s212, %s213
    %p225 = scmp.eq.s32.totalorder %s30, 1
    %p226 = por %p224, %p225
    %p228 = scmp.ne.s32.totalorder %s213, %s227
    %p229 = scmp.eq.s32.totalorder %s30, 0
    %p230 = por %p228, %p229
    %s232 = sadd.s32 %s231, 1
    %p235 = scmp.eq.s32.totalorder %s24, 1
    %p236 = scmp.ne.s32.totalorder %s231, %s233
    %p237 = scmp.eq.s32.totalorder %s24, 0
    %p238 = por %p236, %p237
    %p239 = scmp.ne.s32.totalorder %s231, %s233
    %p240 = scmp.eq.s32.totalorder %s29, 1
    %p241 = por %p239, %p240
    %p242 = scmp.ne.s32.totalorder %s233, %s234
    %p243 = scmp.eq.s32.totalorder %s29, 0
    %p244 = por %p242, %p243
    %p245 = scmp.ne.s32.totalorder %s233, %s234
    %p246 = scmp.eq.s32.totalorder %s30, 1
    %p247 = por %p245, %p246
    %p249 = scmp.ne.s32.totalorder %s234, %s248
    %p250 = scmp.eq.s32.totalorder %s30, 0
    %p251 = por %p249, %p250
    %s253 = sadd.s32 %s252, 1
    %p256 = scmp.eq.s32.totalorder %s24, 1
    %p257 = scmp.ne.s32.totalorder %s252, %s254
    %p258 = scmp.eq.s32.totalorder %s24, 0
    %p259 = por %p257, %p258
    %p260 = scmp.ne.s32.totalorder %s252, %s254
    %p261 = scmp.eq.s32.totalorder %s29, 1
    %p262 = por %p260, %p261
    %p263 = scmp.ne.s32.totalorder %s254, %s255
    %p264 = scmp.eq.s32.totalorder %s29, 0
    %p265 = por %p263, %p264
    %p266 = scmp.ne.s32.totalorder %s254, %s255
    %p267 = scmp.eq.s32.totalorder %s30, 1
    %p268 = por %p266, %p267
    %p270 = scmp.ne.s32.totalorder %s255, %s269
    %p271 = scmp.eq.s32.totalorder %s30, 0
    %p272 = por %p270, %p271
    %s274 = sadd.s32 %s273, 1
    %p277 = scmp.eq.s32.totalorder %s24, 1
    %p278 = scmp.ne.s32.totalorder %s273, %s275
    %p279 = scmp.eq.s32.totalorder %s24, 0
    %p280 = por %p278, %p279
    %p281 = scmp.ne.s32.totalorder %s273, %s275
    %p282 = scmp.eq.s32.totalorder %s29, 1
    %p283 = por %p281, %p282
    %p284 = scmp.ne.s32.totalorder %s275, %s276
    %p285 = scmp.eq.s32.totalorder %s29, 0
    %p286 = por %p284, %p285
    %p287 = scmp.ne.s32.totalorder %s275, %s276
    %p288 = scmp.eq.s32.totalorder %s30, 1
    %p289 = por %p287, %p288
    %p291 = scmp.ne.s32.totalorder %s276, %s290
    %p292 = scmp.eq.s32.totalorder %s30, 0
    %p293 = por %p291, %p292
    %s295 = sadd.s32 %s294, 1
    %p298 = scmp.eq.s32.totalorder %s24, 1
    %p299 = scmp.ne.s32.totalorder %s294, %s296
    %p300 = scmp.eq.s32.totalorder %s24, 0
    %p301 = por %p299, %p300
    %p302 = scmp.ne.s32.totalorder %s294, %s296
    %p303 = scmp.eq.s32.totalorder %s29, 1
    %p304 = por %p302, %p303
    %p305 = scmp.ne.s32.totalorder %s296, %s297
    %p306 = scmp.eq.s32.totalorder %s29, 0
    %p307 = por %p305, %p306
    %p308 = scmp.ne.s32.totalorder %s296, %s297
    %p309 = scmp.eq.s32.totalorder %s30, 1
    %p310 = por %p308, %p309
    %p312 = scmp.ne.s32.totalorder %s297, %s311
    %p313 = scmp.eq.s32.totalorder %s30, 0
    %p314 = por %p312, %p313
    %s316 = sadd.s32 %s315, 1
    %p319 = scmp.eq.s32.totalorder %s24, 1
    %p320 = scmp.ne.s32.totalorder %s315, %s317
    %p321 = scmp.eq.s32.totalorder %s24, 0
    %p322 = por %p320, %p321
    %p323 = scmp.ne.s32.totalorder %s315, %s317
    %p324 = scmp.eq.s32.totalorder %s29, 1
    %p325 = por %p323, %p324
    %p326 = scmp.ne.s32.totalorder %s317, %s318
    %p327 = scmp.eq.s32.totalorder %s29, 0
    %p328 = por %p326, %p327
    %p329 = scmp.ne.s32.totalorder %s317, %s318
    %p330 = scmp.eq.s32.totalorder %s30, 1
    %p331 = por %p329, %p330
    %p333 = scmp.ne.s32.totalorder %s318, %s332
    %p334 = scmp.eq.s32.totalorder %s30, 0
    %p335 = por %p333, %p334
    %s337 = sadd.s32 %s336, 1
    %p340 = scmp.eq.s32.totalorder %s24, 1
    %p341 = scmp.ne.s32.totalorder %s336, %s338
    %p342 = scmp.eq.s32.totalorder %s24, 0
    %p343 = por %p341, %p342
    %p344 = scmp.ne.s32.totalorder %s336, %s338
    %p345 = scmp.eq.s32.totalorder %s29, 1
    %p346 = por %p344, %p345
    %p347 = scmp.ne.s32.totalorder %s338, %s339
    %p348 = scmp.eq.s32.totalorder %s29, 0
    %p349 = por %p347, %p348
    %p350 = scmp.ne.s32.totalorder %s338, %s339
    %p351 = scmp.eq.s32.totalorder %s30, 1
    %p352 = por %p350, %p351
    %p354 = scmp.ne.s32.totalorder %s339, %s353
    %p355 = scmp.eq.s32.totalorder %s30, 0
    %p356 = por %p354, %p355
    %s358 = sadd.s32 %s357, 1
    %p361 = scmp.eq.s32.totalorder %s24, 1
    %p362 = scmp.ne.s32.totalorder %s357, %s359
    %p363 = scmp.eq.s32.totalorder %s24, 0
    %p364 = por %p362, %p363
    %p365 = scmp.ne.s32.totalorder %s357, %s359
    %p366 = scmp.eq.s32.totalorder %s29, 1
    %p367 = por %p365, %p366
    %p368 = scmp.ne.s32.totalorder %s359, %s360
    %p369 = scmp.eq.s32.totalorder %s29, 0
    %p370 = por %p368, %p369
    %p371 = scmp.ne.s32.totalorder %s359, %s360
    %p372 = scmp.eq.s32.totalorder %s30, 1
    %p373 = por %p371, %p372
    %p375 = scmp.ne.s32.totalorder %s360, %s374
    %p376 = scmp.eq.s32.totalorder %s30, 0
    %p377 = por %p375, %p376
    %s379 = sadd.s32 %s378, 1
    %p382 = scmp.eq.s32.totalorder %s24, 1
    %p383 = scmp.ne.s32.totalorder %s378, %s380
    %p384 = scmp.eq.s32.totalorder %s24, 0
    %p385 = por %p383, %p384
    %p386 = scmp.ne.s32.totalorder %s378, %s380
    %p387 = scmp.eq.s32.totalorder %s29, 1
    %p388 = por %p386, %p387
    %p389 = scmp.ne.s32.totalorder %s380, %s381
    %p390 = scmp.eq.s32.totalorder %s29, 0
    %p391 = por %p389, %p390
    %p392 = scmp.ne.s32.totalorder %s380, %s381
    %p393 = scmp.eq.s32.totalorder %s30, 1
    %p394 = por %p392, %p393
    %p396 = scmp.ne.s32.totalorder %s381, %s395
    %p397 = scmp.eq.s32.totalorder %s30, 0
    %p398 = por %p396, %p397
    %s400 = sadd.s32 %s399, 1
    %p403 = scmp.eq.s32.totalorder %s24, 1
    %p404 = scmp.ne.s32.totalorder %s399, %s401
    %p405 = scmp.eq.s32.totalorder %s24, 0
    %p406 = por %p404, %p405
    %p407 = scmp.ne.s32.totalorder %s399, %s401
    %p408 = scmp.eq.s32.totalorder %s29, 1
    %p409 = por %p407, %p408
    %p410 = scmp.ne.s32.totalorder %s401, %s402
    %p411 = scmp.eq.s32.totalorder %s29, 0
    %p412 = por %p410, %p411
    %p413 = scmp.ne.s32.totalorder %s401, %s402
    %p414 = scmp.eq.s32.totalorder %s30, 1
    %p415 = por %p413, %p414
    %p417 = scmp.ne.s32.totalorder %s402, %s416
    %p418 = scmp.eq.s32.totalorder %s30, 0
    %p419 = por %p417, %p418
    %s420 = ssub.s32 %s24, %s31
    %p421 = scmp.eq.s32.totalorder %s420, 0
    %s423 = sadd.s32 %s422, 1
    %s424 = scalar_select %p421, %s422, %s423
    %p427 = pneg %p421
    %p428 = scmp.eq.s32.totalorder %s24, 1
    %p429 = por %p427, %p428
    %p430 = scmp.ne.s32.totalorder %s422, %s425
    %p431 = scmp.eq.s32.totalorder %s24, 0
    %p432 = por %p430, %p431
    %p433 = scmp.ne.s32.totalorder %s422, %s425
    %p434 = scmp.eq.s32.totalorder %s29, 1
    %p435 = por %p433, %p434
    %p436 = scmp.ne.s32.totalorder %s425, %s426
    %p437 = scmp.eq.s32.totalorder %s29, 0
    %p438 = por %p436, %p437
    %p439 = scmp.ne.s32.totalorder %s425, %s426
    %p440 = scmp.eq.s32.totalorder %s30, 1
    %p441 = por %p439, %p440
    %p443 = scmp.ne.s32.totalorder %s426, %s442
    %p444 = scmp.eq.s32.totalorder %s30, 0
    %p445 = por %p443, %p444
    %p446 = scmp.le.s32.totalorder 1, %s24
    %p447 = scmp.lt.s32.totalorder %s24, 3
    %p448 = pnand %p446, %p447
    %p449 = pneg %p448
    // Predicated region
    $region9: #{encoder_forward.4} parent=5 // pred_check
      _
    $region10: #{encoder_forward.4} parent=5 // pred_check_branch
      %451 = sbr.rel (%p448) target = $region12
    $region11: #{encoder_forward.4} parent=5 // pred_region
      %s452 = ssub.s32 %s24, 1
      // Predicated region
      $region13: #{encoder_forward.4} parent=11 // pred_check
        %p453 = pneg %p97
      $region14: #{encoder_forward.4} parent=11 // pred_check_branch
        %455 = sbr.rel (%p453) target = $region16
      $region15: #{encoder_forward.4} parent=11 // pred_region
        _
      $region16: #{encoder_forward.4} parent=11 // pred_fallthru
        _
      // Predicated region
      $region17: #{encoder_forward.4} parent=11 // pred_check
        %p456 = pneg %p118
      $region18: #{encoder_forward.4} parent=11 // pred_check_branch
        %458 = sbr.rel (%p456) target = $region20
      $region19: #{encoder_forward.4} parent=11 // pred_region
        _
      $region20: #{encoder_forward.4} parent=11 // pred_fallthru
        _
      // Predicated region
      $region21: #{encoder_forward.4} parent=11 // pred_check
        %p459 = pneg %p139
      $region22: #{encoder_forward.4} parent=11 // pred_check_branch
        %461 = sbr.rel (%p459) target = $region24
      $region23: #{encoder_forward.4} parent=11 // pred_region
        _
      $region24: #{encoder_forward.4} parent=11 // pred_fallthru
        _
      // Predicated region
      $region25: #{encoder_forward.4} parent=11 // pred_check
        %p462 = pneg %p160
      $region26: #{encoder_forward.4} parent=11 // pred_check_branch
        %464 = sbr.rel (%p462) target = $region28
      $region27: #{encoder_forward.4} parent=11 // pred_region
        _
      $region28: #{encoder_forward.4} parent=11 // pred_fallthru
        _
      // Predicated region
      $region29: #{encoder_forward.4} parent=11 // pred_check
        %p465 = pneg %p181
      $region30: #{encoder_forward.4} parent=11 // pred_check_branch
        %467 = sbr.rel (%p465) target = $region32
      $region31: #{encoder_forward.4} parent=11 // pred_region
        _
      $region32: #{encoder_forward.4} parent=11 // pred_fallthru
        _
      // Predicated region
      $region33: #{encoder_forward.4} parent=11 // pred_check
        %p468 = pneg %p202
      $region34: #{encoder_forward.4} parent=11 // pred_check_branch
        %470 = sbr.rel (%p468) target = $region36
      $region35: #{encoder_forward.4} parent=11 // pred_region
        _
      $region36: #{encoder_forward.4} parent=11 // pred_fallthru
        _
      // Predicated region
      $region37: #{encoder_forward.4} parent=11 // pred_check
        %p471 = pneg %p223
      $region38: #{encoder_forward.4} parent=11 // pred_check_branch
        %473 = sbr.rel (%p471) target = $region40
      $region39: #{encoder_forward.4} parent=11 // pred_region
        _
      $region40: #{encoder_forward.4} parent=11 // pred_fallthru
        _
      // Predicated region
      $region41: #{encoder_forward.4} parent=11 // pred_check
        %p474 = pneg %p244
      $region42: #{encoder_forward.4} parent=11 // pred_check_branch
        %476 = sbr.rel (%p474) target = $region44
      $region43: #{encoder_forward.4} parent=11 // pred_region
        _
      $region44: #{encoder_forward.4} parent=11 // pred_fallthru
        _
      // Predicated region
      $region45: #{encoder_forward.4} parent=11 // pred_check
        %p477 = pneg %p265
      $region46: #{encoder_forward.4} parent=11 // pred_check_branch
        %479 = sbr.rel (%p477) target = $region48
      $region47: #{encoder_forward.4} parent=11 // pred_region
        _
      $region48: #{encoder_forward.4} parent=11 // pred_fallthru
        _
      // Predicated region
      $region49: #{encoder_forward.4} parent=11 // pred_check
        %p480 = pneg %p286
      $region50: #{encoder_forward.4} parent=11 // pred_check_branch
        %482 = sbr.rel (%p480) target = $region52
      $region51: #{encoder_forward.4} parent=11 // pred_region
        _
      $region52: #{encoder_forward.4} parent=11 // pred_fallthru
        _
      // Predicated region
      $region53: #{encoder_forward.4} parent=11 // pred_check
        %p483 = pneg %p307
      $region54: #{encoder_forward.4} parent=11 // pred_check_branch
        %485 = sbr.rel (%p483) target = $region56
      $region55: #{encoder_forward.4} parent=11 // pred_region
        _
      $region56: #{encoder_forward.4} parent=11 // pred_fallthru
        _
      // Predicated region
      $region57: #{encoder_forward.4} parent=11 // pred_check
        %p486 = pneg %p328
      $region58: #{encoder_forward.4} parent=11 // pred_check_branch
        %488 = sbr.rel (%p486) target = $region60
      $region59: #{encoder_forward.4} parent=11 // pred_region
        _
      $region60: #{encoder_forward.4} parent=11 // pred_fallthru
        _
      // Predicated region
      $region61: #{encoder_forward.4} parent=11 // pred_check
        %p489 = pneg %p349
      $region62: #{encoder_forward.4} parent=11 // pred_check_branch
        %491 = sbr.rel (%p489) target = $region64
      $region63: #{encoder_forward.4} parent=11 // pred_region
        _
      $region64: #{encoder_forward.4} parent=11 // pred_fallthru
        _
      // Predicated region
      $region65: #{encoder_forward.4} parent=11 // pred_check
        %p492 = pneg %p370
      $region66: #{encoder_forward.4} parent=11 // pred_check_branch
        %494 = sbr.rel (%p492) target = $region68
      $region67: #{encoder_forward.4} parent=11 // pred_region
        _
      $region68: #{encoder_forward.4} parent=11 // pred_fallthru
        _
      // Predicated region
      $region69: #{encoder_forward.4} parent=11 // pred_check
        %p495 = pneg %p391
      $region70: #{encoder_forward.4} parent=11 // pred_check_branch
        %497 = sbr.rel (%p495) target = $region72
      $region71: #{encoder_forward.4} parent=11 // pred_region
        _
      $region72: #{encoder_forward.4} parent=11 // pred_fallthru
        _
      // Predicated region
      $region73: #{encoder_forward.4} parent=11 // pred_check
        %p498 = pneg %p412
      $region74: #{encoder_forward.4} parent=11 // pred_check_branch
        %500 = sbr.rel (%p498) target = $region76
      $region75: #{encoder_forward.4} parent=11 // pred_region
        _
      $region76: #{encoder_forward.4} parent=11 // pred_fallthru
        _
    $region12: #{encoder_forward.4} parent=5 // pred_fallthru
      _
    %p501 = scmp.lt.s32.totalorder %s24, 2
    // Predicated region
    $region77: #{encoder_forward.4} parent=5 // pred_check
      %p502 = pneg %p501
    $region78: #{encoder_forward.4} parent=5 // pred_check_branch
      %504 = sbr.rel (%p502) target = $region80
    $region79: #{encoder_forward.4} parent=5 // pred_region
      // Predicated region
      $region81: #{encoder_forward.4} parent=79 // pred_check
        %p505 = pneg %p44
      $region82: #{encoder_forward.4} parent=79 // pred_check_branch
        %507 = sbr.rel (%p505) target = $region84
      $region83: #{encoder_forward.4} parent=79 // pred_region
        %p508 = scmp.lt.s32.totalorder %s24, 1
        %s509 = scalar_select %p508, %s24, 1
        %s510 = smul.addr %s509, 8
        %s511 = scalar_lea.vmem %s0, %s510
      $region84: #{encoder_forward.4} parent=79 // pred_fallthru
        _
      // Predicated region
      $region85: #{encoder_forward.4} parent=79 // pred_check
        %p512 = pneg %p70
      $region86: #{encoder_forward.4} parent=79 // pred_check_branch
        %514 = sbr.rel (%p512) target = $region88
      $region87: #{encoder_forward.4} parent=79 // pred_region
        %p515 = scmp.lt.s32.totalorder %s24, 1
        %s516 = scalar_select %p515, %s24, 1
        %s517 = smul.addr %s516, 8
        %s518 = scalar_lea.vmem %s1, %s517
      $region88: #{encoder_forward.4} parent=79 // pred_fallthru
        _
    $region80: #{encoder_forward.4} parent=5 // pred_fallthru
      _
    %p519 = scmp.le.s32.totalorder 1, %s24
    %p520 = scmp.lt.s32.totalorder %s24, 3
    %p521 = pnand %p519, %p520
    %p522 = pneg %p521
    // Predicated region
    $region89: #{encoder_forward.4} parent=5 // pred_check
      _
    $region90: #{encoder_forward.4} parent=5 // pred_check_branch
      %524 = sbr.rel (%p521) target = $region92
    $region91: #{encoder_forward.4} parent=5 // pred_region
      %s525 = ssub.s32 %s24, 1
      %p526 = scmp.lt.s32.totalorder %s29, 1
      %s527 = scalar_select %p526, %s29, 1
      %s528 = smul.addr %s527, 8
      %s529 = scalar_lea.vmem %s0, %s528
      %p530 = pneg %p50
      %p531 = pneg %p47
      %p532 = scmp.lt.s32.totalorder %s29, 1
      %s533 = scalar_select %p532, %s29, 1
      %s534 = smul.addr %s533, 8
      %s535 = scalar_lea.vmem %s1, %s534
      %p536 = pneg %p76
      %p537 = pneg %p73
      %p538 = pneg %p97
      %p539 = pneg %p94
      %p540 = pneg %p118
      %p541 = pneg %p115
      %p542 = pneg %p139
      %p543 = pneg %p136
      %p544 = pneg %p160
      %p545 = pneg %p157
      %p546 = pneg %p181
      %p547 = pneg %p178
      %p548 = pneg %p202
      %p549 = pneg %p199
      %p550 = pneg %p223
      %p551 = pneg %p220
      %p552 = pneg %p244
      %p553 = pneg %p241
      %p554 = pneg %p265
      %p555 = pneg %p262
      %p556 = pneg %p286
      %p557 = pneg %p283
      %p558 = pneg %p307
      %p559 = pneg %p304
      %p560 = pneg %p328
      %p561 = pneg %p325
      %p562 = pneg %p349
      %p563 = pneg %p346
      %p564 = pneg %p370
      %p565 = pneg %p367
      %p566 = pneg %p391
      %p567 = pneg %p388
      %p568 = pneg %p412
      %p569 = pneg %p409
      %p570 = pneg %p438
      %p571 = pneg %p435
      %p572 = scmp.lt.s32.totalorder %s29, 1
      %s573 = scalar_select %p572, %s29, 1
      %s574 = smul.addr %s573, 8
      %s575 = scalar_lea.vmem %s18, %s574
      %p576 = scmp.lt.s32.totalorder %s29, 1
      %s577 = scalar_select %p576, %s29, 1
      %s578 = smul.addr %s577, 8
      %s579 = scalar_lea.vmem %s0, %s578
      %p580 = scmp.lt.s32.totalorder %s29, 1
      %s581 = scalar_select %p580, %s29, 1
      %s582 = smul.addr %s581, 8
      %s583 = scalar_lea.vmem %s1, %s582
      %p584 = scmp.lt.s32.totalorder %s29, 1
      %s585 = scalar_select %p584, %s29, 1
      %s586 = smul.addr %s585, 8
      %s587 = scalar_lea.vmem %s18, %s586
      %v588 = vld [vmem:[%s579] sm:$0xff]
      %v589 = vld [vmem:[%s583] sm:$0xff]
      %v590 = vld [vmem:[%s2] sm:$0xff]
      %v591 = vld [vmem:[%s2 + $0x8] sm:$0xff]
      %v592 = vld [vmem:[%s2 + $0x10] sm:$0xff]
      %v593 = vld [vmem:[%s2 + $0x18] sm:$0xff]
      %v594 = vld [vmem:[%s3] sm:$0x1]
      %v596 = vperm.slane %v594, 0
      %vm598 = vcmask 261120
      %v600 = vsel %vm598, %v588, 0
      %602 = vmatpush.msra.mxu0 0.0
      %603 = vmatpush.msra.mxu0 0.0
      %604 = vmatpush.msra.mxu0 0.0
      %605 = vmatpush.msra.mxu0 0.0
      %606 = vmatpush.msra.mxu0 0.0
      %607 = vmatpush.msra.mxu0 0.0
      %608 = vmatpush.msra.mxu0 0.0
      %609 = vmatpush.msra.mxu0 0.0
      %610 = vmatpush.msra.mxu0 0.0
      %611 = vmatpush.msra.mxu0 0.0
      %612 = vmatpush.msra.mxu0 0.0
      %613 = vmatpush.msra.mxu0 0.0
      %614 = vmatpush.msra.mxu0 %v593
      %615 = vmatpush.msra.mxu0 %v592
      %616 = vmatpush.msra.mxu0 %v591
      %617 = vmatpush.msra.mxu0 %v590
      %618 = vmatmul.f32.gmra.mxu0 %v600
      %v619 = vpop.f32.mrf.mxu0
      %v620 = vadd.f32 %v596, %v619
      %621 = vdwg.mxu0
      %v622 = vld [vmem:[%s4] sm:$0xff]
      %v623 = vld [vmem:[%s4 + $0x8] sm:$0xff]
      %v624 = vld [vmem:[%s4 + $0x10] sm:$0xff]
      %v625 = vld [vmem:[%s4 + $0x18] sm:$0xff]
      %v626 = vld [vmem:[%s5] sm:$0x1]
      %v628 = vperm.slane %v626, 0
      %630 = vmatpush.msra.mxu0 0.0
      %631 = vmatpush.msra.mxu0 0.0
      %632 = vmatpush.msra.mxu0 0.0
      %633 = vmatpush.msra.mxu0 0.0
      %634 = vmatpush.msra.mxu0 0.0
      %635 = vmatpush.msra.mxu0 0.0
      %636 = vmatpush.msra.mxu0 0.0
      %637 = vmatpush.msra.mxu0 0.0
      %638 = vmatpush.msra.mxu0 0.0
      %639 = vmatpush.msra.mxu0 0.0
      %640 = vmatpush.msra.mxu0 0.0
      %641 = vmatpush.msra.mxu0 0.0
      %642 = vmatpush.msra.mxu0 %v625
      %643 = vmatpush.msra.mxu0 %v624
      %644 = vmatpush.msra.mxu0 %v623
      %645 = vmatpush.msra.mxu0 %v622
      %646 = vmatmul.f32.gmra.mxu0 %v600
      %v647 = vpop.f32.mrf.mxu0
      %v648 = vadd.f32 %v628, %v647
      %649 = vdwg.mxu0
      %v650 = vld [vmem:[%s6] sm:$0xff]
      %v651 = vld [vmem:[%s6 + $0x8] sm:$0xff]
      %v652 = vld [vmem:[%s6 + $0x10] sm:$0xff]
      %v653 = vld [vmem:[%s6 + $0x18] sm:$0xff]
      %v654 = vld [vmem:[%s7] sm:$0x1]
      %v656 = vperm.slane %v654, 0
      %658 = vmatpush.msra.mxu0 0.0
      %659 = vmatpush.msra.mxu0 0.0
      %660 = vmatpush.msra.mxu0 0.0
      %661 = vmatpush.msra.mxu0 0.0
      %662 = vmatpush.msra.mxu0 0.0
      %663 = vmatpush.msra.mxu0 0.0
      %664 = vmatpush.msra.mxu0 0.0
      %665 = vmatpush.msra.mxu0 0.0
      %666 = vmatpush.msra.mxu0 0.0
      %667 = vmatpush.msra.mxu0 0.0
      %668 = vmatpush.msra.mxu0 0.0
      %669 = vmatpush.msra.mxu0 0.0
      %670 = vmatpush.msra.mxu0 %v653
      %671 = vmatpush.msra.mxu0 %v652
      %672 = vmatpush.msra.mxu0 %v651
      %673 = vmatpush.msra.mxu0 %v650
      %674 = vmatmul.f32.gmra.mxu0 %v600
      %v675 = vpop.f32.mrf.mxu0
      %v676 = vadd.f32 %v656, %v675
      %677 = vdwg.mxu0
      %vm678 = vcmask 64512
      %v680 = vsel %vm678, %v620, 0
      %v683 = vsel %vm678, %v648, 0
      %685 = vmatpush.xpose.msra.mxu0 0.0
      %686 = vmatpush.xpose.msra.mxu0 0.0
      %687 = vmatpush.xpose.msra.mxu0 0.0
      %688 = vmatpush.xpose.msra.mxu0 0.0
      %689 = vmatpush.xpose.msra.mxu0 0.0
      %690 = vmatpush.xpose.msra.mxu0 0.0
      %691 = vmatpush.xpose.msra.mxu0 0.0
      %692 = vmatpush.xpose.msra.mxu0 0.0
      %693 = vmatpush.xpose.msra.mxu0 0.0
      %694 = vmatpush.xpose.msra.mxu0 0.0
      %695 = vmatpush.xpose.msra.mxu0 0.0
      %696 = vmatpush.xpose.msra.mxu0 0.0
      %697 = vmatpush.xpose.msra.mxu0 0.0
      %698 = vmatpush.xpose.msra.mxu0 0.0
      %699 = vmatpush.xpose.msra.mxu0 0.0
      %700 = vmatpush.xpose.msra.mxu0 %v683
      %701 = vmatmul.f32.gmra.mxu0 %v680
      %v702 = vpop.f32.mrf.mxu0
      %v703 = vadd.f32 0.0, %v702
      %704 = vdwg.mxu0
      %v705 = vmul.f32 %v703, 0.35355338
      %vm706 = vcmp.ne.f32.partialorder %v589, 0.0
      %v707 = vsel %vm706, %v705, -1e+09
      %v708 = vsel %vm678, %v707, -inf
      %709 = vmax.xlane.f32.xlu0 %v708
      %v710 = vpop.xlane.xlu0 %709
      %v711 = vsub.f32 %v707, %v710
      %v712 = vmul.f32 %v711, 1.442695
      %v713 = vpow.pop %v712
      %v714 = vsel %vm678, %v713, 0.0
      %715 = vadd.xlane.f32.xlu0 %v714
      %v716 = vpop.xlane.xlu0 %715
      %v717 = vrcp.pop %v716
      %v718 = vmul.f32 %v716, %v717
      %v719 = vsub.f32 1.0, %v718
      %v720 = vmul.f32 %v717, %v719
      %v721 = vadd.f32 %v717, %v720
      %vm722 = vweird.f32 %v716
      %vm723 = vweird.f32 %v717
      %vm724 = vmor %vm722, %vm723
      %v725 = vsel %vm724, %v717, %v721
      %v726 = vand.u32 2147483647, %v716
      %vm727 = vcmp.eq.f32.partialorder %v726, 8.507059e+37
      %v728 = vand.u32 %v716, 2147483648
      %v729 = vor.u32 1.1754944e-38, %v728
      %v730 = vsel %vm727, %v729, %v725
      %v731 = vmul.f32 %v713, %v730
      %v733 = vsel %vm678, %v731, 0
      %735 = vmatpush.msra.mxu0 0.0
      %736 = vmatpush.msra.mxu0 0.0
      %737 = vmatpush.msra.mxu0 0.0
      %738 = vmatpush.msra.mxu0 0.0
      %739 = vmatpush.msra.mxu0 0.0
      %740 = vmatpush.msra.mxu0 0.0
      %741 = vmatpush.msra.mxu0 0.0
      %742 = vmatpush.msra.mxu0 0.0
      %743 = vmatpush.msra.mxu0 0.0
      %744 = vmatpush.msra.mxu0 0.0
      %745 = vmatpush.msra.mxu0 0.0
      %746 = vmatpush.msra.mxu0 0.0
      %747 = vmatpush.msra.mxu0 0.0
      %748 = vmatpush.msra.mxu0 0.0
      %749 = vmatpush.msra.mxu0 0.0
      %750 = vmatpush.msra.mxu0 %v676
      %751 = vmatmul.f32.gmra.mxu0 %v733
      %v752 = vpop.f32.mrf.mxu0
      %v753 = vadd.f32 0.0, %v752
      %754 = vdwg.mxu0
      %v755 = vld [vmem:[%s8] sm:$0xff]
      %s756 = scalar_lea.vmem %s2, 32
      %v757 = vld [vmem:[%s756] sm:$0xff]
      %v758 = vld [vmem:[%s756 + $0x8] sm:$0xff]
      %v759 = vld [vmem:[%s756 + $0x10] sm:$0xff]
      %v760 = vld [vmem:[%s756 + $0x18] sm:$0xff]
      %s761 = scalar_lea.vmem %s3, 1
      %v762 = vld [vmem:[%s761] sm:$0x1]
      %v764 = vperm.slane %v762, 0
      %766 = vmatpush.msra.mxu0 0.0
      %767 = vmatpush.msra.mxu0 0.0
      %768 = vmatpush.msra.mxu0 0.0
      %769 = vmatpush.msra.mxu0 0.0
      %770 = vmatpush.msra.mxu0 0.0
      %771 = vmatpush.msra.mxu0 0.0
      %772 = vmatpush.msra.mxu0 0.0
      %773 = vmatpush.msra.mxu0 0.0
      %774 = vmatpush.msra.mxu0 0.0
      %775 = vmatpush.msra.mxu0 0.0
      %776 = vmatpush.msra.mxu0 0.0
      %777 = vmatpush.msra.mxu0 0.0
      %778 = vmatpush.msra.mxu0 %v760
      %779 = vmatpush.msra.mxu0 %v759
      %780 = vmatpush.msra.mxu0 %v758
      %781 = vmatpush.msra.mxu0 %v757
      %782 = vmatmul.f32.gmra.mxu0 %v600
      %v783 = vpop.f32.mrf.mxu0
      %v784 = vadd.f32 %v764, %v783
      %785 = vdwg.mxu0
      %s786 = scalar_lea.vmem %s4, 32
      %v787 = vld [vmem:[%s786] sm:$0xff]
      %v788 = vld [vmem:[%s786 + $0x8] sm:$0xff]
      %v789 = vld [vmem:[%s786 + $0x10] sm:$0xff]
      %v790 = vld [vmem:[%s786 + $0x18] sm:$0xff]
      %s791 = scalar_lea.vmem %s5, 1
      %v792 = vld [vmem:[%s791] sm:$0x1]
      %v794 = vperm.slane %v792, 0
      %796 = vmatpush.msra.mxu0 0.0
      %797 = vmatpush.msra.mxu0 0.0
      %798 = vmatpush.msra.mxu0 0.0
      %799 = vmatpush.msra.mxu0 0.0
      %800 = vmatpush.msra.mxu0 0.0
      %801 = vmatpush.msra.mxu0 0.0
      %802 = vmatpush.msra.mxu0 0.0
      %803 = vmatpush.msra.mxu0 0.0
      %804 = vmatpush.msra.mxu0 0.0
      %805 = vmatpush.msra.mxu0 0.0
      %806 = vmatpush.msra.mxu0 0.0
      %807 = vmatpush.msra.mxu0 0.0
      %808 = vmatpush.msra.mxu0 %v790
      %809 = vmatpush.msra.mxu0 %v789
      %810 = vmatpush.msra.mxu0 %v788
      %811 = vmatpush.msra.mxu0 %v787
      %812 = vmatmul.f32.gmra.mxu0 %v600
      %v813 = vpop.f32.mrf.mxu0
      %v814 = vadd.f32 %v794, %v813
      %815 = vdwg.mxu0
      %s816 = scalar_lea.vmem %s6, 32
      %v817 = vld [vmem:[%s816] sm:$0xff]
      %v818 = vld [vmem:[%s816 + $0x8] sm:$0xff]
      %v819 = vld [vmem:[%s816 + $0x10] sm:$0xff]
      %v820 = vld [vmem:[%s816 + $0x18] sm:$0xff]
      %s821 = scalar_lea.vmem %s7, 1
      %v822 = vld [vmem:[%s821] sm:$0x1]
      %v824 = vperm.slane %v822, 0
      %826 = vmatpush.msra.mxu0 0.0
      %827 = vmatpush.msra.mxu0 0.0
      %828 = vmatpush.msra.mxu0 0.0
      %829 = vmatpush.msra.mxu0 0.0
      %830 = vmatpush.msra.mxu0 0.0
      %831 = vmatpush.msra.mxu0 0.0
      %832 = vmatpush.msra.mxu0 0.0
      %833 = vmatpush.msra.mxu0 0.0
      %834 = vmatpush.msra.mxu0 0.0
      %835 = vmatpush.msra.mxu0 0.0
      %836 = vmatpush.msra.mxu0 0.0
      %837 = vmatpush.msra.mxu0 0.0
      %838 = vmatpush.msra.mxu0 %v820
      %839 = vmatpush.msra.mxu0 %v819
      %840 = vmatpush.msra.mxu0 %v818
      %841 = vmatpush.msra.mxu0 %v817
      %842 = vmatmul.f32.gmra.mxu0 %v600
      %v843 = vpop.f32.mrf.mxu0
      %v844 = vadd.f32 %v824, %v843
      %845 = vdwg.mxu0
      %v847 = vsel %vm678, %v784, 0
      %v850 = vsel %vm678, %v814, 0
      %852 = vmatpush.xpose.msra.mxu0 0.0
      %853 = vmatpush.xpose.msra.mxu0 0.0
      %854 = vmatpush.xpose.msra.mxu0 0.0
      %855 = vmatpush.xpose.msra.mxu0 0.0
      %856 = vmatpush.xpose.msra.mxu0 0.0
      %857 = vmatpush.xpose.msra.mxu0 0.0
      %858 = vmatpush.xpose.msra.mxu0 0.0
      %859 = vmatpush.xpose.msra.mxu0 0.0
      %860 = vmatpush.xpose.msra.mxu0 0.0
      %861 = vmatpush.xpose.msra.mxu0 0.0
      %862 = vmatpush.xpose.msra.mxu0 0.0
      %863 = vmatpush.xpose.msra.mxu0 0.0
      %864 = vmatpush.xpose.msra.mxu0 0.0
      %865 = vmatpush.xpose.msra.mxu0 0.0
      %866 = vmatpush.xpose.msra.mxu0 0.0
      %867 = vmatpush.xpose.msra.mxu0 %v850
      %868 = vmatmul.f32.gmra.mxu0 %v847
      %v869 = vpop.f32.mrf.mxu0
      %v870 = vadd.f32 0.0, %v869
      %871 = vdwg.mxu0
      %v872 = vmul.f32 %v870, 0.35355338
      %v873 = vsel %vm706, %v872, -1e+09
      %v874 = vsel %vm678, %v873, -inf
      %875 = vmax.xlane.f32.xlu0 %v874
      %v876 = vpop.xlane.xlu0 %875
      %v877 = vsub.f32 %v873, %v876
      %v878 = vmul.f32 %v877, 1.442695
      %v879 = vpow.pop %v878
      %v880 = vsel %vm678, %v879, 0.0
      %881 = vadd.xlane.f32.xlu0 %v880
      %v882 = vpop.xlane.xlu0 %881
      %v883 = vrcp.pop %v882
      %v884 = vmul.f32 %v882, %v883
      %v885 = vsub.f32 1.0, %v884
      %v886 = vmul.f32 %v883, %v885
      %v887 = vadd.f32 %v883, %v886
      %vm888 = vweird.f32 %v882
      %vm889 = vweird.f32 %v883
      %vm890 = vmor %vm888, %vm889
      %v891 = vsel %vm890, %v883, %v887
      %v892 = vand.u32 2147483647, %v882
      %vm893 = vcmp.eq.f32.partialorder %v892, 8.507059e+37
      %v894 = vand.u32 %v882, 2147483648
      %v895 = vor.u32 1.1754944e-38, %v894
      %v896 = vsel %vm893, %v895, %v891
      %v897 = vmul.f32 %v879, %v896
      %v899 = vsel %vm678, %v897, 0
      %901 = vmatpush.msra.mxu0 0.0
      %902 = vmatpush.msra.mxu0 0.0
      %903 = vmatpush.msra.mxu0 0.0
      %904 = vmatpush.msra.mxu0 0.0
      %905 = vmatpush.msra.mxu0 0.0
      %906 = vmatpush.msra.mxu0 0.0
      %907 = vmatpush.msra.mxu0 0.0
      %908 = vmatpush.msra.mxu0 0.0
      %909 = vmatpush.msra.mxu0 0.0
      %910 = vmatpush.msra.mxu0 0.0
      %911 = vmatpush.msra.mxu0 0.0
      %912 = vmatpush.msra.mxu0 0.0
      %913 = vmatpush.msra.mxu0 0.0
      %914 = vmatpush.msra.mxu0 0.0
      %915 = vmatpush.msra.mxu0 0.0
      %916 = vmatpush.msra.mxu0 %v844
      %917 = vmatmul.f32.gmra.mxu0 %v899
      %v918 = vpop.f32.mrf.mxu0
      %v919 = vadd.f32 0.0, %v918
      %920 = vdwg.mxu0
      %s921 = scalar_lea.vmem %s8, 8
      %v922 = vld [vmem:[%s921] sm:$0xff]
      %v924 = vsel %vm678, %v919, 0
      %926 = vmatpush.msra.mxu0 0.0
      %927 = vmatpush.msra.mxu0 0.0
      %928 = vmatpush.msra.mxu0 0.0
      %929 = vmatpush.msra.mxu0 0.0
      %930 = vmatpush.msra.mxu0 0.0
      %931 = vmatpush.msra.mxu0 0.0
      %932 = vmatpush.msra.mxu0 0.0
      %933 = vmatpush.msra.mxu0 0.0
      %934 = vmatpush.msra.mxu0 0.0
      %935 = vmatpush.msra.mxu0 0.0
      %936 = vmatpush.msra.mxu0 0.0
      %937 = vmatpush.msra.mxu0 0.0
      %938 = vmatpush.msra.mxu0 0.0
      %939 = vmatpush.msra.mxu0 0.0
      %940 = vmatpush.msra.mxu0 0.0
      %941 = vmatpush.msra.mxu0 %v922
      %942 = vmatmul.f32.gmra.mxu0 %v924
      %v943 = vpop.f32.mrf.mxu0
      %v944 = vadd.f32 0.0, %v943
      %945 = vdwg.mxu0
      %v947 = vsel %vm678, %v753, 0
      %949 = vmatpush.msra.mxu0 0.0
      %950 = vmatpush.msra.mxu0 0.0
      %951 = vmatpush.msra.mxu0 0.0
      %952 = vmatpush.msra.mxu0 0.0
      %953 = vmatpush.msra.mxu0 0.0
      %954 = vmatpush.msra.mxu0 0.0
      %955 = vmatpush.msra.mxu0 0.0
      %956 = vmatpush.msra.mxu0 0.0
      %957 = vmatpush.msra.mxu0 0.0
      %958 = vmatpush.msra.mxu0 0.0
      %959 = vmatpush.msra.mxu0 0.0
      %960 = vmatpush.msra.mxu0 0.0
      %961 = vmatpush.msra.mxu0 0.0
      %962 = vmatpush.msra.mxu0 0.0
      %963 = vmatpush.msra.mxu0 0.0
      %964 = vmatpush.msra.mxu0 %v755
      %965 = vmatmul.f32.gmra.mxu0 %v947
      %v966 = vpop.f32.mrf.mxu0
      %v967 = vadd.f32 %v944, %v966
      %968 = vdwg.mxu0
      %s969 = scalar_lea.vmem %s2, 64
      %v970 = vld [vmem:[%s969] sm:$0xff]
      %v971 = vld [vmem:[%s969 + $0x8] sm:$0xff]
      %v972 = vld [vmem:[%s969 + $0x10] sm:$0xff]
      %v973 = vld [vmem:[%s969 + $0x18] sm:$0xff]
      %s974 = scalar_lea.vmem %s3, 2
      %v975 = vld [vmem:[%s974] sm:$0x1]
      %v977 = vperm.slane %v975, 0
      %979 = vmatpush.msra.mxu0 0.0
      %980 = vmatpush.msra.mxu0 0.0
      %981 = vmatpush.msra.mxu0 0.0
      %982 = vmatpush.msra.mxu0 0.0
      %983 = vmatpush.msra.mxu0 0.0
      %984 = vmatpush.msra.mxu0 0.0
      %985 = vmatpush.msra.mxu0 0.0
      %986 = vmatpush.msra.mxu0 0.0
      %987 = vmatpush.msra.mxu0 0.0
      %988 = vmatpush.msra.mxu0 0.0
      %989 = vmatpush.msra.mxu0 0.0
      %990 = vmatpush.msra.mxu0 0.0
      %991 = vmatpush.msra.mxu0 %v973
      %992 = vmatpush.msra.mxu0 %v972
      %993 = vmatpush.msra.mxu0 %v971
      %994 = vmatpush.msra.mxu0 %v970
      %995 = vmatmul.f32.gmra.mxu0 %v600
      %v996 = vpop.f32.mrf.mxu0
      %v997 = vadd.f32 %v977, %v996
      %998 = vdwg.mxu0
      %s999 = scalar_lea.vmem %s4, 64
      %v1000 = vld [vmem:[%s999] sm:$0xff]
      %v1001 = vld [vmem:[%s999 + $0x8] sm:$0xff]
      %v1002 = vld [vmem:[%s999 + $0x10] sm:$0xff]
      %v1003 = vld [vmem:[%s999 + $0x18] sm:$0xff]
      %s1004 = scalar_lea.vmem %s5, 2
      %v1005 = vld [vmem:[%s1004] sm:$0x1]
      %v1007 = vperm.slane %v1005, 0
      %1009 = vmatpush.msra.mxu0 0.0
      %1010 = vmatpush.msra.mxu0 0.0
      %1011 = vmatpush.msra.mxu0 0.0
      %1012 = vmatpush.msra.mxu0 0.0
      %1013 = vmatpush.msra.mxu0 0.0
      %1014 = vmatpush.msra.mxu0 0.0
      %1015 = vmatpush.msra.mxu0 0.0
      %1016 = vmatpush.msra.mxu0 0.0
      %1017 = vmatpush.msra.mxu0 0.0
      %1018 = vmatpush.msra.mxu0 0.0
      %1019 = vmatpush.msra.mxu0 0.0
      %1020 = vmatpush.msra.mxu0 0.0
      %1021 = vmatpush.msra.mxu0 %v1003
      %1022 = vmatpush.msra.mxu0 %v1002
      %1023 = vmatpush.msra.mxu0 %v1001
      %1024 = vmatpush.msra.mxu0 %v1000
      %1025 = vmatmul.f32.gmra.mxu0 %v600
      %v1026 = vpop.f32.mrf.mxu0
      %v1027 = vadd.f32 %v1007, %v1026
      %1028 = vdwg.mxu0
      %s1029 = scalar_lea.vmem %s6, 64
      %v1030 = vld [vmem:[%s1029] sm:$0xff]
      %v1031 = vld [vmem:[%s1029 + $0x8] sm:$0xff]
      %v1032 = vld [vmem:[%s1029 + $0x10] sm:$0xff]
      %v1033 = vld [vmem:[%s1029 + $0x18] sm:$0xff]
      %s1034 = scalar_lea.vmem %s7, 2
      %v1035 = vld [vmem:[%s1034] sm:$0x1]
      %v1037 = vperm.slane %v1035, 0
      %1039 = vmatpush.msra.mxu0 0.0
      %1040 = vmatpush.msra.mxu0 0.0
      %1041 = vmatpush.msra.mxu0 0.0
      %1042 = vmatpush.msra.mxu0 0.0
      %1043 = vmatpush.msra.mxu0 0.0
      %1044 = vmatpush.msra.mxu0 0.0
      %1045 = vmatpush.msra.mxu0 0.0
      %1046 = vmatpush.msra.mxu0 0.0
      %1047 = vmatpush.msra.mxu0 0.0
      %1048 = vmatpush.msra.mxu0 0.0
      %1049 = vmatpush.msra.mxu0 0.0
      %1050 = vmatpush.msra.mxu0 0.0
      %1051 = vmatpush.msra.mxu0 %v1033
      %1052 = vmatpush.msra.mxu0 %v1032
      %1053 = vmatpush.msra.mxu0 %v1031
      %1054 = vmatpush.msra.mxu0 %v1030
      %1055 = vmatmul.f32.gmra.mxu0 %v600
      %v1056 = vpop.f32.mrf.mxu0
      %v1057 = vadd.f32 %v1037, %v1056
      %1058 = vdwg.mxu0
      %v1060 = vsel %vm678, %v997, 0
      %v1063 = vsel %vm678, %v1027, 0
      %1065 = vmatpush.xpose.msra.mxu0 0.0
      %1066 = vmatpush.xpose.msra.mxu0 0.0
      %1067 = vmatpush.xpose.msra.mxu0 0.0
      %1068 = vmatpush.xpose.msra.mxu0 0.0
      %1069 = vmatpush.xpose.msra.mxu0 0.0
      %1070 = vmatpush.xpose.msra.mxu0 0.0
      %1071 = vmatpush.xpose.msra.mxu0 0.0
      %1072 = vmatpush.xpose.msra.mxu0 0.0
      %1073 = vmatpush.xpose.msra.mxu0 0.0
      %1074 = vmatpush.xpose.msra.mxu0 0.0
      %1075 = vmatpush.xpose.msra.mxu0 0.0
      %1076 = vmatpush.xpose.msra.mxu0 0.0
      %1077 = vmatpush.xpose.msra.mxu0 0.0
      %1078 = vmatpush.xpose.msra.mxu0 0.0
      %1079 = vmatpush.xpose.msra.mxu0 0.0
      %1080 = vmatpush.xpose.msra.mxu0 %v1063
      %1081 = vmatmul.f32.gmra.mxu0 %v1060
      %v1082 = vpop.f32.mrf.mxu0
      %v1083 = vadd.f32 0.0, %v1082
      %1084 = vdwg.mxu0
      %v1085 = vmul.f32 %v1083, 0.35355338
      %v1086 = vsel %vm706, %v1085, -1e+09
      %v1087 = vsel %vm678, %v1086, -inf
      %1088 = vmax.xlane.f32.xlu0 %v1087
      %v1089 = vpop.xlane.xlu0 %1088
      %v1090 = vsub.f32 %v1086, %v1089
      %v1091 = vmul.f32 %v1090, 1.442695
      %v1092 = vpow.pop %v1091
      %v1093 = vsel %vm678, %v1092, 0.0
      %1094 = vadd.xlane.f32.xlu0 %v1093
      %v1095 = vpop.xlane.xlu0 %1094
      %v1096 = vrcp.pop %v1095
      %v1097 = vmul.f32 %v1095, %v1096
      %v1098 = vsub.f32 1.0, %v1097
      %v1099 = vmul.f32 %v1096, %v1098
      %v1100 = vadd.f32 %v1096, %v1099
      %vm1101 = vweird.f32 %v1095
      %vm1102 = vweird.f32 %v1096
      %vm1103 = vmor %vm1101, %vm1102
      %v1104 = vsel %vm1103, %v1096, %v1100
      %v1105 = vand.u32 2147483647, %v1095
      %vm1106 = vcmp.eq.f32.partialorder %v1105, 8.507059e+37
      %v1107 = vand.u32 %v1095, 2147483648
      %v1108 = vor.u32 1.1754944e-38, %v1107
      %v1109 = vsel %vm1106, %v1108, %v1104
      %v1110 = vmul.f32 %v1092, %v1109
      %v1112 = vsel %vm678, %v1110, 0
      %1114 = vmatpush.msra.mxu0 0.0
      %1115 = vmatpush.msra.mxu0 0.0
      %1116 = vmatpush.msra.mxu0 0.0
      %1117 = vmatpush.msra.mxu0 0.0
      %1118 = vmatpush.msra.mxu0 0.0
      %1119 = vmatpush.msra.mxu0 0.0
      %1120 = vmatpush.msra.mxu0 0.0
      %1121 = vmatpush.msra.mxu0 0.0
      %1122 = vmatpush.msra.mxu0 0.0
      %1123 = vmatpush.msra.mxu0 0.0
      %1124 = vmatpush.msra.mxu0 0.0
      %1125 = vmatpush.msra.mxu0 0.0
      %1126 = vmatpush.msra.mxu0 0.0
      %1127 = vmatpush.msra.mxu0 0.0
      %1128 = vmatpush.msra.mxu0 0.0
      %1129 = vmatpush.msra.mxu0 %v1057
      %1130 = vmatmul.f32.gmra.mxu0 %v1112
      %v1131 = vpop.f32.mrf.mxu0
      %v1132 = vadd.f32 0.0, %v1131
      %1133 = vdwg.mxu0
      %s1134 = scalar_lea.vmem %s8, 16
      %v1135 = vld [vmem:[%s1134] sm:$0xff]
      %v1137 = vsel %vm678, %v1132, 0
      %1139 = vmatpush.msra.mxu0 0.0
      %1140 = vmatpush.msra.mxu0 0.0
      %1141 = vmatpush.msra.mxu0 0.0
      %1142 = vmatpush.msra.mxu0 0.0
      %1143 = vmatpush.msra.mxu0 0.0
      %1144 = vmatpush.msra.mxu0 0.0
      %1145 = vmatpush.msra.mxu0 0.0
      %1146 = vmatpush.msra.mxu0 0.0
      %1147 = vmatpush.msra.mxu0 0.0
      %1148 = vmatpush.msra.mxu0 0.0
      %1149 = vmatpush.msra.mxu0 0.0
      %1150 = vmatpush.msra.mxu0 0.0
      %1151 = vmatpush.msra.mxu0 0.0
      %1152 = vmatpush.msra.mxu0 0.0
      %1153 = vmatpush.msra.mxu0 0.0
      %1154 = vmatpush.msra.mxu0 %v1135
      %1155 = vmatmul.f32.gmra.mxu0 %v1137
      %v1156 = vpop.f32.mrf.mxu0
      %v1157 = vadd.f32 0.0, %v1156
      %1158 = vdwg.mxu0
      %v1159 = vadd.f32 %v967, %v1157
      %s1160 = scalar_lea.vmem %s2, 96
      %v1161 = vld [vmem:[%s1160] sm:$0xff]
      %v1162 = vld [vmem:[%s1160 + $0x8] sm:$0xff]
      %v1163 = vld [vmem:[%s1160 + $0x10] sm:$0xff]
      %v1164 = vld [vmem:[%s1160 + $0x18] sm:$0xff]
      %s1165 = scalar_lea.vmem %s3, 3
      %v1166 = vld [vmem:[%s1165] sm:$0x1]
      %v1168 = vperm.slane %v1166, 0
      %1170 = vmatpush.msra.mxu0 0.0
      %1171 = vmatpush.msra.mxu0 0.0
      %1172 = vmatpush.msra.mxu0 0.0
      %1173 = vmatpush.msra.mxu0 0.0
      %1174 = vmatpush.msra.mxu0 0.0
      %1175 = vmatpush.msra.mxu0 0.0
      %1176 = vmatpush.msra.mxu0 0.0
      %1177 = vmatpush.msra.mxu0 0.0
      %1178 = vmatpush.msra.mxu0 0.0
      %1179 = vmatpush.msra.mxu0 0.0
      %1180 = vmatpush.msra.mxu0 0.0
      %1181 = vmatpush.msra.mxu0 0.0
      %1182 = vmatpush.msra.mxu0 %v1164
      %1183 = vmatpush.msra.mxu0 %v1163
      %1184 = vmatpush.msra.mxu0 %v1162
      %1185 = vmatpush.msra.mxu0 %v1161
      %1186 = vmatmul.f32.gmra.mxu0 %v600
      %v1187 = vpop.f32.mrf.mxu0
      %v1188 = vadd.f32 %v1168, %v1187
      %1189 = vdwg.mxu0
      %s1190 = scalar_lea.vmem %s4, 96
      %v1191 = vld [vmem:[%s1190] sm:$0xff]
      %v1192 = vld [vmem:[%s1190 + $0x8] sm:$0xff]
      %v1193 = vld [vmem:[%s1190 + $0x10] sm:$0xff]
      %v1194 = vld [vmem:[%s1190 + $0x18] sm:$0xff]
      %s1195 = scalar_lea.vmem %s5, 3
      %v1196 = vld [vmem:[%s1195] sm:$0x1]
      %v1198 = vperm.slane %v1196, 0
      %1200 = vmatpush.msra.mxu0 0.0
      %1201 = vmatpush.msra.mxu0 0.0
      %1202 = vmatpush.msra.mxu0 0.0
      %1203 = vmatpush.msra.mxu0 0.0
      %1204 = vmatpush.msra.mxu0 0.0
      %1205 = vmatpush.msra.mxu0 0.0
      %1206 = vmatpush.msra.mxu0 0.0
      %1207 = vmatpush.msra.mxu0 0.0
      %1208 = vmatpush.msra.mxu0 0.0
      %1209 = vmatpush.msra.mxu0 0.0
      %1210 = vmatpush.msra.mxu0 0.0
      %1211 = vmatpush.msra.mxu0 0.0
      %1212 = vmatpush.msra.mxu0 %v1194
      %1213 = vmatpush.msra.mxu0 %v1193
      %1214 = vmatpush.msra.mxu0 %v1192
      %1215 = vmatpush.msra.mxu0 %v1191
      %1216 = vmatmul.f32.gmra.mxu0 %v600
      %v1217 = vpop.f32.mrf.mxu0
      %v1218 = vadd.f32 %v1198, %v1217
      %1219 = vdwg.mxu0
      %s1220 = scalar_lea.vmem %s6, 96
      %v1221 = vld [vmem:[%s1220] sm:$0xff]
      %v1222 = vld [vmem:[%s1220 + $0x8] sm:$0xff]
      %v1223 = vld [vmem:[%s1220 + $0x10] sm:$0xff]
      %v1224 = vld [vmem:[%s1220 + $0x18] sm:$0xff]
      %s1225 = scalar_lea.vmem %s7, 3
      %v1226 = vld [vmem:[%s1225] sm:$0x1]
      %v1228 = vperm.slane %v1226, 0
      %1230 = vmatpush.msra.mxu0 0.0
      %1231 = vmatpush.msra.mxu0 0.0
      %1232 = vmatpush.msra.mxu0 0.0
      %1233 = vmatpush.msra.mxu0 0.0
      %1234 = vmatpush.msra.mxu0 0.0
      %1235 = vmatpush.msra.mxu0 0.0
      %1236 = vmatpush.msra.mxu0 0.0
      %1237 = vmatpush.msra.mxu0 0.0
      %1238 = vmatpush.msra.mxu0 0.0
      %1239 = vmatpush.msra.mxu0 0.0
      %1240 = vmatpush.msra.mxu0 0.0
      %1241 = vmatpush.msra.mxu0 0.0
      %1242 = vmatpush.msra.mxu0 %v1224
      %1243 = vmatpush.msra.mxu0 %v1223
      %1244 = vmatpush.msra.mxu0 %v1222
      %1245 = vmatpush.msra.mxu0 %v1221
      %1246 = vmatmul.f32.gmra.mxu0 %v600
      %v1247 = vpop.f32.mrf.mxu0
      %v1248 = vadd.f32 %v1228, %v1247
      %1249 = vdwg.mxu0
      %v1251 = vsel %vm678, %v1188, 0
      %v1254 = vsel %vm678, %v1218, 0
      %1256 = vmatpush.xpose.msra.mxu0 0.0
      %1257 = vmatpush.xpose.msra.mxu0 0.0
      %1258 = vmatpush.xpose.msra.mxu0 0.0
      %1259 = vmatpush.xpose.msra.mxu0 0.0
      %1260 = vmatpush.xpose.msra.mxu0 0.0
      %1261 = vmatpush.xpose.msra.mxu0 0.0
      %1262 = vmatpush.xpose.msra.mxu0 0.0
      %1263 = vmatpush.xpose.msra.mxu0 0.0
      %1264 = vmatpush.xpose.msra.mxu0 0.0
      %1265 = vmatpush.xpose.msra.mxu0 0.0
      %1266 = vmatpush.xpose.msra.mxu0 0.0
      %1267 = vmatpush.xpose.msra.mxu0 0.0
      %1268 = vmatpush.xpose.msra.mxu0 0.0
      %1269 = vmatpush.xpose.msra.mxu0 0.0
      %1270 = vmatpush.xpose.msra.mxu0 0.0
      %1271 = vmatpush.xpose.msra.mxu0 %v1254
      %1272 = vmatmul.f32.gmra.mxu0 %v1251
      %v1273 = vpop.f32.mrf.mxu0
      %v1274 = vadd.f32 0.0, %v1273
      %1275 = vdwg.mxu0
      %v1276 = vmul.f32 %v1274, 0.35355338
      %v1277 = vsel %vm706, %v1276, -1e+09
      %v1278 = vsel %vm678, %v1277, -inf
      %1279 = vmax.xlane.f32.xlu0 %v1278
      %v1280 = vpop.xlane.xlu0 %1279
      %v1281 = vsub.f32 %v1277, %v1280
      %v1282 = vmul.f32 %v1281, 1.442695
      %v1283 = vpow.pop %v1282
      %v1284 = vsel %vm678, %v1283, 0.0
      %1285 = vadd.xlane.f32.xlu0 %v1284
      %v1286 = vpop.xlane.xlu0 %1285
      %v1287 = vrcp.pop %v1286
      %v1288 = vmul.f32 %v1286, %v1287
      %v1289 = vsub.f32 1.0, %v1288
      %v1290 = vmul.f32 %v1287, %v1289
      %v1291 = vadd.f32 %v1287, %v1290
      %vm1292 = vweird.f32 %v1286
      %vm1293 = vweird.f32 %v1287
      %vm1294 = vmor %vm1292, %vm1293
      %v1295 = vsel %vm1294, %v1287, %v1291
      %v1296 = vand.u32 2147483647, %v1286
      %vm1297 = vcmp.eq.f32.partialorder %v1296, 8.507059e+37
      %v1298 = vand.u32 %v1286, 2147483648
      %v1299 = vor.u32 1.1754944e-38, %v1298
      %v1300 = vsel %vm1297, %v1299, %v1295
      %v1301 = vmul.f32 %v1283, %v1300
      %v1303 = vsel %vm678, %v1301, 0
      %1305 = vmatpush.msra.mxu0 0.0
      %1306 = vmatpush.msra.mxu0 0.0
      %1307 = vmatpush.msra.mxu0 0.0
      %1308 = vmatpush.msra.mxu0 0.0
      %1309 = vmatpush.msra.mxu0 0.0
      %1310 = vmatpush.msra.mxu0 0.0
      %1311 = vmatpush.msra.mxu0 0.0
      %1312 = vmatpush.msra.mxu0 0.0
      %1313 = vmatpush.msra.mxu0 0.0
      %1314 = vmatpush.msra.mxu0 0.0
      %1315 = vmatpush.msra.mxu0 0.0
      %1316 = vmatpush.msra.mxu0 0.0
      %1317 = vmatpush.msra.mxu0 0.0
      %1318 = vmatpush.msra.mxu0 0.0
      %1319 = vmatpush.msra.mxu0 0.0
      %1320 = vmatpush.msra.mxu0 %v1248
      %1321 = vmatmul.f32.gmra.mxu0 %v1303
      %v1322 = vpop.f32.mrf.mxu0
      %v1323 = vadd.f32 0.0, %v1322
      %1324 = vdwg.mxu0
      %s1325 = scalar_lea.vmem %s8, 24
      %v1326 = vld [vmem:[%s1325] sm:$0xff]
      %v1328 = vsel %vm678, %v1323, 0
      %1330 = vmatpush.msra.mxu0 0.0
      %1331 = vmatpush.msra.mxu0 0.0
      %1332 = vmatpush.msra.mxu0 0.0
      %1333 = vmatpush.msra.mxu0 0.0
      %1334 = vmatpush.msra.mxu0 0.0
      %1335 = vmatpush.msra.mxu0 0.0
      %1336 = vmatpush.msra.mxu0 0.0
      %1337 = vmatpush.msra.mxu0 0.0
      %1338 = vmatpush.msra.mxu0 0.0
      %1339 = vmatpush.msra.mxu0 0.0
      %1340 = vmatpush.msra.mxu0 0.0
      %1341 = vmatpush.msra.mxu0 0.0
      %1342 = vmatpush.msra.mxu0 0.0
      %1343 = vmatpush.msra.mxu0 0.0
      %1344 = vmatpush.msra.mxu0 0.0
      %1345 = vmatpush.msra.mxu0 %v1326
      %1346 = vmatmul.f32.gmra.mxu0 %v1328
      %v1347 = vpop.f32.mrf.mxu0
      %v1348 = vadd.f32 0.0, %v1347
      %1349 = vdwg.mxu0
      %v1350 = vadd.f32 %v1159, %v1348
      %v1351 = vld [vmem:[%s9] sm:$0x1]
      %v1353 = vperm.slane %v1351, 0
      %v1355 = vadd.f32 %v1350, %v1353
      %v1356 = vadd.f32 %v588, %v1355
      %v1357 = vsel %vm598, %v1356, 0.0
      %1358 = vadd.xlane.f32.xlu0 %v1357
      %v1359 = vpop.xlane.xlu0 %1358
      %v1360 = vrcp.pop 32.0
      %v1361 = vmul.f32 32.0, %v1360
      %v1362 = vsub.f32 1.0, %v1361
      %v1363 = vmul.f32 %v1360, %v1362
      %v1364 = vadd.f32 %v1360, %v1363
      %vm1365 = vweird.f32 %v1360
      %v1366 = vsel %vm1365, %v1360, %v1364
      %v1367 = vmul.f32 %v1359, %v1366
      %v1368 = vsub.f32 %v1356, %v1367
      %v1369 = vmul.f32 %v1368, %v1368
      %v1370 = vsel %vm598, %v1369, 0.0
      %1371 = vadd.xlane.f32.xlu0 %v1370
      %v1372 = vpop.xlane.xlu0 %1371
      %v1373 = vmul.f32 %v1372, %v1366
      %v1374 = vadd.f32 %v1373, 1e-05
      %v1375 = vrsqrt.pop %v1374
      %v1376 = vmul.f32 %v1375, %v1374
      %v1377 = vmul.f32 %v1376, %v1375
      %v1378 = vmul.f32 0.5, %v1377
      %v1379 = vsub.f32 1.5, %v1378
      %v1380 = vmul.f32 %v1375, %v1379
      %v1381 = vmul.f32 %v1374, %v1380
      %vm1382 = vcmp.eq.f32.partialorder %v1374, inf
      %v1383 = vsel %vm1382, %v1374, %v1381
      %vm1384 = vcmp.eq.f32.partialorder %v1374, 0.0
      %v1385 = vand.u32 %v1374, 2147483648
      %v1386 = vsel %vm1384, %v1385, %v1383
      %v1387 = vrcp.pop %v1386
      %v1388 = vmul.f32 %v1386, %v1387
      %v1389 = vsub.f32 1.0, %v1388
      %v1390 = vmul.f32 %v1387, %v1389
      %v1391 = vadd.f32 %v1387, %v1390
      %vm1392 = vweird.f32 %v1386
      %vm1393 = vweird.f32 %v1387
      %vm1394 = vmor %vm1392, %vm1393
      %v1395 = vsel %vm1394, %v1387, %v1391
      %v1396 = vand.u32 2147483647, %v1386
      %vm1397 = vcmp.eq.f32.partialorder %v1396, 8.507059e+37
      %v1398 = vand.u32 %v1386, 2147483648
      %v1399 = vor.u32 1.1754944e-38, %v1398
      %v1400 = vsel %vm1397, %v1399, %v1395
      %v1401 = vmul.f32 %v1368, %v1400
      %v1402 = vld [vmem:[%s14] sm:$0x1]
      %v1404 = vperm.slane %v1402, 0
      %v1406 = vmul.f32 %v1401, %v1404
      %v1407 = vld [vmem:[%s15] sm:$0x1]
      %v1409 = vperm.slane %v1407, 0
      %v1411 = vadd.f32 %v1406, %v1409
      %v1412 = vld [vmem:[%s10] sm:$0xff]
      %v1413 = vld [vmem:[%s10 + $0x8] sm:$0xff]
      %v1414 = vld [vmem:[%s10 + $0x10] sm:$0xff]
      %v1415 = vld [vmem:[%s10 + $0x18] sm:$0xff]
      %v1416 = vld [vmem:[%s11] sm:$0x1]
      %v1418 = vperm.slane %v1416, 0
      %v1421 = vsel %vm598, %v1411, 0
      %1423 = vmatpush.msra.mxu0 0.0
      %1424 = vmatpush.msra.mxu0 0.0
      %1425 = vmatpush.msra.mxu0 0.0
      %1426 = vmatpush.msra.mxu0 0.0
      %1427 = vmatpush.msra.mxu0 0.0
      %1428 = vmatpush.msra.mxu0 0.0
      %1429 = vmatpush.msra.mxu0 0.0
      %1430 = vmatpush.msra.mxu0 0.0
      %1431 = vmatpush.msra.mxu0 0.0
      %1432 = vmatpush.msra.mxu0 0.0
      %1433 = vmatpush.msra.mxu0 0.0
      %1434 = vmatpush.msra.mxu0 0.0
      %1435 = vmatpush.msra.mxu0 %v1415
      %1436 = vmatpush.msra.mxu0 %v1414
      %1437 = vmatpush.msra.mxu0 %v1413
      %1438 = vmatpush.msra.mxu0 %v1412
      %1439 = vmatmul.f32.gmra.mxu0 %v1421
      %v1440 = vpop.f32.mrf.mxu0
      %v1441 = vadd.f32 %v1418, %v1440
      %1442 = vdwg.mxu0
      %v1443 = vmax.f32 %v1441, 0.0
      %v1444 = vld [vmem:[%s12] sm:$0xff]
      %v1445 = vld [vmem:[%s12 + $0x8] sm:$0xff]
      %v1446 = vld [vmem:[%s12 + $0x10] sm:$0xff]
      %v1447 = vld [vmem:[%s12 + $0x18] sm:$0xff]
      %v1448 = vld [vmem:[%s12 + $0x20] sm:$0xff]
      %v1449 = vld [vmem:[%s12 + $0x28] sm:$0xff]
      %v1450 = vld [vmem:[%s12 + $0x30] sm:$0xff]
      %v1451 = vld [vmem:[%s12 + $0x38] sm:$0xff]
      %v1452 = vld [vmem:[%s13] sm:$0x1]
      %v1454 = vperm.slane %v1452, 0
      %vm1456 = vcmask 523264
      %v1458 = vsel %vm1456, %v1443, 0
      %1460 = vmatpush.msra.mxu0 0.0
      %1461 = vmatpush.msra.mxu0 0.0
      %1462 = vmatpush.msra.mxu0 0.0
      %1463 = vmatpush.msra.mxu0 0.0
      %1464 = vmatpush.msra.mxu0 0.0
      %1465 = vmatpush.msra.mxu0 0.0
      %1466 = vmatpush.msra.mxu0 0.0
      %1467 = vmatpush.msra.mxu0 0.0
      %1468 = vmatpush.msra.mxu0 %v1451
      %1469 = vmatpush.msra.mxu0 %v1450
      %1470 = vmatpush.msra.mxu0 %v1449
      %1471 = vmatpush.msra.mxu0 %v1448
      %1472 = vmatpush.msra.mxu0 %v1447
      %1473 = vmatpush.msra.mxu0 %v1446
      %1474 = vmatpush.msra.mxu0 %v1445
      %1475 = vmatpush.msra.mxu0 %v1444
      %1476 = vmatmul.f32.gmra.mxu0 %v1458
      %v1477 = vpop.f32.mrf.mxu0
      %v1478 = vadd.f32 %v1454, %v1477
      %1479 = vdwg.mxu0
      %v1480 = vadd.f32 %v1411, %v1478
      %v1481 = vsel %vm598, %v1480, 0.0
      %1482 = vadd.xlane.f32.xlu0 %v1481
      %v1483 = vpop.xlane.xlu0 %1482
      %v1484 = vmul.f32 %v1483, %v1366
      %v1485 = vsub.f32 %v1480, %v1484
      %v1486 = vmul.f32 %v1485, %v1485
      %v1487 = vsel %vm598, %v1486, 0.0
      %1488 = vadd.xlane.f32.xlu0 %v1487
      %v1489 = vpop.xlane.xlu0 %1488
      %v1490 = vmul.f32 %v1489, %v1366
      %v1491 = vadd.f32 %v1490, 1e-05
      %v1492 = vrsqrt.pop %v1491
      %v1493 = vmul.f32 %v1492, %v1491
      %v1494 = vmul.f32 %v1493, %v1492
      %v1495 = vmul.f32 0.5, %v1494
      %v1496 = vsub.f32 1.5, %v1495
      %v1497 = vmul.f32 %v1492, %v1496
      %v1498 = vmul.f32 %v1491, %v1497
      %vm1499 = vcmp.eq.f32.partialorder %v1491, inf
      %v1500 = vsel %vm1499, %v1491, %v1498
      %vm1501 = vcmp.eq.f32.partialorder %v1491, 0.0
      %v1502 = vand.u32 %v1491, 2147483648
      %v1503 = vsel %vm1501, %v1502, %v1500
      %v1504 = vrcp.pop %v1503
      %v1505 = vmul.f32 %v1503, %v1504
      %v1506 = vsub.f32 1.0, %v1505
      %v1507 = vmul.f32 %v1504, %v1506
      %v1508 = vadd.f32 %v1504, %v1507
      %vm1509 = vweird.f32 %v1503
      %vm1510 = vweird.f32 %v1504
      %vm1511 = vmor %vm1509, %vm1510
      %v1512 = vsel %vm1511, %v1504, %v1508
      %v1513 = vand.u32 2147483647, %v1503
      %vm1514 = vcmp.eq.f32.partialorder %v1513, 8.507059e+37
      %v1515 = vand.u32 %v1503, 2147483648
      %v1516 = vor.u32 1.1754944e-38, %v1515
      %v1517 = vsel %vm1514, %v1516, %v1512
      %v1518 = vmul.f32 %v1485, %v1517
      %v1519 = vld [vmem:[%s16] sm:$0x1]
      %v1521 = vperm.slane %v1519, 0
      %v1523 = vmul.f32 %v1518, %v1521
      %v1524 = vld [vmem:[%s17] sm:$0x1]
      %v1526 = vperm.slane %v1524, 0
      %v1528 = vadd.f32 %v1523, %v1526
      %1529 = vst.msk [vmem:[%s587] sm:$0xff] %vm598, %v1528
      %p1530 = scmp.lt.s32.totalorder %s29, 1
      %s1531 = scalar_select %p1530, %s29, 1
      %s1532 = smul.addr %s1531, 8
      %s1533 = scalar_lea.vmem %s18, %s1532
      // Predicated region
      $region93: #{encoder_forward.4} parent=91 // pred_check
        %p1534 = pneg %p435
      $region94: #{encoder_forward.4} parent=91 // pred_check_branch
        %1536 = sbr.rel (%p1534) target = $region96
      $region95: #{encoder_forward.4} parent=91 // pred_region
        _
      $region96: #{encoder_forward.4} parent=91 // pred_fallthru
        _
    $region92: #{encoder_forward.4} parent=5 // pred_fallthru
      _
    %p1537 = scmp.le.s32.totalorder 2, %s24
    // Predicated region
    $region97: #{encoder_forward.4} parent=5 // pred_check
      %p1538 = pneg %p1537
    $region98: #{encoder_forward.4} parent=5 // pred_check_branch
      %1540 = sbr.rel (%p1538) target = $region100
    $region99: #{encoder_forward.4} parent=5 // pred_region
      %s1541 = ssub.s32 %s24, 2
      // Predicated region
      $region101: #{encoder_forward.4} parent=99 // pred_check
        %p1542 = pneg %p441
      $region102: #{encoder_forward.4} parent=99 // pred_check_branch
        %1544 = sbr.rel (%p1542) target = $region104
      $region103: #{encoder_forward.4} parent=99 // pred_region
        %p1545 = scmp.lt.s32.totalorder %s30, 1
        %s1546 = scalar_select %p1545, %s30, 1
        %s1547 = smul.addr %s1546, 8
        %s1548 = scalar_lea.vmem %s18, %s1547
      $region104: #{encoder_forward.4} parent=99 // pred_fallthru
        _
    $region100: #{encoder_forward.4} parent=5 // pred_fallthru
      _
  $region6: #{encoder_forward.4} parent=0 // loop_footer
    %s28 = sadd.s32 1, %s24
  $region7: #{encoder_forward.4} parent=0 // loop_footer_branch
    %23 = sbr.rel target = $region3
  $region8: #{encoder_forward.4} parent=0 // loop_exit
    _

// kernel: encoder_forward.5
$region0: #{encoder_forward.5}
  #allocation0 [shape = 'u32[]', space=smem, size = 0x4, offset = 0x4, fixed_abs, tag = 'smem constant byte address 0x4 - core index']
  #allocation1 [shape = 'u32[72,128]{1,0:T(1,128)}', space=vmem, size = 0x9000, scoped, tag = 'internal scratch']
  %s0 = inlined_call_operand.hbm [shape: f32[2,8,32], index: 0, kind: input, shape index: {}, may-alias: {0,18}]
  %s1 = inlined_call_operand.vmem [shape: f32[2,8,8], index: 1, kind: input, shape index: {}]
  %s2 = inlined_call_operand.vmem [shape: f32[4,32,8], index: 2, kind: input, shape index: {}]
  %s3 = inlined_call_operand.vmem [shape: f32[4,1,8], index: 3, kind: input, shape index: {}]
  %s4 = inlined_call_operand.vmem [shape: f32[4,32,8], index: 4, kind: input, shape index: {}]
  %s5 = inlined_call_operand.vmem [shape: f32[4,1,8], index: 5, kind: input, shape index: {}]
  %s6 = inlined_call_operand.vmem [shape: f32[4,32,8], index: 6, kind: input, shape index: {}]
  %s7 = inlined_call_operand.vmem [shape: f32[4,1,8], index: 7, kind: input, shape index: {}]
  %s8 = inlined_call_operand.vmem [shape: f32[4,8,32], index: 8, kind: input, shape index: {}]
  %s9 = inlined_call_operand.vmem [shape: f32[1,32], index: 9, kind: input, shape index: {}]
  %s10 = inlined_call_operand.vmem [shape: f32[32,64], index: 10, kind: input, shape index: {}]
  %s11 = inlined_call_operand.vmem [shape: f32[1,64], index: 11, kind: input, shape index: {}]
  %s12 = inlined_call_operand.vmem [shape: f32[64,32], index: 12, kind: input, shape index: {}]
  %s13 = inlined_call_operand.vmem [shape: f32[1,32], index: 13, kind: input, shape index: {}]
  %s14 = inlined_call_operand.vmem [shape: f32[1,32], index: 14, kind: input, shape index: {}]
  %s15 = inlined_call_operand.vmem [shape: f32[1,32], index: 15, kind: input, shape index: {}]
  %s16 = inlined_call_operand.vmem [shape: f32[1,32], index: 16, kind: input, shape index: {}]
  %s17 = inlined_call_operand.vmem [shape: f32[1,32], index: 17, kind: input, shape index: {}]
  %s18 = inlined_call_operand.hbm [shape: f32[2,8,32], index: 18, kind: output, shape index: {}, may-alias: {0,18}]
  %s19 = sld [smem:[#allocation0]]
  $region109: #{encoder_forward.5} parent=0
    _
  %s21 = ssub.s32 1, %s19
  %s22 = scalar_select 0, %s21, %s19
  $region1: #{encoder_forward.5} parent=0
    #allocation2 [shape = 'u8[8192]{0}', space=vmem, size = 0x2000, scoped, tag = 'input window, operand 0']
    #allocation3 [shape = 's32[2]{0}', space=sflag, size = 0x8, scoped, tag = 'scoped memory for encoder_forward.5']
    #allocation4 [shape = 's32[2]{0}', space=sflag, size = 0x8, scoped, tag = 'scoped memory for encoder_forward.5']
    #allocation5 [shape = 'u8[8192]{0}', space=vmem, size = 0x2000, scoped, tag = 'output window, operand 0']
    %23 = vsyncpa [#allocation3], 0
    %s24 = scalar_lea.sflag [#allocation3], 1
    %25 = vsyncpa %s24, 0
    %26 = vsyncpa [#allocation4], 0
    %s27 = scalar_lea.sflag [#allocation4], 1
    %28 = vsyncpa %s27, 0
    loop: start=0, step=1, limit=4
    $region2: #{encoder_forward.5} parent=1 // loop_pre_header
      _
    $region3: #{encoder_forward.5} parent=1 // loop_header
      %s30 = sphi 0, %s34
      %p31 = scmp.ge.s32.totalorder %s30, 4
      %s40 = sphi 0, %s42
      %s43 = sphi 0, %s40
      %s44 = sphi 0, %s43
      %s60 = sphi 0, %s44
      %s66 = sphi 0, %s68
      %s69 = sphi 0, %s66
      %s70 = sphi 0, %s69
      %s86 = sphi 0, %s70
      %s90 = sphi 0, %s90
      %s92 = sphi 0, %s90
      %s93 = sphi 0, %s92
      %s107 = sphi 0, %s93
      %s111 = sphi 0, %s111
      %s113 = sphi 0, %s111
      %s114 = sphi 0, %s113
      %s128 = sphi 0, %s114
      %s132 = sphi 0, %s132
      %s134 = sphi 0, %s132
      %s135 = sphi 0, %s134
      %s149 = sphi 0, %s135
      %s153 = sphi 0, %s153
      %s155 = sphi 0, %s153
      %s156 = sphi 0, %s155
      %s170 = sphi 0, %s156
      %s174 = sphi 0, %s174
      %s176 = sphi 0, %s174
      %s177 = sphi 0, %s176
      %s191 = sphi 0, %s177
      %s195 = sphi 0, %s195
      %s197 = sphi 0, %s195
      %s198 = sphi 0, %s197
      %s212 = sphi 0, %s198
      %s216 = sphi 0, %s216
      %s218 = sphi 0, %s216
      %s219 = sphi 0, %s218
      %s233 = sphi 0, %s219
      %s237 = sphi 0, %s237
      %s239 = sphi 0, %s237
      %s240 = sphi 0, %s239
      %s254 = sphi 0, %s240
      %s258 = sphi 0, %s258
      %s260 = sphi 0, %s258
      %s261 = sphi 0, %s260
      %s275 = sphi 0, %s261
      %s279 = sphi 0, %s279
      %s281 = sphi 0, %s279
      %s282 = sphi 0, %s281
      %s296 = sphi 0, %s282
      %s300 = sphi 0, %s300
      %s302 = sphi 0, %s300
      %s303 = sphi 0, %s302
      %s317 = sphi 0, %s303
      %s321 = sphi 0, %s321
      %s323 = sphi 0, %s321
      %s324 = sphi 0, %s323
      %s338 = sphi 0, %s324
      %s342 = sphi 0, %s342
      %s344 = sphi 0, %s342
      %s345 = sphi 0, %s344
      %s359 = sphi 0, %s345
      %s363 = sphi 0, %s363
      %s365 = sphi 0, %s363
      %s366 = sphi 0, %s365
      %s380 = sphi 0, %s366
      %s384 = sphi 0, %s384
      %s386 = sphi 0, %s384
      %s387 = sphi 0, %s386
      %s401 = sphi 0, %s387
      %s405 = sphi 0, %s405
      %s407 = sphi 0, %s405
      %s408 = sphi 0, %s407
      %s422 = sphi 0, %s408
      %s428 = sphi 0, %s430
      %s431 = sphi 0, %s428
      %s432 = sphi 0, %s431
      %s448 = sphi 0, %s432
    $region4: #{encoder_forward.5} parent=1 // loop_header_branch
      %33 = sbr.rel (%p31) target = $region8
    $region5: #{encoder_forward.5} parent=1 // loop_body
      %s35 = ssub.s32 %s30, 1
      %s36 = ssub.s32 %s30, 2
      %s37 = sadd.s32 %s30, 1
      %s38 = ssub.s32 %s30, %s37
      %p39 = scmp.eq.s32.totalorder %s38, 0
      %s41 = sadd.s32 %s40, 1
      %s42 = scalar_select %p39, %s40, %s41
      %p45 = pneg %p39
      %p46 = scmp.eq.s32.totalorder %s30, 1
      %p47 = por %p45, %p46
      %p48 = scmp.ne.s32.totalorder %s40, %s43
      %p49 = scmp.eq.s32.totalorder %s30, 0
      %p50 = por %p48, %p49
      %p51 = scmp.ne.s32.totalorder %s40, %s43
      %p52 = scmp.eq.s32.totalorder %s35, 1
      %p53 = por %p51, %p52
      %p54 = scmp.ne.s32.totalorder %s43, %s44
      %p55 = scmp.eq.s32.totalorder %s35, 0
      %p56 = por %p54, %p55
      %p57 = scmp.ne.s32.totalorder %s43, %s44
      %p58 = scmp.eq.s32.totalorder %s36, 1
      %p59 = por %p57, %p58
      %p61 = scmp.ne.s32.totalorder %s44, %s60
      %p62 = scmp.eq.s32.totalorder %s36, 0
      %p63 = por %p61, %p62
      %s64 = ssub.s32 %s30, %s37
      %p65 = scmp.eq.s32.totalorder %s64, 0
      %s67 = sadd.s32 %s66, 1
      %s68 = scalar_select %p65, %s66, %s67
      %p71 = pneg %p65
      %p72 = scmp.eq.s32.totalorder %s30, 1
      %p73 = por %p71, %p72
      %p74 = scmp.ne.s32.totalorder %s66, %s69
      %p75 = scmp.eq.s32.totalorder %s30, 0
      %p76 = por %p74, %p75
      %p77 = scmp.ne.s32.totalorder %s66, %s69
      %p78 = scmp.eq.s32.totalorder %s35, 1
      %p79 = por %p77, %p78
      %p80 = scmp.ne.s32.totalorder %s69, %s70
      %p81 = scmp.eq.s32.totalorder %s35, 0
      %p82 = por %p80, %p81
      %p83 = scmp.ne.s32.totalorder %s69, %s70
      %p84 = scmp.eq.s32.totalorder %s36, 1
      %p85 = por %p83, %p84
      %p87 = scmp.ne.s32.totalorder %s70, %s86
      %p88 = scmp.eq.s32.totalorder %s36, 0
      %p89 = por %p87, %p88
      %s91 = sadd.s32 %s90, 1
      %p94 = scmp.eq.s32.totalorder %s30, 1
      %p95 = scmp.ne.s32.totalorder %s90, %s92
      %p96 = scmp.eq.s32.totalorder %s30, 0
      %p97 = por %p95, %p96
      %p98 = scmp.ne.s32.totalorder %s90, %s92
      %p99 = scmp.eq.s32.totalorder %s35, 1
      %p100 = por %p98, %p99
      %p101 = scmp.ne.s32.totalorder %s92, %s93
      %p102 = scmp.eq.s32.totalorder %s35, 0
      %p103 = por %p101, %p102
      %p104 = scmp.ne.s32.totalorder %s92, %s93
      %p105 = scmp.eq.s32.totalorder %s36, 1
      %p106 = por %p104, %p105
      %p108 = scmp.ne.s32.totalorder %s93, %s107
      %p109 = scmp.eq.s32.totalorder %s36, 0
      %p110 = por %p108, %p109
      %s112 = sadd.s32 %s111, 1
      %p115 = scmp.eq.s32.totalorder %s30, 1
      %p116 = scmp.ne.s32.totalorder %s111, %s113
      %p117 = scmp.eq.s32.totalorder %s30, 0
      %p118 = por %p116, %p117
      %p119 = scmp.ne.s32.totalorder %s111, %s113
      %p120 = scmp.eq.s32.totalorder %s35, 1
      %p121 = por %p119, %p120
      %p122 = scmp.ne.s32.totalorder %s113, %s114
      %p123 = scmp.eq.s32.totalorder %s35, 0
      %p124 = por %p122, %p123
      %p125 = scmp.ne.s32.totalorder %s113, %s114
      %p126 = scmp.eq.s32.totalorder %s36, 1
      %p127 = por %p125, %p126
      %p129 = scmp.ne.s32.totalorder %s114, %s128
      %p130 = scmp.eq.s32.totalorder %s36, 0
      %p131 = por %p129, %p130
      %s133 = sadd.s32 %s132, 1
      %p136 = scmp.eq.s32.totalorder %s30, 1
      %p137 = scmp.ne.s32.totalorder %s132, %s134
      %p138 = scmp.eq.s32.totalorder %s30, 0
      %p139 = por %p137, %p138
      %p140 = scmp.ne.s32.totalorder %s132, %s134
      %p141 = scmp.eq.s32.totalorder %s35, 1
      %p142 = por %p140, %p141
      %p143 = scmp.ne.s32.totalorder %s134, %s135
      %p144 = scmp.eq.s32.totalorder %s35, 0
      %p145 = por %p143, %p144
      %p146 = scmp.ne.s32.totalorder %s134, %s135
      %p147 = scmp.eq.s32.totalorder %s36, 1
      %p148 = por %p146, %p147
      %p150 = scmp.ne.s32.totalorder %s135, %s149
      %p151 = scmp.eq.s32.totalorder %s36, 0
      %p152 = por %p150, %p151
      %s154 = sadd.s32 %s153, 1
      %p157 = scmp.eq.s32.totalorder %s30, 1
      %p158 = scmp.ne.s32.totalorder %s153, %s155
      %p159 = scmp.eq.s32.totalorder %s30, 0
      %p160 = por %p158, %p159
      %p161 = scmp.ne.s32.totalorder %s153, %s155
      %p162 = scmp.eq.s32.totalorder %s35, 1
      %p163 = por %p161, %p162
      %p164 = scmp.ne.s32.totalorder %s155, %s156
      %p165 = scmp.eq.s32.totalorder %s35, 0
      %p166 = por %p164, %p165
      %p167 = scmp.ne.s32.totalorder %s155, %s156
      %p168 = scmp.eq.s32.totalorder %s36, 1
      %p169 = por %p167, %p168
      %p171 = scmp.ne.s32.totalorder %s156, %s170
      %p172 = scmp.eq.s32.totalorder %s36, 0
      %p173 = por %p171, %p172
      %s175 = sadd.s32 %s174, 1
      %p178 = scmp.eq.s32.totalorder %s30, 1
      %p179 = scmp.ne.s32.totalorder %s174, %s176
      %p180 = scmp.eq.s32.totalorder %s30, 0
      %p181 = por %p179, %p180
      %p182 = scmp.ne.s32.totalorder %s174, %s176
      %p183 = scmp.eq.s32.totalorder %s35, 1
      %p184 = por %p182, %p183
      %p185 = scmp.ne.s32.totalorder %s176, %s177
      %p186 = scmp.eq.s32.totalorder %s35, 0
      %p187 = por %p185, %p186
      %p188 = scmp.ne.s32.totalorder %s176, %s177
      %p189 = scmp.eq.s32.totalorder %s36, 1
      %p190 = por %p188, %p189
      %p192 = scmp.ne.s32.totalorder %s177, %s191
      %p193 = scmp.eq.s32.totalorder %s36, 0
      %p194 = por %p192, %p193
      %s196 = sadd.s32 %s195, 1
      %p199 = scmp.eq.s32.totalorder %s30, 1
      %p200 = scmp.ne.s32.totalorder %s195, %s197
      %p201 = scmp.eq.s32.totalorder %s30, 0
      %p202 = por %p200, %p201
      %p203 = scmp.ne.s32.totalorder %s195, %s197
      %p204 = scmp.eq.s32.totalorder %s35, 1
      %p205 = por %p203, %p204
      %p206 = scmp.ne.s32.totalorder %s197, %s198
      %p207 = scmp.eq.s32.totalorder %s35, 0
      %p208 = por %p206, %p207
      %p209 = scmp.ne.s32.totalorder %s197, %s198
      %p210 = scmp.eq.s32.totalorder %s36, 1
      %p211 = por %p209, %p210
      %p213 = scmp.ne.s32.totalorder %s198, %s212
      %p214 = scmp.eq.s32.totalorder %s36, 0
      %p215 = por %p213, %p214
      %s217 = sadd.s32 %s216, 1
      %p220 = scmp.eq.s32.totalorder %s30, 1
      %p221 = scmp.ne.s32.totalorder %s216, %s218
      %p222 = scmp.eq.s32.totalorder %s30, 0
      %p223 = por %p221, %p222
      %p224 = scmp.ne.s32.totalorder %s216, %s218
      %p225 = scmp.eq.s32.totalorder %s35, 1
      %p226 = por %p224, %p225
      %p227 = scmp.ne.s32.totalorder %s218, %s219
      %p228 = scmp.eq.s32.totalorder %s35, 0
      %p229 = por %p227, %p228
      %p230 = scmp.ne.s32.totalorder %s218, %s219
      %p231 = scmp.eq.s32.totalorder %s36, 1
      %p232 = por %p230, %p231
      %p234 = scmp.ne.s32.totalorder %s219, %s233
      %p235 = scmp.eq.s32.totalorder %s36, 0
      %p236 = por %p234, %p235
      %s238 = sadd.s32 %s237, 1
      %p241 = scmp.eq.s32.totalorder %s30, 1
      %p242 = scmp.ne.s32.totalorder %s237, %s239
      %p243 = scmp.eq.s32.totalorder %s30, 0
      %p244 = por %p242, %p243
      %p245 = scmp.ne.s32.totalorder %s237, %s239
      %p246 = scmp.eq.s32.totalorder %s35, 1
      %p247 = por %p245, %p246
      %p248 = scmp.ne.s32.totalorder %s239, %s240
      %p249 = scmp.eq.s32.totalorder %s35, 0
      %p250 = por %p248, %p249
      %p251 = scmp.ne.s32.totalorder %s239, %s240
      %p252 = scmp.eq.s32.totalorder %s36, 1
      %p253 = por %p251, %p252
      %p255 = scmp.ne.s32.totalorder %s240, %s254
      %p256 = scmp.eq.s32.totalorder %s36, 0
      %p257 = por %p255, %p256
      %s259 = sadd.s32 %s258, 1
      %p262 = scmp.eq.s32.totalorder %s30, 1
      %p263 = scmp.ne.s32.totalorder %s258, %s260
      %p264 = scmp.eq.s32.totalorder %s30, 0
      %p265 = por %p263, %p264
      %p266 = scmp.ne.s32.totalorder %s258, %s260
      %p267 = scmp.eq.s32.totalorder %s35, 1
      %p268 = por %p266, %p267
      %p269 = scmp.ne.s32.totalorder %s260, %s261
      %p270 = scmp.eq.s32.totalorder %s35, 0
      %p271 = por %p269, %p270
      %p272 = scmp.ne.s32.totalorder %s260, %s261
      %p273 = scmp.eq.s32.totalorder %s36, 1
      %p274 = por %p272, %p273
      %p276 = scmp.ne.s32.totalorder %s261, %s275
      %p277 = scmp.eq.s32.totalorder %s36, 0
      %p278 = por %p276, %p277
      %s280 = sadd.s32 %s279, 1
      %p283 = scmp.eq.s32.totalorder %s30, 1
      %p284 = scmp.ne.s32.totalorder %s279, %s281
      %p285 = scmp.eq.s32.totalorder %s30, 0
      %p286 = por %p284, %p285
      %p287 = scmp.ne.s32.totalorder %s279, %s281
      %p288 = scmp.eq.s32.totalorder %s35, 1
      %p289 = por %p287, %p288
      %p290 = scmp.ne.s32.totalorder %s281, %s282
      %p291 = scmp.eq.s32.totalorder %s35, 0
      %p292 = por %p290, %p291
      %p293 = scmp.ne.s32.totalorder %s281, %s282
      %p294 = scmp.eq.s32.totalorder %s36, 1
      %p295 = por %p293, %p294
      %p297 = scmp.ne.s32.totalorder %s282, %s296
      %p298 = scmp.eq.s32.totalorder %s36, 0
      %p299 = por %p297, %p298
      %s301 = sadd.s32 %s300, 1
      %p304 = scmp.eq.s32.totalorder %s30, 1
      %p305 = scmp.ne.s32.totalorder %s300, %s302
      %p306 = scmp.eq.s32.totalorder %s30, 0
      %p307 = por %p305, %p306
      %p308 = scmp.ne.s32.totalorder %s300, %s302
      %p309 = scmp.eq.s32.totalorder %s35, 1
      %p310 = por %p308, %p309
      %p311 = scmp.ne.s32.totalorder %s302, %s303
      %p312 = scmp.eq.s32.totalorder %s35, 0
      %p313 = por %p311, %p312
      %p314 = scmp.ne.s32.totalorder %s302, %s303
      %p315 = scmp.eq.s32.totalorder %s36, 1
      %p316 = por %p314, %p315
      %p318 = scmp.ne.s32.totalorder %s303, %s317
      %p319 = scmp.eq.s32.totalorder %s36, 0
      %p320 = por %p318, %p319
      %s322 = sadd.s32 %s321, 1
      %p325 = scmp.eq.s32.totalorder %s30, 1
      %p326 = scmp.ne.s32.totalorder %s321, %s323
      %p327 = scmp.eq.s32.totalorder %s30, 0
      %p328 = por %p326, %p327
      %p329 = scmp.ne.s32.totalorder %s321, %s323
      %p330 = scmp.eq.s32.totalorder %s35, 1
      %p331 = por %p329, %p330
      %p332 = scmp.ne.s32.totalorder %s323, %s324
      %p333 = scmp.eq.s32.totalorder %s35, 0
      %p334 = por %p332, %p333
      %p335 = scmp.ne.s32.totalorder %s323, %s324
      %p336 = scmp.eq.s32.totalorder %s36, 1
      %p337 = por %p335, %p336
      %p339 = scmp.ne.s32.totalorder %s324, %s338
      %p340 = scmp.eq.s32.totalorder %s36, 0
      %p341 = por %p339, %p340
      %s343 = sadd.s32 %s342, 1
      %p346 = scmp.eq.s32.totalorder %s30, 1
      %p347 = scmp.ne.s32.totalorder %s342, %s344
      %p348 = scmp.eq.s32.totalorder %s30, 0
      %p349 = por %p347, %p348
      %p350 = scmp.ne.s32.totalorder %s342, %s344
      %p351 = scmp.eq.s32.totalorder %s35, 1
      %p352 = por %p350, %p351
      %p353 = scmp.ne.s32.totalorder %s344, %s345
      %p354 = scmp.eq.s32.totalorder %s35, 0
      %p355 = por %p353, %p354
      %p356 = scmp.ne.s32.totalorder %s344, %s345
      %p357 = scmp.eq.s32.totalorder %s36, 1
      %p358 = por %p356, %p357
      %p360 = scmp.ne.s32.totalorder %s345, %s359
      %p361 = scmp.eq.s32.totalorder %s36, 0
      %p362 = por %p360, %p361
      %s364 = sadd.s32 %s363, 1
      %p367 = scmp.eq.s32.totalorder %s30, 1
      %p368 = scmp.ne.s32.totalorder %s363, %s365
      %p369 = scmp.eq.s32.totalorder %s30, 0
      %p370 = por %p368, %p369
      %p371 = scmp.ne.s32.totalorder %s363, %s365
      %p372 = scmp.eq.s32.totalorder %s35, 1
      %p373 = por %p371, %p372
      %p374 = scmp.ne.s32.totalorder %s365, %s366
      %p375 = scmp.eq.s32.totalorder %s35, 0
      %p376 = por %p374, %p375
      %p377 = scmp.ne.s32.totalorder %s365, %s366
      %p378 = scmp.eq.s32.totalorder %s36, 1
      %p379 = por %p377, %p378
      %p381 = scmp.ne.s32.totalorder %s366, %s380
      %p382 = scmp.eq.s32.totalorder %s36, 0
      %p383 = por %p381, %p382
      %s385 = sadd.s32 %s384, 1
      %p388 = scmp.eq.s32.totalorder %s30, 1
      %p389 = scmp.ne.s32.totalorder %s384, %s386
      %p390 = scmp.eq.s32.totalorder %s30, 0
      %p391 = por %p389, %p390
      %p392 = scmp.ne.s32.totalorder %s384, %s386
      %p393 = scmp.eq.s32.totalorder %s35, 1
      %p394 = por %p392, %p393
      %p395 = scmp.ne.s32.totalorder %s386, %s387
      %p396 = scmp.eq.s32.totalorder %s35, 0
      %p397 = por %p395, %p396
      %p398 = scmp.ne.s32.totalorder %s386, %s387
      %p399 = scmp.eq.s32.totalorder %s36, 1
      %p400 = por %p398, %p399
      %p402 = scmp.ne.s32.totalorder %s387, %s401
      %p403 = scmp.eq.s32.totalorder %s36, 0
      %p404 = por %p402, %p403
      %s406 = sadd.s32 %s405, 1
      %p409 = scmp.eq.s32.totalorder %s30, 1
      %p410 = scmp.ne.s32.totalorder %s405, %s407
      %p411 = scmp.eq.s32.totalorder %s30, 0
      %p412 = por %p410, %p411
      %p413 = scmp.ne.s32.totalorder %s405, %s407
      %p414 = scmp.eq.s32.totalorder %s35, 1
      %p415 = por %p413, %p414
      %p416 = scmp.ne.s32.totalorder %s407, %s408
      %p417 = scmp.eq.s32.totalorder %s35, 0
      %p418 = por %p416, %p417
      %p419 = scmp.ne.s32.totalorder %s407, %s408
      %p420 = scmp.eq.s32.totalorder %s36, 1
      %p421 = por %p419, %p420
      %p423 = scmp.ne.s32.totalorder %s408, %s422
      %p424 = scmp.eq.s32.totalorder %s36, 0
      %p425 = por %p423, %p424
      %s426 = ssub.s32 %s30, %s37
      %p427 = scmp.eq.s32.totalorder %s426, 0
      %s429 = sadd.s32 %s428, 1
      %s430 = scalar_select %p427, %s428, %s429
      %p433 = pneg %p427
      %p434 = scmp.eq.s32.totalorder %s30, 1
      %p435 = por %p433, %p434
      %p436 = scmp.ne.s32.totalorder %s428, %s431
      %p437 = scmp.eq.s32.totalorder %s30, 0
      %p438 = por %p436, %p437
      %p439 = scmp.ne.s32.totalorder %s428, %s431
      %p440 = scmp.eq.s32.totalorder %s35, 1
      %p441 = por %p439, %p440
      %p442 = scmp.ne.s32.totalorder %s431, %s432
      %p443 = scmp.eq.s32.totalorder %s35, 0
      %p444 = por %p442, %p443
      %p445 = scmp.ne.s32.totalorder %s431, %s432
      %p446 = scmp.eq.s32.totalorder %s36, 1
      %p447 = por %p445, %p446
      %p449 = scmp.ne.s32.totalorder %s432, %s448
      %p450 = scmp.eq.s32.totalorder %s36, 0
      %p451 = por %p449, %p450
      %p452 = scmp.le.s32.totalorder 1, %s30
      %p453 = scmp.lt.s32.totalorder %s30, 3
      %p454 = pnand %p452, %p453
      %p455 = pneg %p454
      // Predicated region
      $region9: #{encoder_forward.5} parent=5 // pred_check
        _
      $region10: #{encoder_forward.5} parent=5 // pred_check_branch
        %457 = sbr.rel (%p454) target = $region12
      $region11: #{encoder_forward.5} parent=5 // pred_region
        %s458 = ssub.s32 %s30, 1
        // Predicated region
        $region13: #{encoder_forward.5} parent=11 // pred_check
          %p459 = pneg %p103
        $region14: #{encoder_forward.5} parent=11 // pred_check_branch
          %461 = sbr.rel (%p459) target = $region16
        $region15: #{encoder_forward.5} parent=11 // pred_region
          _
        $region16: #{encoder_forward.5} parent=11 // pred_fallthru
          _
        // Predicated region
        $region17: #{encoder_forward.5} parent=11 // pred_check
          %p462 = pneg %p124
        $region18: #{encoder_forward.5} parent=11 // pred_check_branch
          %464 = sbr.rel (%p462) target = $region20
        $region19: #{encoder_forward.5} parent=11 // pred_region
          _
        $region20: #{encoder_forward.5} parent=11 // pred_fallthru
          _
        // Predicated region
        $region21: #{encoder_forward.5} parent=11 // pred_check
          %p465 = pneg %p145
        $region22: #{encoder_forward.5} parent=11 // pred_check_branch
          %467 = sbr.rel (%p465) target = $region24
        $region23: #{encoder_forward.5} parent=11 // pred_region
          _
        $region24: #{encoder_forward.5} parent=11 // pred_fallthru
          _
        // Predicated region
        $region25: #{encoder_forward.5} parent=11 // pred_check
          %p468 = pneg %p166
        $region26: #{encoder_forward.5} parent=11 // pred_check_branch
          %470 = sbr.rel (%p468) target = $region28
        $region27: #{encoder_forward.5} parent=11 // pred_region
          _
        $region28: #{encoder_forward.5} parent=11 // pred_fallthru
          _
        // Predicated region
        $region29: #{encoder_forward.5} parent=11 // pred_check
          %p471 = pneg %p187
        $region30: #{encoder_forward.5} parent=11 // pred_check_branch
          %473 = sbr.rel (%p471) target = $region32
        $region31: #{encoder_forward.5} parent=11 // pred_region
          _
        $region32: #{encoder_forward.5} parent=11 // pred_fallthru
          _
        // Predicated region
        $region33: #{encoder_forward.5} parent=11 // pred_check
          %p474 = pneg %p208
        $region34: #{encoder_forward.5} parent=11 // pred_check_branch
          %476 = sbr.rel (%p474) target = $region36
        $region35: #{encoder_forward.5} parent=11 // pred_region
          _
        $region36: #{encoder_forward.5} parent=11 // pred_fallthru
          _
        // Predicated region
        $region37: #{encoder_forward.5} parent=11 // pred_check
          %p477 = pneg %p229
        $region38: #{encoder_forward.5} parent=11 // pred_check_branch
          %479 = sbr.rel (%p477) target = $region40
        $region39: #{encoder_forward.5} parent=11 // pred_region
          _
        $region40: #{encoder_forward.5} parent=11 // pred_fallthru
          _
        // Predicated region
        $region41: #{encoder_forward.5} parent=11 // pred_check
          %p480 = pneg %p250
        $region42: #{encoder_forward.5} parent=11 // pred_check_branch
          %482 = sbr.rel (%p480) target = $region44
        $region43: #{encoder_forward.5} parent=11 // pred_region
          _
        $region44: #{encoder_forward.5} parent=11 // pred_fallthru
          _
        // Predicated region
        $region45: #{encoder_forward.5} parent=11 // pred_check
          %p483 = pneg %p271
        $region46: #{encoder_forward.5} parent=11 // pred_check_branch
          %485 = sbr.rel (%p483) target = $region48
        $region47: #{encoder_forward.5} parent=11 // pred_region
          _
        $region48: #{encoder_forward.5} parent=11 // pred_fallthru
          _
        // Predicated region
        $region49: #{encoder_forward.5} parent=11 // pred_check
          %p486 = pneg %p292
        $region50: #{encoder_forward.5} parent=11 // pred_check_branch
          %488 = sbr.rel (%p486) target = $region52
        $region51: #{encoder_forward.5} parent=11 // pred_region
          _
        $region52: #{encoder_forward.5} parent=11 // pred_fallthru
          _
        // Predicated region
        $region53: #{encoder_forward.5} parent=11 // pred_check
          %p489 = pneg %p313
        $region54: #{encoder_forward.5} parent=11 // pred_check_branch
          %491 = sbr.rel (%p489) target = $region56
        $region55: #{encoder_forward.5} parent=11 // pred_region
          _
        $region56: #{encoder_forward.5} parent=11 // pred_fallthru
          _
        // Predicated region
        $region57: #{encoder_forward.5} parent=11 // pred_check
          %p492 = pneg %p334
        $region58: #{encoder_forward.5} parent=11 // pred_check_branch
          %494 = sbr.rel (%p492) target = $region60
        $region59: #{encoder_forward.5} parent=11 // pred_region
          _
        $region60: #{encoder_forward.5} parent=11 // pred_fallthru
          _
        // Predicated region
        $region61: #{encoder_forward.5} parent=11 // pred_check
          %p495 = pneg %p355
        $region62: #{encoder_forward.5} parent=11 // pred_check_branch
          %497 = sbr.rel (%p495) target = $region64
        $region63: #{encoder_forward.5} parent=11 // pred_region
          _
        $region64: #{encoder_forward.5} parent=11 // pred_fallthru
          _
        // Predicated region
        $region65: #{encoder_forward.5} parent=11 // pred_check
          %p498 = pneg %p376
        $region66: #{encoder_forward.5} parent=11 // pred_check_branch
          %500 = sbr.rel (%p498) target = $region68
        $region67: #{encoder_forward.5} parent=11 // pred_region
          _
        $region68: #{encoder_forward.5} parent=11 // pred_fallthru
          _
        // Predicated region
        $region69: #{encoder_forward.5} parent=11 // pred_check
          %p501 = pneg %p397
        $region70: #{encoder_forward.5} parent=11 // pred_check_branch
          %503 = sbr.rel (%p501) target = $region72
        $region71: #{encoder_forward.5} parent=11 // pred_region
          _
        $region72: #{encoder_forward.5} parent=11 // pred_fallthru
          _
        // Predicated region
        $region73: #{encoder_forward.5} parent=11 // pred_check
          %p504 = pneg %p418
        $region74: #{encoder_forward.5} parent=11 // pred_check_branch
          %506 = sbr.rel (%p504) target = $region76
        $region75: #{encoder_forward.5} parent=11 // pred_region
          _
        $region76: #{encoder_forward.5} parent=11 // pred_fallthru
          _
      $region12: #{encoder_forward.5} parent=5 // pred_fallthru
        _
      %p507 = scmp.lt.s32.totalorder %s30, 2
      // Predicated region
      $region77: #{encoder_forward.5} parent=5 // pred_check
        %p508 = pneg %p507
      $region78: #{encoder_forward.5} parent=5 // pred_check_branch
        %510 = sbr.rel (%p508) target = $region80
      $region79: #{encoder_forward.5} parent=5 // pred_region
        // Predicated region
        $region81: #{encoder_forward.5} parent=79 // pred_check
          %p511 = pneg %p50
        $region82: #{encoder_forward.5} parent=79 // pred_check_branch
          %513 = sbr.rel (%p511) target = $region84
        $region83: #{encoder_forward.5} parent=79 // pred_region
          %s514 = sand.u32 %s40, 1
          %s515 = scalar_lea.sflag [#allocation3], %s514
          %s516 = sand.u32 %s40, 1
          %s517 = smul.addr %s516, 8
          %s518 = scalar_lea.vmem [#allocation2], %s517
          %520 = vsyncadd %s515, 0
          %s521 = smul.addr %s30, 8
          %s522 = scalar_lea.hbm %s0, %s521
          %s524 = sshll.u32 %s522, 4
          %s525 = int_to_ptr.hbm [resolvable:$true] %s524
          %s526 = sshll.u32 %s518, 4
          %s527 = int_to_ptr.vmem [resolvable:$true] %s526
          %529 = dma.hbm_to_vmem [thread:$0]  %s525, 128, %s527, %s515
        $region84: #{encoder_forward.5} parent=79 // pred_fallthru
          _
        // Predicated region
        $region85: #{encoder_forward.5} parent=79 // pred_check
          %p530 = pneg %p76
        $region86: #{encoder_forward.5} parent=79 // pred_check_branch
          %532 = sbr.rel (%p530) target = $region88
        $region87: #{encoder_forward.5} parent=79 // pred_region
          %p533 = scmp.lt.s32.totalorder %s30, 1
          %s534 = scalar_select %p533, %s30, 1
          %s535 = smul.addr %s534, 8
          %s536 = scalar_lea.vmem %s1, %s535
        $region88: #{encoder_forward.5} parent=79 // pred_fallthru
          _
      $region80: #{encoder_forward.5} parent=5 // pred_fallthru
        _
      %p537 = scmp.le.s32.totalorder 1, %s30
      %p538 = scmp.lt.s32.totalorder %s30, 3
      %p539 = pnand %p537, %p538
      %p540 = pneg %p539
      // Predicated region
      $region89: #{encoder_forward.5} parent=5 // pred_check
        _
      $region90: #{encoder_forward.5} parent=5 // pred_check_branch
        %542 = sbr.rel (%p539) target = $region92
      $region91: #{encoder_forward.5} parent=5 // pred_region
        %s543 = ssub.s32 %s30, 1
        %s544 = sand.u32 %s43, 1
        %s545 = scalar_lea.sflag [#allocation3], %s544
        %s546 = sand.u32 %s43, 1
        %s547 = smul.addr %s546, 8
        %s548 = scalar_lea.vmem [#allocation2], %s547
        // Predicated region
        $region93: #{encoder_forward.5} parent=91 // pred_check
          %p549 = pneg %p56
        $region94: #{encoder_forward.5} parent=91 // pred_check_branch
          %551 = sbr.rel (%p549) target = $region96
        $region95: #{encoder_forward.5} parent=91 // pred_region
          %553 = dma.done %s545, 128
        $region96: #{encoder_forward.5} parent=91 // pred_fallthru
          _
        %s554 = sand.u32 %s43, 1
        %s555 = scalar_lea.sflag [#allocation3], %s554
        %s556 = sand.u32 %s43, 1
        %s557 = smul.addr %s556, 8
        %s558 = scalar_lea.vmem [#allocation2], %s557
        %p559 = pneg %p56
        %p560 = pneg %p53
        %p561 = scmp.lt.s32.totalorder %s35, 1
        %s562 = scalar_select %p561, %s35, 1
        %s563 = smul.addr %s562, 8
        %s564 = scalar_lea.vmem %s1, %s563
        %p565 = pneg %p82
        %p566 = pneg %p79
        %p567 = pneg %p103
        %p568 = pneg %p100
        %p569 = pneg %p124
        %p570 = pneg %p121
        %p571 = pneg %p145
        %p572 = pneg %p142
        %p573 = pneg %p166
        %p574 = pneg %p163
        %p575 = pneg %p187
        %p576 = pneg %p184
        %p577 = pneg %p208
        %p578 = pneg %p205
        %p579 = pneg %p229
        %p580 = pneg %p226
        %p581 = pneg %p250
        %p582 = pneg %p247
        %p583 = pneg %p271
        %p584 = pneg %p268
        %p585 = pneg %p292
        %p586 = pneg %p289
        %p587 = pneg %p313
        %p588 = pneg %p310
        %p589 = pneg %p334
        %p590 = pneg %p331
        %p591 = pneg %p355
        %p592 = pneg %p352
        %p593 = pneg %p376
        %p594 = pneg %p373
        %p595 = pneg %p397
        %p596 = pneg %p394
        %p597 = pneg %p418
        %p598 = pneg %p415
        %p599 = pneg %p444
        %p600 = pneg %p441
        %s601 = sand.u32 %s431, 1
        %s602 = scalar_lea.sflag [#allocation4], %s601
        %s603 = sand.u32 %s431, 1
        %s604 = smul.addr %s603, 8
        %s605 = scalar_lea.vmem [#allocation5], %s604
        %p606 = scmp.lt.s32.totalorder %s35, 1
        %s607 = scalar_select %p606, %s35, 1
        %s608 = smul.addr %s607, 8
        %s609 = scalar_lea.vmem %s1, %s608
        %v610 = vld [vmem:[%s548] sm:$0xff]
        %v611 = vld [vmem:[%s609] sm:$0xff]
        %v612 = vld [vmem:[%s2] sm:$0xff]
        %v613 = vld [vmem:[%s2 + $0x8] sm:$0xff]
        %v614 = vld [vmem:[%s2 + $0x10] sm:$0xff]
        %v615 = vld [vmem:[%s2 + $0x18] sm:$0xff]
        %v616 = vld [vmem:[%s3] sm:$0x1]
        %v618 = vperm.slane %v616, 0
        %vm620 = vcmask 261120
        %v622 = vsel %vm620, %v610, 0
        %624 = vmatpush.msra.mxu0 0.0
        %625 = vmatpush.msra.mxu0 0.0
        %626 = vmatpush.msra.mxu0 0.0
        %627 = vmatpush.msra.mxu0 0.0
        %628 = vmatpush.msra.mxu0 0.0
        %629 = vmatpush.msra.mxu0 0.0
        %630 = vmatpush.msra.mxu0 0.0
        %631 = vmatpush.msra.mxu0 0.0
        %632 = vmatpush.msra.mxu0 0.0
        %633 = vmatpush.msra.mxu0 0.0
        %634 = vmatpush.msra.mxu0 0.0
        %635 = vmatpush.msra.mxu0 0.0
        %636 = vmatpush.msra.mxu0 %v615
        %637 = vmatpush.msra.mxu0 %v614
        %638 = vmatpush.msra.mxu0 %v613
        %639 = vmatpush.msra.mxu0 %v612
        %640 = vmatmul.f32.gmra.mxu0 %v622
        %v641 = vpop.f32.mrf.mxu0
        %v642 = vadd.f32 %v618, %v641
        %643 = vdwg.mxu0
        %v644 = vld [vmem:[%s4] sm:$0xff]
        %v645 = vld [vmem:[%s4 + $0x8] sm:$0xff]
        %v646 = vld [vmem:[%s4 + $0x10] sm:$0xff]
        %v647 = vld [vmem:[%s4 + $0x18] sm:$0xff]
        %v648 = vld [vmem:[%s5] sm:$0x1]
        %v650 = vperm.slane %v648, 0
        %652 = vmatpush.msra.mxu0 0.0
        %653 = vmatpush.msra.mxu0 0.0
        %654 = vmatpush.msra.mxu0 0.0
        %655 = vmatpush.msra.mxu0 0.0
        %656 = vmatpush.msra.mxu0 0.0
        %657 = vmatpush.msra.mxu0 0.0
        %658 = vmatpush.msra.mxu0 0.0
        %659 = vmatpush.msra.mxu0 0.0
        %660 = vmatpush.msra.mxu0 0.0
        %661 = vmatpush.msra.mxu0 0.0
        %662 = vmatpush.msra.mxu0 0.0
        %663 = vmatpush.msra.mxu0 0.0
        %664 = vmatpush.msra.mxu0 %v647
        %665 = vmatpush.msra.mxu0 %v646
        %666 = vmatpush.msra.mxu0 %v645
        %667 = vmatpush.msra.mxu0 %v644
        %668 = vmatmul.f32.gmra.mxu0 %v622
        %v669 = vpop.f32.mrf.mxu0
        %v670 = vadd.f32 %v650, %v669
        %671 = vdwg.mxu0
        %v672 = vld [vmem:[%s6] sm:$0xff]
        %v673 = vld [vmem:[%s6 + $0x8] sm:$0xff]
        %v674 = vld [vmem:[%s6 + $0x10] sm:$0xff]
        %v675 = vld [vmem:[%s6 + $0x18] sm:$0xff]
        %v676 = vld [vmem:[%s7] sm:$0x1]
        %v678 = vperm.slane %v676, 0
        %680 = vmatpush.msra.mxu0 0.0
        %681 = vmatpush.msra.mxu0 0.0
        %682 = vmatpush.msra.mxu0 0.0
        %683 = vmatpush.msra.mxu0 0.0
        %684 = vmatpush.msra.mxu0 0.0
        %685 = vmatpush.msra.mxu0 0.0
        %686 = vmatpush.msra.mxu0 0.0
        %687 = vmatpush.msra.mxu0 0.0
        %688 = vmatpush.msra.mxu0 0.0
        %689 = vmatpush.msra.mxu0 0.0
        %690 = vmatpush.msra.mxu0 0.0
        %691 = vmatpush.msra.mxu0 0.0
        %692 = vmatpush.msra.mxu0 %v675
        %693 = vmatpush.msra.mxu0 %v674
        %694 = vmatpush.msra.mxu0 %v673
        %695 = vmatpush.msra.mxu0 %v672
        %696 = vmatmul.f32.gmra.mxu0 %v622
        %v697 = vpop.f32.mrf.mxu0
        %v698 = vadd.f32 %v678, %v697
        %699 = vdwg.mxu0
        %vm700 = vcmask 64512
        %v702 = vsel %vm700, %v642, 0
        %v705 = vsel %vm700, %v670, 0
        %707 = vmatpush.xpose.msra.mxu0 0.0
        %708 = vmatpush.xpose.msra.mxu0 0.0
        %709 = vmatpush.xpose.msra.mxu0 0.0
        %710 = vmatpush.xpose.msra.mxu0 0.0
        %711 = vmatpush.xpose.msra.mxu0 0.0
        %712 = vmatpush.xpose.msra.mxu0 0.0
        %713 = vmatpush.xpose.msra.mxu0 0.0
        %714 = vmatpush.xpose.msra.mxu0 0.0
        %715 = vmatpush.xpose.msra.mxu0 0.0
        %716 = vmatpush.xpose.msra.mxu0 0.0
        %717 = vmatpush.xpose.msra.mxu0 0.0
        %718 = vmatpush.xpose.msra.mxu0 0.0
        %719 = vmatpush.xpose.msra.mxu0 0.0
        %720 = vmatpush.xpose.msra.mxu0 0.0
        %721 = vmatpush.xpose.msra.mxu0 0.0
        %722 = vmatpush.xpose.msra.mxu0 %v705
        %723 = vmatmul.f32.gmra.mxu0 %v702
        %v724 = vpop.f32.mrf.mxu0
        %v725 = vadd.f32 0.0, %v724
        %726 = vdwg.mxu0
        %v727 = vmul.f32 %v725, 0.35355338
        %vm728 = vcmp.ne.f32.partialorder %v611, 0.0
        %v729 = vsel %vm728, %v727, -1e+09
        %v730 = vsel %vm700, %v729, -inf
        %731 = vmax.xlane.f32.xlu0 %v730
        %v732 = vpop.xlane.xlu0 %731
        %v733 = vsub.f32 %v729, %v732
        %v734 = vmul.f32 %v733, 1.442695
        %v735 = vpow.pop %v734
        %v736 = vsel %vm700, %v735, 0.0
        %737 = vadd.xlane.f32.xlu0 %v736
        %v738 = vpop.xlane.xlu0 %737
        %v739 = vrcp.pop %v738
        %v740 = vmul.f32 %v738, %v739
        %v741 = vsub.f32 1.0, %v740
        %v742 = vmul.f32 %v739, %v741
        %v743 = vadd.f32 %v739, %v742
        %vm744 = vweird.f32 %v738
        %vm745 = vweird.f32 %v739
        %vm746 = vmor %vm744, %vm745
        %v747 = vsel %vm746, %v739, %v743
        %v748 = vand.u32 2147483647, %v738
        %vm749 = vcmp.eq.f32.partialorder %v748, 8.507059e+37
        %v750 = vand.u32 %v738, 2147483648
        %v751 = vor.u32 1.1754944e-38, %v750
        %v752 = vsel %vm749, %v751, %v747
        %v753 = vmul.f32 %v735, %v752
        %v755 = vsel %vm700, %v753, 0
        %757 = vmatpush.msra.mxu0 0.0
        %758 = vmatpush.msra.mxu0 0.0
        %759 = vmatpush.msra.mxu0 0.0
        %760 = vmatpush.msra.mxu0 0.0
        %761 = vmatpush.msra.mxu0 0.0
        %762 = vmatpush.msra.mxu0 0.0
        %763 = vmatpush.msra.mxu0 0.0
        %764 = vmatpush.msra.mxu0 0.0
        %765 = vmatpush.msra.mxu0 0.0
        %766 = vmatpush.msra.mxu0 0.0
        %767 = vmatpush.msra.mxu0 0.0
        %768 = vmatpush.msra.mxu0 0.0
        %769 = vmatpush.msra.mxu0 0.0
        %770 = vmatpush.msra.mxu0 0.0
        %771 = vmatpush.msra.mxu0 0.0
        %772 = vmatpush.msra.mxu0 %v698
        %773 = vmatmul.f32.gmra.mxu0 %v755
        %v774 = vpop.f32.mrf.mxu0
        %v775 = vadd.f32 0.0, %v774
        %776 = vdwg.mxu0
        %v777 = vld [vmem:[%s8] sm:$0xff]
        %s778 = scalar_lea.vmem %s2, 32
        %v779 = vld [vmem:[%s778] sm:$0xff]
        %v780 = vld [vmem:[%s778 + $0x8] sm:$0xff]
        %v781 = vld [vmem:[%s778 + $0x10] sm:$0xff]
        %v782 = vld [vmem:[%s778 + $0x18] sm:$0xff]
        %s783 = scalar_lea.vmem %s3, 1
        %v784 = vld [vmem:[%s783] sm:$0x1]
        %v786 = vperm.slane %v784, 0
        %788 = vmatpush.msra.mxu0 0.0
        %789 = vmatpush.msra.mxu0 0.0
        %790 = vmatpush.msra.mxu0 0.0
        %791 = vmatpush.msra.mxu0 0.0
        %792 = vmatpush.msra.mxu0 0.0
        %793 = vmatpush.msra.mxu0 0.0
        %794 = vmatpush.msra.mxu0 0.0
        %795 = vmatpush.msra.mxu0 0.0
        %796 = vmatpush.msra.mxu0 0.0
        %797 = vmatpush.msra.mxu0 0.0
        %798 = vmatpush.msra.mxu0 0.0
        %799 = vmatpush.msra.mxu0 0.0
        %800 = vmatpush.msra.mxu0 %v782
        %801 = vmatpush.msra.mxu0 %v781
        %802 = vmatpush.msra.mxu0 %v780
        %803 = vmatpush.msra.mxu0 %v779
        %804 = vmatmul.f32.gmra.mxu0 %v622
        %v805 = vpop.f32.mrf.mxu0
        %v806 = vadd.f32 %v786, %v805
        %807 = vdwg.mxu0
        %s808 = scalar_lea.vmem %s4, 32
        %v809 = vld [vmem:[%s808] sm:$0xff]
        %v810 = vld [vmem:[%s808 + $0x8] sm:$0xff]
        %v811 = vld [vmem:[%s808 + $0x10] sm:$0xff]
        %v812 = vld [vmem:[%s808 + $0x18] sm:$0xff]
        %s813 = scalar_lea.vmem %s5, 1
        %v814 = vld [vmem:[%s813] sm:$0x1]
        %v816 = vperm.slane %v814, 0
        %818 = vmatpush.msra.mxu0 0.0
        %819 = vmatpush.msra.mxu0 0.0
        %820 = vmatpush.msra.mxu0 0.0
        %821 = vmatpush.msra.mxu0 0.0
        %822 = vmatpush.msra.mxu0 0.0
        %823 = vmatpush.msra.mxu0 0.0
        %824 = vmatpush.msra.mxu0 0.0
        %825 = vmatpush.msra.mxu0 0.0
        %826 = vmatpush.msra.mxu0 0.0
        %827 = vmatpush.msra.mxu0 0.0
        %828 = vmatpush.msra.mxu0 0.0
        %829 = vmatpush.msra.mxu0 0.0
        %830 = vmatpush.msra.mxu0 %v812
        %831 = vmatpush.msra.mxu0 %v811
        %832 = vmatpush.msra.mxu0 %v810
        %833 = vmatpush.msra.mxu0 %v809
        %834 = vmatmul.f32.gmra.mxu0 %v622
        %v835 = vpop.f32.mrf.mxu0
        %v836 = vadd.f32 %v816, %v835
        %837 = vdwg.mxu0
        %s838 = scalar_lea.vmem %s6, 32
        %v839 = vld [vmem:[%s838] sm:$0xff]
        %v840 = vld [vmem:[%s838 + $0x8] sm:$0xff]
        %v841 = vld [vmem:[%s838 + $0x10] sm:$0xff]
        %v842 = vld [vmem:[%s838 + $0x18] sm:$0xff]
        %s843 = scalar_lea.vmem %s7, 1
        %v844 = vld [vmem:[%s843] sm:$0x1]
        %v846 = vperm.slane %v844, 0
        %848 = vmatpush.msra.mxu0 0.0
        %849 = vmatpush.msra.mxu0 0.0
        %850 = vmatpush.msra.mxu0 0.0
        %851 = vmatpush.msra.mxu0 0.0
        %852 = vmatpush.msra.mxu0 0.0
        %853 = vmatpush.msra.mxu0 0.0
        %854 = vmatpush.msra.mxu0 0.0
        %855 = vmatpush.msra.mxu0 0.0
        %856 = vmatpush.msra.mxu0 0.0
        %857 = vmatpush.msra.mxu0 0.0
        %858 = vmatpush.msra.mxu0 0.0
        %859 = vmatpush.msra.mxu0 0.0
        %860 = vmatpush.msra.mxu0 %v842
        %861 = vmatpush.msra.mxu0 %v841
        %862 = vmatpush.msra.mxu0 %v840
        %863 = vmatpush.msra.mxu0 %v839
        %864 = vmatmul.f32.gmra.mxu0 %v622
        %v865 = vpop.f32.mrf.mxu0
        %v866 = vadd.f32 %v846, %v865
        %867 = vdwg.mxu0
        %v869 = vsel %vm700, %v806, 0
        %v872 = vsel %vm700, %v836, 0
        %874 = vmatpush.xpose.msra.mxu0 0.0
        %875 = vmatpush.xpose.msra.mxu0 0.0
        %876 = vmatpush.xpose.msra.mxu0 0.0
        %877 = vmatpush.xpose.msra.mxu0 0.0
        %878 = vmatpush.xpose.msra.mxu0 0.0
        %879 = vmatpush.xpose.msra.mxu0 0.0
        %880 = vmatpush.xpose.msra.mxu0 0.0
        %881 = vmatpush.xpose.msra.mxu0 0.0
        %882 = vmatpush.xpose.msra.mxu0 0.0
        %883 = vmatpush.xpose.msra.mxu0 0.0
        %884 = vmatpush.xpose.msra.mxu0 0.0
        %885 = vmatpush.xpose.msra.mxu0 0.0
        %886 = vmatpush.xpose.msra.mxu0 0.0
        %887 = vmatpush.xpose.msra.mxu0 0.0
        %888 = vmatpush.xpose.msra.mxu0 0.0
        %889 = vmatpush.xpose.msra.mxu0 %v872
        %890 = vmatmul.f32.gmra.mxu0 %v869
        %v891 = vpop.f32.mrf.mxu0
        %v892 = vadd.f32 0.0, %v891
        %893 = vdwg.mxu0
        %v894 = vmul.f32 %v892, 0.35355338
        %v895 = vsel %vm728, %v894, -1e+09
        %v896 = vsel %vm700, %v895, -inf
        %897 = vmax.xlane.f32.xlu0 %v896
        %v898 = vpop.xlane.xlu0 %897
        %v899 = vsub.f32 %v895, %v898
        %v900 = vmul.f32 %v899, 1.442695
        %v901 = vpow.pop %v900
        %v902 = vsel %vm700, %v901, 0.0
        %903 = vadd.xlane.f32.xlu0 %v902
        %v904 = vpop.xlane.xlu0 %903
        %v905 = vrcp.pop %v904
        %v906 = vmul.f32 %v904, %v905
        %v907 = vsub.f32 1.0, %v906
        %v908 = vmul.f32 %v905, %v907
        %v909 = vadd.f32 %v905, %v908
        %vm910 = vweird.f32 %v904
        %vm911 = vweird.f32 %v905
        %vm912 = vmor %vm910, %vm911
        %v913 = vsel %vm912, %v905, %v909
        %v914 = vand.u32 2147483647, %v904
        %vm915 = vcmp.eq.f32.partialorder %v914, 8.507059e+37
        %v916 = vand.u32 %v904, 2147483648
        %v917 = vor.u32 1.1754944e-38, %v916
        %v918 = vsel %vm915, %v917, %v913
        %v919 = vmul.f32 %v901, %v918
        %v921 = vsel %vm700, %v919, 0
        %923 = vmatpush.msra.mxu0 0.0
        %924 = vmatpush.msra.mxu0 0.0
        %925 = vmatpush.msra.mxu0 0.0
        %926 = vmatpush.msra.mxu0 0.0
        %927 = vmatpush.msra.mxu0 0.0
        %928 = vmatpush.msra.mxu0 0.0
        %929 = vmatpush.msra.mxu0 0.0
        %930 = vmatpush.msra.mxu0 0.0
        %931 = vmatpush.msra.mxu0 0.0
        %932 = vmatpush.msra.mxu0 0.0
        %933 = vmatpush.msra.mxu0 0.0
        %934 = vmatpush.msra.mxu0 0.0
        %935 = vmatpush.msra.mxu0 0.0
        %936 = vmatpush.msra.mxu0 0.0
        %937 = vmatpush.msra.mxu0 0.0
        %938 = vmatpush.msra.mxu0 %v866
        %939 = vmatmul.f32.gmra.mxu0 %v921
        %v940 = vpop.f32.mrf.mxu0
        %v941 = vadd.f32 0.0, %v940
        %942 = vdwg.mxu0
        %s943 = scalar_lea.vmem %s8, 8
        %v944 = vld [vmem:[%s943] sm:$0xff]
        %v946 = vsel %vm700, %v941, 0
        %948 = vmatpush.msra.mxu0 0.0
        %949 = vmatpush.msra.mxu0 0.0
        %950 = vmatpush.msra.mxu0 0.0
        %951 = vmatpush.msra.mxu0 0.0
        %952 = vmatpush.msra.mxu0 0.0
        %953 = vmatpush.msra.mxu0 0.0
        %954 = vmatpush.msra.mxu0 0.0
        %955 = vmatpush.msra.mxu0 0.0
        %956 = vmatpush.msra.mxu0 0.0
        %957 = vmatpush.msra.mxu0 0.0
        %958 = vmatpush.msra.mxu0 0.0
        %959 = vmatpush.msra.mxu0 0.0
        %960 = vmatpush.msra.mxu0 0.0
        %961 = vmatpush.msra.mxu0 0.0
        %962 = vmatpush.msra.mxu0 0.0
        %963 = vmatpush.msra.mxu0 %v944
        %964 = vmatmul.f32.gmra.mxu0 %v946
        %v965 = vpop.f32.mrf.mxu0
        %v966 = vadd.f32 0.0, %v965
        %967 = vdwg.mxu0
        %v969 = vsel %vm700, %v775, 0
        %971 = vmatpush.msra.mxu0 0.0
        %972 = vmatpush.msra.mxu0 0.0
        %973 = vmatpush.msra.mxu0 0.0
        %974 = vmatpush.msra.mxu0 0.0
        %975 = vmatpush.msra.mxu0 0.0
        %976 = vmatpush.msra.mxu0 0.0
        %977 = vmatpush.msra.mxu0 0.0
        %978 = vmatpush.msra.mxu0 0.0
        %979 = vmatpush.msra.mxu0 0.0
        %980 = vmatpush.msra.mxu0 0.0
        %981 = vmatpush.msra.mxu0 0.0
        %982 = vmatpush.msra.mxu0 0.0
        %983 = vmatpush.msra.mxu0 0.0
        %984 = vmatpush.msra.mxu0 0.0
        %985 = vmatpush.msra.mxu0 0.0
        %986 = vmatpush.msra.mxu0 %v777
        %987 = vmatmul.f32.gmra.mxu0 %v969
        %v988 = vpop.f32.mrf.mxu0
        %v989 = vadd.f32 %v966, %v988
        %990 = vdwg.mxu0
        %s991 = scalar_lea.vmem %s2, 64
        %v992 = vld [vmem:[%s991] sm:$0xff]
        %v993 = vld [vmem:[%s991 + $0x8] sm:$0xff]
        %v994 = vld [vmem:[%s991 + $0x10] sm:$0xff]
        %v995 = vld [vmem:[%s991 + $0x18] sm:$0xff]
        %s996 = scalar_lea.vmem %s3, 2
        %v997 = vld [vmem:[%s996] sm:$0x1]
        %v999 = vperm.slane %v997, 0
        %1001 = vmatpush.msra.mxu0 0.0
        %1002 = vmatpush.msra.mxu0 0.0
        %1003 = vmatpush.msra.mxu0 0.0
        %1004 = vmatpush.msra.mxu0 0.0
        %1005 = vmatpush.msra.mxu0 0.0
        %1006 = vmatpush.msra.mxu0 0.0
        %1007 = vmatpush.msra.mxu0 0.0
        %1008 = vmatpush.msra.mxu0 0.0
        %1009 = vmatpush.msra.mxu0 0.0
        %1010 = vmatpush.msra.mxu0 0.0
        %1011 = vmatpush.msra.mxu0 0.0
        %1012 = vmatpush.msra.mxu0 0.0
        %1013 = vmatpush.msra.mxu0 %v995
        %1014 = vmatpush.msra.mxu0 %v994
        %1015 = vmatpush.msra.mxu0 %v993
        %1016 = vmatpush.msra.mxu0 %v992
        %1017 = vmatmul.f32.gmra.mxu0 %v622
        %v1018 = vpop.f32.mrf.mxu0
        %v1019 = vadd.f32 %v999, %v1018
        %1020 = vdwg.mxu0
        %s1021 = scalar_lea.vmem %s4, 64
        %v1022 = vld [vmem:[%s1021] sm:$0xff]
        %v1023 = vld [vmem:[%s1021 + $0x8] sm:$0xff]
        %v1024 = vld [vmem:[%s1021 + $0x10] sm:$0xff]
        %v1025 = vld [vmem:[%s1021 + $0x18] sm:$0xff]
        %s1026 = scalar_lea.vmem %s5, 2
        %v1027 = vld [vmem:[%s1026] sm:$0x1]
        %v1029 = vperm.slane %v1027, 0
        %1031 = vmatpush.msra.mxu0 0.0
        %1032 = vmatpush.msra.mxu0 0.0
        %1033 = vmatpush.msra.mxu0 0.0
        %1034 = vmatpush.msra.mxu0 0.0
        %1035 = vmatpush.msra.mxu0 0.0
        %1036 = vmatpush.msra.mxu0 0.0
        %1037 = vmatpush.msra.mxu0 0.0
        %1038 = vmatpush.msra.mxu0 0.0
        %1039 = vmatpush.msra.mxu0 0.0
        %1040 = vmatpush.msra.mxu0 0.0
        %1041 = vmatpush.msra.mxu0 0.0
        %1042 = vmatpush.msra.mxu0 0.0
        %1043 = vmatpush.msra.mxu0 %v1025
        %1044 = vmatpush.msra.mxu0 %v1024
        %1045 = vmatpush.msra.mxu0 %v1023
        %1046 = vmatpush.msra.mxu0 %v1022
        %1047 = vmatmul.f32.gmra.mxu0 %v622
        %v1048 = vpop.f32.mrf.mxu0
        %v1049 = vadd.f32 %v1029, %v1048
        %1050 = vdwg.mxu0
        %s1051 = scalar_lea.vmem %s6, 64
        %v1052 = vld [vmem:[%s1051] sm:$0xff]
        %v1053 = vld [vmem:[%s1051 + $0x8] sm:$0xff]
        %v1054 = vld [vmem:[%s1051 + $0x10] sm:$0xff]
        %v1055 = vld [vmem:[%s1051 + $0x18] sm:$0xff]
        %s1056 = scalar_lea.vmem %s7, 2
        %v1057 = vld [vmem:[%s1056] sm:$0x1]
        %v1059 = vperm.slane %v1057, 0
        %1061 = vmatpush.msra.mxu0 0.0
        %1062 = vmatpush.msra.mxu0 0.0
        %1063 = vmatpush.msra.mxu0 0.0
        %1064 = vmatpush.msra.mxu0 0.0
        %1065 = vmatpush.msra.mxu0 0.0
        %1066 = vmatpush.msra.mxu0 0.0
        %1067 = vmatpush.msra.mxu0 0.0
        %1068 = vmatpush.msra.mxu0 0.0
        %1069 = vmatpush.msra.mxu0 0.0
        %1070 = vmatpush.msra.mxu0 0.0
        %1071 = vmatpush.msra.mxu0 0.0
        %1072 = vmatpush.msra.mxu0 0.0
        %1073 = vmatpush.msra.mxu0 %v1055
        %1074 = vmatpush.msra.mxu0 %v1054
        %1075 = vmatpush.msra.mxu0 %v1053
        %1076 = vmatpush.msra.mxu0 %v1052
        %1077 = vmatmul.f32.gmra.mxu0 %v622
        %v1078 = vpop.f32.mrf.mxu0
        %v1079 = vadd.f32 %v1059, %v1078
        %1080 = vdwg.mxu0
        %v1082 = vsel %vm700, %v1019, 0
        %v1085 = vsel %vm700, %v1049, 0
        %1087 = vmatpush.xpose.msra.mxu0 0.0
        %1088 = vmatpush.xpose.msra.mxu0 0.0
        %1089 = vmatpush.xpose.msra.mxu0 0.0
        %1090 = vmatpush.xpose.msra.mxu0 0.0
        %1091 = vmatpush.xpose.msra.mxu0 0.0
        %1092 = vmatpush.xpose.msra.mxu0 0.0
        %1093 = vmatpush.xpose.msra.mxu0 0.0
        %1094 = vmatpush.xpose.msra.mxu0 0.0
        %1095 = vmatpush.xpose.msra.mxu0 0.0
        %1096 = vmatpush.xpose.msra.mxu0 0.0
        %1097 = vmatpush.xpose.msra.mxu0 0.0
        %1098 = vmatpush.xpose.msra.mxu0 0.0
        %1099 = vmatpush.xpose.msra.mxu0 0.0
        %1100 = vmatpush.xpose.msra.mxu0 0.0
        %1101 = vmatpush.xpose.msra.mxu0 0.0
        %1102 = vmatpush.xpose.msra.mxu0 %v1085
        %1103 = vmatmul.f32.gmra.mxu0 %v1082
        %v1104 = vpop.f32.mrf.mxu0
        %v1105 = vadd.f32 0.0, %v1104
        %1106 = vdwg.mxu0
        %v1107 = vmul.f32 %v1105, 0.35355338
        %v1108 = vsel %vm728, %v1107, -1e+09
        %v1109 = vsel %vm700, %v1108, -inf
        %1110 = vmax.xlane.f32.xlu0 %v1109
        %v1111 = vpop.xlane.xlu0 %1110
        %v1112 = vsub.f32 %v1108, %v1111
        %v1113 = vmul.f32 %v1112, 1.442695
        %v1114 = vpow.pop %v1113
        %v1115 = vsel %vm700, %v1114, 0.0
        %1116 = vadd.xlane.f32.xlu0 %v1115
        %v1117 = vpop.xlane.xlu0 %1116
        %v1118 = vrcp.pop %v1117
        %v1119 = vmul.f32 %v1117, %v1118
        %v1120 = vsub.f32 1.0, %v1119
        %v1121 = vmul.f32 %v1118, %v1120
        %v1122 = vadd.f32 %v1118, %v1121
        %vm1123 = vweird.f32 %v1117
        %vm1124 = vweird.f32 %v1118
        %vm1125 = vmor %vm1123, %vm1124
        %v1126 = vsel %vm1125, %v1118, %v1122
        %v1127 = vand.u32 2147483647, %v1117
        %vm1128 = vcmp.eq.f32.partialorder %v1127, 8.507059e+37
        %v1129 = vand.u32 %v1117, 2147483648
        %v1130 = vor.u32 1.1754944e-38, %v1129
        %v1131 = vsel %vm1128, %v1130, %v1126
        %v1132 = vmul.f32 %v1114, %v1131
        %v1134 = vsel %vm700, %v1132, 0
        %1136 = vmatpush.msra.mxu0 0.0
        %1137 = vmatpush.msra.mxu0 0.0
        %1138 = vmatpush.msra.mxu0 0.0
        %1139 = vmatpush.msra.mxu0 0.0
        %1140 = vmatpush.msra.mxu0 0.0
        %1141 = vmatpush.msra.mxu0 0.0
        %1142 = vmatpush.msra.mxu0 0.0
        %1143 = vmatpush.msra.mxu0 0.0
        %1144 = vmatpush.msra.mxu0 0.0
        %1145 = vmatpush.msra.mxu0 0.0
        %1146 = vmatpush.msra.mxu0 0.0
        %1147 = vmatpush.msra.mxu0 0.0
        %1148 = vmatpush.msra.mxu0 0.0
        %1149 = vmatpush.msra.mxu0 0.0
        %1150 = vmatpush.msra.mxu0 0.0
        %1151 = vmatpush.msra.mxu0 %v1079
        %1152 = vmatmul.f32.gmra.mxu0 %v1134
        %v1153 = vpop.f32.mrf.mxu0
        %v1154 = vadd.f32 0.0, %v1153
        %1155 = vdwg.mxu0
        %s1156 = scalar_lea.vmem %s8, 16
        %v1157 = vld [vmem:[%s1156] sm:$0xff]
        %v1159 = vsel %vm700, %v1154, 0
        %1161 = vmatpush.msra.mxu0 0.0
        %1162 = vmatpush.msra.mxu0 0.0
        %1163 = vmatpush.msra.mxu0 0.0
        %1164 = vmatpush.msra.mxu0 0.0
        %1165 = vmatpush.msra.mxu0 0.0
        %1166 = vmatpush.msra.mxu0 0.0
        %1167 = vmatpush.msra.mxu0 0.0
        %1168 = vmatpush.msra.mxu0 0.0
        %1169 = vmatpush.msra.mxu0 0.0
        %1170 = vmatpush.msra.mxu0 0.0
        %1171 = vmatpush.msra.mxu0 0.0
        %1172 = vmatpush.msra.mxu0 0.0
        %1173 = vmatpush.msra.mxu0 0.0
        %1174 = vmatpush.msra.mxu0 0.0
        %1175 = vmatpush.msra.mxu0 0.0
        %1176 = vmatpush.msra.mxu0 %v1157
        %1177 = vmatmul.f32.gmra.mxu0 %v1159
        %v1178 = vpop.f32.mrf.mxu0
        %v1179 = vadd.f32 0.0, %v1178
        %1180 = vdwg.mxu0
        %v1181 = vadd.f32 %v989, %v1179
        %s1182 = scalar_lea.vmem %s2, 96
        %v1183 = vld [vmem:[%s1182] sm:$0xff]
        %v1184 = vld [vmem:[%s1182 + $0x8] sm:$0xff]
        %v1185 = vld [vmem:[%s1182 + $0x10] sm:$0xff]
        %v1186 = vld [vmem:[%s1182 + $0x18] sm:$0xff]
        %s1187 = scalar_lea.vmem %s3, 3
        %v1188 = vld [vmem:[%s1187] sm:$0x1]
        %v1190 = vperm.slane %v1188, 0
        %1192 = vmatpush.msra.mxu0 0.0
        %1193 = vmatpush.msra.mxu0 0.0
        %1194 = vmatpush.msra.mxu0 0.0
        %1195 = vmatpush.msra.mxu0 0.0
        %1196 = vmatpush.msra.mxu0 0.0
        %1197 = vmatpush.msra.mxu0 0.0
        %1198 = vmatpush.msra.mxu0 0.0
        %1199 = vmatpush.msra.mxu0 0.0
        %1200 = vmatpush.msra.mxu0 0.0
        %1201 = vmatpush.msra.mxu0 0.0
        %1202 = vmatpush.msra.mxu0 0.0
        %1203 = vmatpush.msra.mxu0 0.0
        %1204 = vmatpush.msra.mxu0 %v1186
        %1205 = vmatpush.msra.mxu0 %v1185
        %1206 = vmatpush.msra.mxu0 %v1184
        %1207 = vmatpush.msra.mxu0 %v1183
        %1208 = vmatmul.f32.gmra.mxu0 %v622
        %v1209 = vpop.f32.mrf.mxu0
        %v1210 = vadd.f32 %v1190, %v1209
        %1211 = vdwg.mxu0
        %s1212 = scalar_lea.vmem %s4, 96
        %v1213 = vld [vmem:[%s1212] sm:$0xff]
        %v1214 = vld [vmem:[%s1212 + $0x8] sm:$0xff]
        %v1215 = vld [vmem:[%s1212 + $0x10] sm:$0xff]
        %v1216 = vld [vmem:[%s1212 + $0x18] sm:$0xff]
        %s1217 = scalar_lea.vmem %s5, 3
        %v1218 = vld [vmem:[%s1217] sm:$0x1]
        %v1220 = vperm.slane %v1218, 0
        %1222 = vmatpush.msra.mxu0 0.0
        %1223 = vmatpush.msra.mxu0 0.0
        %1224 = vmatpush.msra.mxu0 0.0
        %1225 = vmatpush.msra.mxu0 0.0
        %1226 = vmatpush.msra.mxu0 0.0
        %1227 = vmatpush.msra.mxu0 0.0
        %1228 = vmatpush.msra.mxu0 0.0
        %1229 = vmatpush.msra.mxu0 0.0
        %1230 = vmatpush.msra.mxu0 0.0
        %1231 = vmatpush.msra.mxu0 0.0
        %1232 = vmatpush.msra.mxu0 0.0
        %1233 = vmatpush.msra.mxu0 0.0
        %1234 = vmatpush.msra.mxu0 %v1216
        %1235 = vmatpush.msra.mxu0 %v1215
        %1236 = vmatpush.msra.mxu0 %v1214
        %1237 = vmatpush.msra.mxu0 %v1213
        %1238 = vmatmul.f32.gmra.mxu0 %v622
        %v1239 = vpop.f32.mrf.mxu0
        %v1240 = vadd.f32 %v1220, %v1239
        %1241 = vdwg.mxu0
        %s1242 = scalar_lea.vmem %s6, 96
        %v1243 = vld [vmem:[%s1242] sm:$0xff]
        %v1244 = vld [vmem:[%s1242 + $0x8] sm:$0xff]
        %v1245 = vld [vmem:[%s1242 + $0x10] sm:$0xff]
        %v1246 = vld [vmem:[%s1242 + $0x18] sm:$0xff]
        %s1247 = scalar_lea.vmem %s7, 3
        %v1248 = vld [vmem:[%s1247] sm:$0x1]
        %v1250 = vperm.slane %v1248, 0
        %1252 = vmatpush.msra.mxu0 0.0
        %1253 = vmatpush.msra.mxu0 0.0
        %1254 = vmatpush.msra.mxu0 0.0
        %1255 = vmatpush.msra.mxu0 0.0
        %1256 = vmatpush.msra.mxu0 0.0
        %1257 = vmatpush.msra.mxu0 0.0
        %1258 = vmatpush.msra.mxu0 0.0
        %1259 = vmatpush.msra.mxu0 0.0
        %1260 = vmatpush.msra.mxu0 0.0
        %1261 = vmatpush.msra.mxu0 0.0
        %1262 = vmatpush.msra.mxu0 0.0
        %1263 = vmatpush.msra.mxu0 0.0
        %1264 = vmatpush.msra.mxu0 %v1246
        %1265 = vmatpush.msra.mxu0 %v1245
        %1266 = vmatpush.msra.mxu0 %v1244
        %1267 = vmatpush.msra.mxu0 %v1243
        %1268 = vmatmul.f32.gmra.mxu0 %v622
        %v1269 = vpop.f32.mrf.mxu0
        %v1270 = vadd.f32 %v1250, %v1269
        %1271 = vdwg.mxu0
        %v1273 = vsel %vm700, %v1210, 0
        %v1276 = vsel %vm700, %v1240, 0
        %1278 = vmatpush.xpose.msra.mxu0 0.0
        %1279 = vmatpush.xpose.msra.mxu0 0.0
        %1280 = vmatpush.xpose.msra.mxu0 0.0
        %1281 = vmatpush.xpose.msra.mxu0 0.0
        %1282 = vmatpush.xpose.msra.mxu0 0.0
        %1283 = vmatpush.xpose.msra.mxu0 0.0
        %1284 = vmatpush.xpose.msra.mxu0 0.0
        %1285 = vmatpush.xpose.msra.mxu0 0.0
        %1286 = vmatpush.xpose.msra.mxu0 0.0
        %1287 = vmatpush.xpose.msra.mxu0 0.0
        %1288 = vmatpush.xpose.msra.mxu0 0.0
        %1289 = vmatpush.xpose.msra.mxu0 0.0
        %1290 = vmatpush.xpose.msra.mxu0 0.0
        %1291 = vmatpush.xpose.msra.mxu0 0.0
        %1292 = vmatpush.xpose.msra.mxu0 0.0
        %1293 = vmatpush.xpose.msra.mxu0 %v1276
        %1294 = vmatmul.f32.gmra.mxu0 %v1273
        %v1295 = vpop.f32.mrf.mxu0
        %v1296 = vadd.f32 0.0, %v1295
        %1297 = vdwg.mxu0
        %v1298 = vmul.f32 %v1296, 0.35355338
        %v1299 = vsel %vm728, %v1298, -1e+09
        %v1300 = vsel %vm700, %v1299, -inf
        %1301 = vmax.xlane.f32.xlu0 %v1300
        %v1302 = vpop.xlane.xlu0 %1301
        %v1303 = vsub.f32 %v1299, %v1302
        %v1304 = vmul.f32 %v1303, 1.442695
        %v1305 = vpow.pop %v1304
        %v1306 = vsel %vm700, %v1305, 0.0
        %1307 = vadd.xlane.f32.xlu0 %v1306
        %v1308 = vpop.xlane.xlu0 %1307
        %v1309 = vrcp.pop %v1308
        %v1310 = vmul.f32 %v1308, %v1309
        %v1311 = vsub.f32 1.0, %v1310
        %v1312 = vmul.f32 %v1309, %v1311
        %v1313 = vadd.f32 %v1309, %v1312
        %vm1314 = vweird.f32 %v1308
        %vm1315 = vweird.f32 %v1309
        %vm1316 = vmor %vm1314, %vm1315
        %v1317 = vsel %vm1316, %v1309, %v1313
        %v1318 = vand.u32 2147483647, %v1308
        %vm1319 = vcmp.eq.f32.partialorder %v1318, 8.507059e+37
        %v1320 = vand.u32 %v1308, 2147483648
        %v1321 = vor.u32 1.1754944e-38, %v1320
        %v1322 = vsel %vm1319, %v1321, %v1317
        %v1323 = vmul.f32 %v1305, %v1322
        %v1325 = vsel %vm700, %v1323, 0
        %1327 = vmatpush.msra.mxu0 0.0
        %1328 = vmatpush.msra.mxu0 0.0
        %1329 = vmatpush.msra.mxu0 0.0
        %1330 = vmatpush.msra.mxu0 0.0
        %1331 = vmatpush.msra.mxu0 0.0
        %1332 = vmatpush.msra.mxu0 0.0
        %1333 = vmatpush.msra.mxu0 0.0
        %1334 = vmatpush.msra.mxu0 0.0
        %1335 = vmatpush.msra.mxu0 0.0
        %1336 = vmatpush.msra.mxu0 0.0
        %1337 = vmatpush.msra.mxu0 0.0
        %1338 = vmatpush.msra.mxu0 0.0
        %1339 = vmatpush.msra.mxu0 0.0
        %1340 = vmatpush.msra.mxu0 0.0
        %1341 = vmatpush.msra.mxu0 0.0
        %1342 = vmatpush.msra.mxu0 %v1270
        %1343 = vmatmul.f32.gmra.mxu0 %v1325
        %v1344 = vpop.f32.mrf.mxu0
        %v1345 = vadd.f32 0.0, %v1344
        %1346 = vdwg.mxu0
        %s1347 = scalar_lea.vmem %s8, 24
        %v1348 = vld [vmem:[%s1347] sm:$0xff]
        %v1350 = vsel %vm700, %v1345, 0
        %1352 = vmatpush.msra.mxu0 0.0
        %1353 = vmatpush.msra.mxu0 0.0
        %1354 = vmatpush.msra.mxu0 0.0
        %1355 = vmatpush.msra.mxu0 0.0
        %1356 = vmatpush.msra.mxu0 0.0
        %1357 = vmatpush.msra.mxu0 0.0
        %1358 = vmatpush.msra.mxu0 0.0
        %1359 = vmatpush.msra.mxu0 0.0
        %1360 = vmatpush.msra.mxu0 0.0
        %1361 = vmatpush.msra.mxu0 0.0
        %1362 = vmatpush.msra.mxu0 0.0
        %1363 = vmatpush.msra.mxu0 0.0
        %1364 = vmatpush.msra.mxu0 0.0
        %1365 = vmatpush.msra.mxu0 0.0
        %1366 = vmatpush.msra.mxu0 0.0
        %1367 = vmatpush.msra.mxu0 %v1348
        %1368 = vmatmul.f32.gmra.mxu0 %v1350
        %v1369 = vpop.f32.mrf.mxu0
        %v1370 = vadd.f32 0.0, %v1369
        %1371 = vdwg.mxu0
        %v1372 = vadd.f32 %v1181, %v1370
        %v1373 = vld [vmem:[%s9] sm:$0x1]
        %v1375 = vperm.slane %v1373, 0
        %v1377 = vadd.f32 %v1372, %v1375
        %v1378 = vadd.f32 %v610, %v1377
        %v1379 = vsel %vm620, %v1378, 0.0
        %1380 = vadd.xlane.f32.xlu0 %v1379
        %v1381 = vpop.xlane.xlu0 %1380
        %v1382 = vrcp.pop 32.0
        %v1383 = vmul.f32 32.0, %v1382
        %v1384 = vsub.f32 1.0, %v1383
        %v1385 = vmul.f32 %v1382, %v1384
        %v1386 = vadd.f32 %v1382, %v1385
        %vm1387 = vweird.f32 %v1382
        %v1388 = vsel %vm1387, %v1382, %v1386
        %v1389 = vmul.f32 %v1381, %v1388
        %v1390 = vsub.f32 %v1378, %v1389
        %v1391 = vmul.f32 %v1390, %v1390
        %v1392 = vsel %vm620, %v1391, 0.0
        %1393 = vadd.xlane.f32.xlu0 %v1392
        %v1394 = vpop.xlane.xlu0 %1393
        %v1395 = vmul.f32 %v1394, %v1388
        %v1396 = vadd.f32 %v1395, 1e-05
        %v1397 = vrsqrt.pop %v1396
        %v1398 = vmul.f32 %v1397, %v1396
        %v1399 = vmul.f32 %v1398, %v1397
        %v1400 = vmul.f32 0.5, %v1399
        %v1401 = vsub.f32 1.5, %v1400
        %v1402 = vmul.f32 %v1397, %v1401
        %v1403 = vmul.f32 %v1396, %v1402
        %vm1404 = vcmp.eq.f32.partialorder %v1396, inf
        %v1405 = vsel %vm1404, %v1396, %v1403
        %vm1406 = vcmp.eq.f32.partialorder %v1396, 0.0
        %v1407 = vand.u32 %v1396, 2147483648
        %v1408 = vsel %vm1406, %v1407, %v1405
        %v1409 = vrcp.pop %v1408
        %v1410 = vmul.f32 %v1408, %v1409
        %v1411 = vsub.f32 1.0, %v1410
        %v1412 = vmul.f32 %v1409, %v1411
        %v1413 = vadd.f32 %v1409, %v1412
        %vm1414 = vweird.f32 %v1408
        %vm1415 = vweird.f32 %v1409
        %vm1416 = vmor %vm1414, %vm1415
        %v1417 = vsel %vm1416, %v1409, %v1413
        %v1418 = vand.u32 2147483647, %v1408
        %vm1419 = vcmp.eq.f32.partialorder %v1418, 8.507059e+37
        %v1420 = vand.u32 %v1408, 2147483648
        %v1421 = vor.u32 1.1754944e-38, %v1420
        %v1422 = vsel %vm1419, %v1421, %v1417
        %v1423 = vmul.f32 %v1390, %v1422
        %v1424 = vld [vmem:[%s14] sm:$0x1]
        %v1426 = vperm.slane %v1424, 0
        %v1428 = vmul.f32 %v1423, %v1426
        %v1429 = vld [vmem:[%s15] sm:$0x1]
        %v1431 = vperm.slane %v1429, 0
        %v1433 = vadd.f32 %v1428, %v1431
        %v1434 = vld [vmem:[%s10] sm:$0xff]
        %v1435 = vld [vmem:[%s10 + $0x8] sm:$0xff]
        %v1436 = vld [vmem:[%s10 + $0x10] sm:$0xff]
        %v1437 = vld [vmem:[%s10 + $0x18] sm:$0xff]
        %v1438 = vld [vmem:[%s11] sm:$0x1]
        %v1440 = vperm.slane %v1438, 0
        %v1443 = vsel %vm620, %v1433, 0
        %1445 = vmatpush.msra.mxu0 0.0
        %1446 = vmatpush.msra.mxu0 0.0
        %1447 = vmatpush.msra.mxu0 0.0
        %1448 = vmatpush.msra.mxu0 0.0
        %1449 = vmatpush.msra.mxu0 0.0
        %1450 = vmatpush.msra.mxu0 0.0
        %1451 = vmatpush.msra.mxu0 0.0
        %1452 = vmatpush.msra.mxu0 0.0
        %1453 = vmatpush.msra.mxu0 0.0
        %1454 = vmatpush.msra.mxu0 0.0
        %1455 = vmatpush.msra.mxu0 0.0
        %1456 = vmatpush.msra.mxu0 0.0
        %1457 = vmatpush.msra.mxu0 %v1437
        %1458 = vmatpush.msra.mxu0 %v1436
        %1459 = vmatpush.msra.mxu0 %v1435
        %1460 = vmatpush.msra.mxu0 %v1434
        %1461 = vmatmul.f32.gmra.mxu0 %v1443
        %v1462 = vpop.f32.mrf.mxu0
        %v1463 = vadd.f32 %v1440, %v1462
        %1464 = vdwg.mxu0
        %v1465 = vmax.f32 %v1463, 0.0
        %v1466 = vld [vmem:[%s12] sm:$0xff]
        %v1467 = vld [vmem:[%s12 + $0x8] sm:$0xff]
        %v1468 = vld [vmem:[%s12 + $0x10] sm:$0xff]
        %v1469 = vld [vmem:[%s12 + $0x18] sm:$0xff]
        %v1470 = vld [vmem:[%s12 + $0x20] sm:$0xff]
        %v1471 = vld [vmem:[%s12 + $0x28] sm:$0xff]
        %v1472 = vld [vmem:[%s12 + $0x30] sm:$0xff]
        %v1473 = vld [vmem:[%s12 + $0x38] sm:$0xff]
        %v1474 = vld [vmem:[%s13] sm:$0x1]
        %v1476 = vperm.slane %v1474, 0
        %vm1478 = vcmask 523264
        %v1480 = vsel %vm1478, %v1465, 0
        %1482 = vmatpush.msra.mxu0 0.0
        %1483 = vmatpush.msra.mxu0 0.0
        %1484 = vmatpush.msra.mxu0 0.0
        %1485 = vmatpush.msra.mxu0 0.0
        %1486 = vmatpush.msra.mxu0 0.0
        %1487 = vmatpush.msra.mxu0 0.0
        %1488 = vmatpush.msra.mxu0 0.0
        %1489 = vmatpush.msra.mxu0 0.0
        %1490 = vmatpush.msra.mxu0 %v1473
        %1491 = vmatpush.msra.mxu0 %v1472
        %1492 = vmatpush.msra.mxu0 %v1471
        %1493 = vmatpush.msra.mxu0 %v1470
        %1494 = vmatpush.msra.mxu0 %v1469
        %1495 = vmatpush.msra.mxu0 %v1468
        %1496 = vmatpush.msra.mxu0 %v1467
        %1497 = vmatpush.msra.mxu0 %v1466
        %1498 = vmatmul.f32.gmra.mxu0 %v1480
        %v1499 = vpop.f32.mrf.mxu0
        %v1500 = vadd.f32 %v1476, %v1499
        %1501 = vdwg.mxu0
        %v1502 = vadd.f32 %v1433, %v1500
        %v1503 = vsel %vm620, %v1502, 0.0
        %1504 = vadd.xlane.f32.xlu0 %v1503
        %v1505 = vpop.xlane.xlu0 %1504
        %v1506 = vmul.f32 %v1505, %v1388
        %v1507 = vsub.f32 %v1502, %v1506
        %v1508 = vmul.f32 %v1507, %v1507
        %v1509 = vsel %vm620, %v1508, 0.0
        %1510 = vadd.xlane.f32.xlu0 %v1509
        %v1511 = vpop.xlane.xlu0 %1510
        %v1512 = vmul.f32 %v1511, %v1388
        %v1513 = vadd.f32 %v1512, 1e-05
        %v1514 = vrsqrt.pop %v1513
        %v1515 = vmul.f32 %v1514, %v1513
        %v1516 = vmul.f32 %v1515, %v1514
        %v1517 = vmul.f32 0.5, %v1516
        %v1518 = vsub.f32 1.5, %v1517
        %v1519 = vmul.f32 %v1514, %v1518
        %v1520 = vmul.f32 %v1513, %v1519
        %vm1521 = vcmp.eq.f32.partialorder %v1513, inf
        %v1522 = vsel %vm1521, %v1513, %v1520
        %vm1523 = vcmp.eq.f32.partialorder %v1513, 0.0
        %v1524 = vand.u32 %v1513, 2147483648
        %v1525 = vsel %vm1523, %v1524, %v1522
        %v1526 = vrcp.pop %v1525
        %v1527 = vmul.f32 %v1525, %v1526
        %v1528 = vsub.f32 1.0, %v1527
        %v1529 = vmul.f32 %v1526, %v1528
        %v1530 = vadd.f32 %v1526, %v1529
        %vm1531 = vweird.f32 %v1525
        %vm1532 = vweird.f32 %v1526
        %vm1533 = vmor %vm1531, %vm1532
        %v1534 = vsel %vm1533, %v1526, %v1530
        %v1535 = vand.u32 2147483647, %v1525
        %vm1536 = vcmp.eq.f32.partialorder %v1535, 8.507059e+37
        %v1537 = vand.u32 %v1525, 2147483648
        %v1538 = vor.u32 1.1754944e-38, %v1537
        %v1539 = vsel %vm1536, %v1538, %v1534
        %v1540 = vmul.f32 %v1507, %v1539
        %v1541 = vld [vmem:[%s16] sm:$0x1]
        %v1543 = vperm.slane %v1541, 0
        %v1545 = vmul.f32 %v1540, %v1543
        %v1546 = vld [vmem:[%s17] sm:$0x1]
        %v1548 = vperm.slane %v1546, 0
        %v1550 = vadd.f32 %v1545, %v1548
        %1551 = vst.msk [vmem:[%s605] sm:$0xff] %vm620, %v1550
        %s1552 = sand.u32 %s431, 1
        %s1553 = scalar_lea.sflag [#allocation4], %s1552
        %s1554 = sand.u32 %s431, 1
        %s1555 = smul.addr %s1554, 8
        %s1556 = scalar_lea.vmem [#allocation5], %s1555
        // Predicated region
        $region97: #{encoder_forward.5} parent=91 // pred_check
          %p1557 = pneg %p441
        $region98: #{encoder_forward.5} parent=91 // pred_check_branch
          %1559 = sbr.rel (%p1557) target = $region100
        $region99: #{encoder_forward.5} parent=91 // pred_region
          %1561 = vsyncadd %s1553, 0
          %s1562 = smul.addr %s35, 8
          %s1563 = scalar_lea.hbm %s18, %s1562
          %s1565 = sshll.u32 %s1556, 4
          %s1566 = int_to_ptr.vmem [resolvable:$true] %s1565
          %s1567 = sshll.u32 %s1563, 4
          %s1568 = int_to_ptr.hbm [resolvable:$true] %s1567
          %1570 = dma.vmem_to_hbm [thread:$0]  %s1566, 128, %s1568, %s1553
        $region100: #{encoder_forward.5} parent=91 // pred_fallthru
          _
      $region92: #{encoder_forward.5} parent=5 // pred_fallthru
        _
      %p1571 = scmp.le.s32.totalorder 2, %s30
      // Predicated region
      $region101: #{encoder_forward.5} parent=5 // pred_check
        %p1572 = pneg %p1571
      $region102: #{encoder_forward.5} parent=5 // pred_check_branch
        %1574 = sbr.rel (%p1572) target = $region104
      $region103: #{encoder_forward.5} parent=5 // pred_region
        %s1575 = ssub.s32 %s30, 2
        // Predicated region
        $region105: #{encoder_forward.5} parent=103 // pred_check
          %p1576 = pneg %p447
        $region106: #{encoder_forward.5} parent=103 // pred_check_branch
          %1578 = sbr.rel (%p1576) target = $region108
        $region107: #{encoder_forward.5} parent=103 // pred_region
          %s1579 = sand.u32 %s432, 1
          %s1580 = scalar_lea.sflag [#allocation4], %s1579
          %s1581 = sand.u32 %s432, 1
          %s1582 = smul.addr %s1581, 8
          %s1583 = scalar_lea.vmem [#allocation5], %s1582
          %1585 = dma.done %s1580, 128
        $region108: #{encoder_forward.5} parent=103 // pred_fallthru
          _
      $region104: #{encoder_forward.5} parent=5 // pred_fallthru
        _
    $region6: #{encoder_forward.5} parent=1 // loop_footer
      %s34 = sadd.s32 1, %s30
    $region7: #{encoder_forward.5} parent=1 // loop_footer_branch
      %29 = sbr.rel target = $region3
    $region8: #{encoder_forward.5} parent=1 // loop_exit
      _
    %1586 = vsyncpa [#allocation3], 1
    %s1587 = scalar_lea.sflag [#allocation3], 1
    %1588 = vsyncpa %s1587, 1
    %1589 = vsyncpa [#allocation4], 1
    %s1590 = scalar_lea.sflag [#allocation4], 1
    %1591 = vsyncpa %s1590, 1

</llo_original>
